<compile_context>
chip_gen: v7x
topology: tpu7x:2x2x1
jax: 0.10.0
libtpu: 0.0.40
codegen_flags: <defaults>
</compile_context>

<pallas_src>
import jax
import jax.numpy as jnp
from jax import lax
from jax.experimental import pallas as pl
from jax.experimental.pallas import tpu as pltpu


def _make_mbconv_kernel(H, W, HW, Nb, Cin, Cmid, Cse, Cout, K, P,
                        expand, use_residual):
    # TODO(synk): stride > 1 (strided depthwise taps / subsampled output) not wired.
    L = Nb * HW
    deltas = [(dy - P) * W + (dx - P) for dy in range(K) for dx in range(K)]

    def kernel(*refs):
        if expand:
            (x_ref, w_exp_ref, w_dwm_ref, b_dw_ref,
             w_se1_ref, b_se1_ref, w_se2_ref, b_se2_ref,
             w_pr_ref, b_pr_ref, o_ref) = refs
        else:
            (x_ref, w_dwm_ref, b_dw_ref,
             w_se1_ref, b_se1_ref, w_se2_ref, b_se2_ref,
             w_pr_ref, b_pr_ref, o_ref) = refs

        x = x_ref[...]                                   # (Cin[+1], L) f32, lane-dense

        # ---- expansion 1x1 conv on the MXU; BN scale + bias folded into the
        # bf16 weight (bias enters via the ones row the wrapper appended to x).
        if expand:
            h = jnp.dot(w_exp_ref[...], x.astype(jnp.bfloat16),
                        preferred_element_type=jnp.float32)        # (Cmid, L)
            h = h * jax.nn.sigmoid(h)                              # SiLU
        else:
            h = x

        # ---- depthwise KxK conv, stride 1: aligned XLU rolls on (Cmid, L);
        # per-tap (BN-folded weight x spatial edge mask) planes are precomputed
        # offline, so each tap is one VPU FMA with no in-loop broadcasts.
        acc = jnp.broadcast_to(b_dw_ref[...], (Cmid, L))           # folded-BN bias seed
        for i, delta in enumerate(deltas):
            tap = h if delta == 0 else pltpu.roll(h, shift=(-delta) % L, axis=1)
            acc = acc + tap * w_dwm_ref[i]
        acc = acc * jax.nn.sigmoid(acc)                            # SiLU

        # ---- squeeze & excitation, per image, on the VPU ----
        w_se1 = w_se1_ref[...]
        w_se2 = w_se2_ref[...]
        b_se1 = b_se1_ref[...]
        b_se2 = b_se2_ref[...]
        inv_hw = 1.0 / HW
        pieces = []
        for n in range(Nb):                                        # static, Nb small
            blk = acc[:, n * HW:(n + 1) * HW]                      # aligned lane slice
            pooled = jnp.sum(blk, axis=1, keepdims=True) * inv_hw            # (Cmid, 1)
            s1 = jnp.sum(w_se1 * pooled, axis=0, keepdims=True) + b_se1      # (1, Cse)
            s1 = s1 * jax.nn.sigmoid(s1)                                     # SiLU
            s2 = jnp.sum(w_se2 * s1, axis=1, keepdims=True) + b_se2          # (Cmid, 1)
            pieces.append(blk * jax.nn.sigmoid(s2))
        scaled = pieces[0] if Nb == 1 else jnp.concatenate(pieces, axis=1)   # (Cmid, L)

        # ---- projection 1x1 conv (bf16 MXU) + folded-BN bias ----
        out = jnp.dot(w_pr_ref[...], scaled.astype(jnp.bfloat16),
                      preferred_element_type=jnp.float32)          # (Cout, L)
        out = out + b_pr_ref[...]

        # ---- residual; stochastic depth is identity in eval mode ----
        if use_residual:
            out = out + x[:Cin, :]
        o_ref[...] = out                                           # unmasked lane-dense vst

    return kernel


def _pick_images_per_step(N, HW, max_lanes=8192):
    """Largest per-step image count that keeps >=2 grid steps when possible
    (v7x has 2 TensorCores), keeps the lane width 128-aligned, and bounds the
    per-step working set."""
    best = None
    for nb in range(1, N + 1):
        if N % nb:
            continue
        if (nb * HW) % 128 != 0 and nb != N:
            continue
        if nb * HW > max_lanes:
            continue
        if best is None or N // nb >= 2:
            best = nb
    return best if best is not None else N


def mbconv_forward(x_nchw, params, *, kernel_size, stride, expand, use_residual,
                   images_per_step=None):
    assert stride == 1, "this kernel demo supports stride == 1"  # TODO(synk): strided stages
    N, Cin, H, W = x_nchw.shape
    HW = H * W
    Cmid = params["w_dw"].shape[1]
    Cse = params["w_se1"].shape[1]
    Cout = params["w_pr"].shape[1]
    if not expand:
        assert Cmid == Cin, "expand=False requires Cmid == Cin"
    K = kernel_size
    P = (K - 1) // 2

    Nb = images_per_step if images_per_step is not None else _pick_images_per_step(N, HW)
    assert N % Nb == 0
    L = Nb * HW

    f32, bf16 = jnp.float32, jnp.bfloat16

    # ---- activations: NCHW -> (Cin, N*HW), one XLA-side N<->C transpose.
    x = x_nchw.astype(f32).reshape(N, Cin, HW)
    x = jnp.transpose(x, (1, 0, 2)).reshape(Cin, N * HW)
    if expand:
        # ones row so the expansion bias folds into the MXU contraction
        x = jnp.concatenate([x, jnp.ones((1, N * HW), f32)], axis=0)
    Cin_blk = x.shape[0]

    # ---- fold BN scales (and biases where possible) into the conv weights.
    w_exp = params["w_exp"].T * params["s_exp"].reshape(Cmid, 1)              # (Cmid, Cin)
    b_exp = params["b_exp"].reshape(Cmid, 1)
    w_exp_aug = jnp.concatenate([w_exp, b_exp], axis=1).astype(bf16)          # (Cmid, Cin+1)

    w_dw = params["w_dw"].T * params["s_dw"].reshape(Cmid, 1)                 # (Cmid, K*K)
    b_dw = params["b_dw"].reshape(Cmid, 1).astype(f32)

    # per-tap (BN-scaled weight * spatial edge mask) planes, built offline.
    # The roll wrap / cross-image contamination is exactly the invalid region,
    # so masking it zeroes both at once.
    ys = jnp.arange(H, dtype=jnp.int32).reshape(H, 1)
    xs = jnp.arange(W, dtype=jnp.int32).reshape(1, W)
    mrows = []
    for dy in range(K):
        for dx in range(K):
            ry, rx = dy - P, dx - P
            valid = ((ys + ry >= 0) & (ys + ry < H) &
                     (xs + rx >= 0) & (xs + rx < W))
            mrows.append(valid.reshape(1, HW))
    tap_mask = jnp.concatenate(mrows, axis=0).astype(f32)                     # (K*K, HW)
    tap_mask = jnp.tile(tap_mask, (1, Nb))                                    # (K*K, L)
    # TODO(synk): for real B4 stage sizes, tile HW with a halo (and possibly
    # Cmid) instead of materializing full (K*K, Cmid, L) planes.
    w_dwm = (w_dw.T[:, :, None] * tap_mask[:, None, :]).astype(f32)           # (K*K, Cmid, L)

    w_se1 = params["w_se1"].astype(f32)                                       # (Cmid, Cse)
    b_se1 = params["b_se1"].reshape(1, Cse).astype(f32)
    w_se2 = params["w_se2"].T.astype(f32)                                     # (Cmid, Cse)
    b_se2 = params["b_se2"].reshape(Cmid, 1).astype(f32)
    w_pr = (params["w_pr"].T * params["s_pr"].reshape(Cout, 1)).astype(bf16)  # (Cout, Cmid)
    b_pr = params["b_pr"].reshape(Cout, 1).astype(f32)

    weights = ([w_exp_aug] if expand else []) + [
        w_dwm, b_dw, w_se1, b_se1, w_se2, b_se2, w_pr, b_pr]

    def const_spec(a):
        nd = a.ndim
        return pl.BlockSpec(a.shape, lambda g, _nd=nd: (0,) * _nd)

    in_specs = [pl.BlockSpec((Cin_blk, L), lambda g: (0, g))]
    in_specs += [const_spec(w) for w in weights]
    out_spec = pl.BlockSpec((Cout, L), lambda g: (0, g))

    kernel = _make_mbconv_kernel(H, W, HW, Nb, Cin, Cmid, Cse, Cout, K, P,
                                 expand, use_residual)

    flops = N * ((2 * Cmid * (Cin + 1) * HW if expand else 0)
                 + 2 * K * K * Cmid * HW
                 + 4 * Cmid * Cse
                 + 2 * Cout * Cmid * HW
                 + (Cout * HW if use_residual else 0))
    transcendentals = N * ((Cmid * HW if expand else 0) + Cmid * HW + Cse + Cmid)
    bytes_accessed = (int(x.size) * 4 + N * Cout * HW * 4
                      + sum(int(w.size) * w.dtype.itemsize for w in weights))

    # VMEM budget: double-buffered I/O blocks + resident weights + live f32 temps.
    weight_bytes = sum(int(w.size) * w.dtype.itemsize for w in weights)
    act_bytes = Cmid * L * 4
    vmem_limit = int(min(48 * 1024 * 1024,
                         max(8 * 1024 * 1024,
                             2 * (Cin_blk * L * 4 + Cout * L * 4)
                             + 2 * weight_bytes + 16 * act_bytes)))

    out = pl.pallas_call(
        kernel,
        out_shape=jax.ShapeDtypeStruct((Cout, N * HW), f32),
        grid_spec=pltpu.PrefetchScalarGridSpec(
            num_scalar_prefetch=0,
            grid=(N // Nb,),                          # Nb images per grid step
            in_specs=in_specs,
            out_specs=out_spec),
        compiler_params=pltpu.CompilerParams(
            dimension_semantics=("parallel",),        # batch-blocks across TCs (v7x)
            vmem_limit_bytes=vmem_limit),
        cost_estimate=pl.CostEstimate(flops=flops,
                                      transcendentals=transcendentals,
                                      bytes_accessed=bytes_accessed),
    )(x, *weights)

    out = out.reshape(Cout, N, HW)
    return jnp.transpose(out, (1, 0, 2)).reshape(N, Cout, H, W)


def init_params(key, Cin, Cout, K, expansion_factor, reduction_factor=4):
    Cmid = Cin * expansion_factor
    Cse = int(Cin // reduction_factor)
    ks = jax.random.split(key, 10)
    eps = 1e-5

    def folded_bn(k, C):
        k1, k2, k3, k4 = jax.random.split(k, 4)
        gamma = 1.0 + 0.1 * jax.random.normal(k1, (C,), jnp.float32)
        beta = 0.1 * jax.random.normal(k2, (C,), jnp.float32)
        mean = 0.1 * jax.random.normal(k3, (C,), jnp.float32)
        var = 1.0 + 0.1 * jnp.abs(jax.random.normal(k4, (C,), jnp.float32))
        scale = gamma / jnp.sqrt(var + eps)
        bias = beta - mean * scale
        return scale.reshape(1, C), bias.reshape(1, C)

    p = {}
    p["w_exp"] = 0.1 * jax.random.normal(ks[0], (Cin, Cmid), jnp.float32)
    p["s_exp"], p["b_exp"] = folded_bn(ks[1], Cmid)
    p["w_dw"] = 0.1 * jax.random.normal(ks[2], (K * K, Cmid), jnp.float32)
    p["s_dw"], p["b_dw"] = folded_bn(ks[3], Cmid)
    p["w_se1"] = 0.1 * jax.random.normal(ks[4], (Cmid, Cse), jnp.float32)
    p["b_se1"] = 0.1 * jax.random.normal(ks[5], (1, Cse), jnp.float32)
    p["w_se2"] = 0.1 * jax.random.normal(ks[6], (Cse, Cmid), jnp.float32)
    p["b_se2"] = 0.1 * jax.random.normal(ks[7], (1, Cmid), jnp.float32)
    p["w_pr"] = 0.1 * jax.random.normal(ks[8], (Cmid, Cout), jnp.float32)
    p["s_pr"], p["b_pr"] = folded_bn(ks[9], Cout)
    return p, Cmid, Cse


def mbconv_reference(x_nchw, p, *, kernel_size, stride, expand, use_residual):
    """Pure-JAX (XLA, f32) reference, NHWC internally, for correctness checking."""
    x = jnp.transpose(x_nchw, (0, 2, 3, 1)).astype(jnp.float32)
    K = kernel_size
    P = (K - 1) // 2
    Cmid = p["w_dw"].shape[1]
    h = x
    if expand:
        h = jnp.einsum("nhwc,ck->nhwk", h, p["w_exp"])
        h = h * p["s_exp"] + p["b_exp"]
        h = h * jax.nn.sigmoid(h)
    dw_w = p["w_dw"].reshape(K, K, 1, Cmid)
    h = lax.conv_general_dilated(
        h, dw_w, window_strides=(stride, stride), padding=[(P, P), (P, P)],
        dimension_numbers=("NHWC", "HWIO", "NHWC"), feature_group_count=Cmid)
    h = h * p["s_dw"] + p["b_dw"]
    h = h * jax.nn.sigmoid(h)
    pooled = jnp.mean(h, axis=(1, 2))
    se = pooled @ p["w_se1"] + p["b_se1"]
    se = se * jax.nn.sigmoid(se)
    se = se @ p["w_se2"] + p["b_se2"]
    se = jax.nn.sigmoid(se)
    h = h * se[:, None, None, :]
    out = jnp.einsum("nhwc,ck->nhwk", h, p["w_pr"])
    out = out * p["s_pr"] + p["b_pr"]
    if use_residual:
        out = out + x
    return jnp.transpose(out, (0, 3, 1, 2))


if __name__ == "__main__":
    # MBConv(in_channels=8, out_channels=8, kernel_size=3, stride=1, expansion_factor=4)
    N, Cin, Cout, H, W = 8, 8, 8, 16, 16
    K, stride, expansion_factor = 3, 1, 4
    expand = (Cin != Cin * expansion_factor)
    use_residual = (stride == 1 and Cin == Cout)

    key = jax.random.PRNGKey(0)
    kx, kp = jax.random.split(key)
    x = jax.random.normal(kx, (N, Cin, H, W), jnp.float32)        # NCHW like PyTorch
    params, Cmid, Cse = init_params(kp, Cin, Cout, K, expansion_factor)

    out = mbconv_forward(x, params, kernel_size=K, stride=stride,
                         expand=expand, use_residual=use_residual)
    out = jax.block_until_ready(out)

    ref = mbconv_reference(x, params, kernel_size=K, stride=stride,
                           expand=expand, use_residual=use_residual)
    assert out.shape == (N, Cout, H, W)
    # tolerance accounts for bf16 MXU operands in the kernel vs f32 reference
    assert jnp.allclose(out, ref, atol=1e-2, rtol=1e-2), "Pallas output mismatch vs JAX reference"
    print("KERNEL_OK")
</pallas_src>

<mosaic_0001>
module attributes {stable_mosaic.version = 11 : i64} {
  func.func @kernel(%arg0: i32, %arg1: memref<9x1024xf32, #tpu.memory_space<vmem>>, %arg2: memref<32x9xbf16, #tpu.memory_space<vmem>>, %arg3: memref<9x32x1024xf32, #tpu.memory_space<vmem>>, %arg4: memref<32x1xf32, #tpu.memory_space<vmem>>, %arg5: memref<32x2xf32, #tpu.memory_space<vmem>>, %arg6: memref<1x2xf32, #tpu.memory_space<vmem>>, %arg7: memref<32x2xf32, #tpu.memory_space<vmem>>, %arg8: memref<32x1xf32, #tpu.memory_space<vmem>>, %arg9: memref<8x32xbf16, #tpu.memory_space<vmem>>, %arg10: memref<8x1xf32, #tpu.memory_space<vmem>>, %arg11: memref<8x1024xf32, #tpu.memory_space<vmem>>) attributes {dimension_semantics = [#tpu.dimension_semantics<parallel>], iteration_bounds = array<i64: 2>, scalar_prefetch = 0 : i64, scratch_operands = 0 : i64, tpu.core_type = #tpu.core_type<tc>, window_params = [{transform_indices = @transform_0, window_bounds = array<i64: 9, 1024>}, {pipeline_mode = #tpu.pipeline_mode<synchronous>, transform_indices = @transform_1, window_bounds = array<i64: 32, 9>}, {pipeline_mode = #tpu.pipeline_mode<synchronous>, transform_indices = @transform_2, window_bounds = array<i64: 9, 32, 1024>}, {pipeline_mode = #tpu.pipeline_mode<synchronous>, transform_indices = @transform_3, window_bounds = array<i64: 32, 1>}, {pipeline_mode = #tpu.pipeline_mode<synchronous>, transform_indices = @transform_4, window_bounds = array<i64: 32, 2>}, {pipeline_mode = #tpu.pipeline_mode<synchronous>, transform_indices = @transform_5, window_bounds = array<i64: 1, 2>}, {pipeline_mode = #tpu.pipeline_mode<synchronous>, transform_indices = @transform_6, window_bounds = array<i64: 32, 2>}, {pipeline_mode = #tpu.pipeline_mode<synchronous>, transform_indices = @transform_7, window_bounds = array<i64: 32, 1>}, {pipeline_mode = #tpu.pipeline_mode<synchronous>, transform_indices = @transform_8, window_bounds = array<i64: 8, 32>}, {pipeline_mode = #tpu.pipeline_mode<synchronous>, transform_indices = @transform_9, window_bounds = array<i64: 8, 1>}, {transform_indices = @transform_10, window_bounds = array<i64: 8, 1024>}]} {
    %c0 = arith.constant 0 : index
    %c0_0 = arith.constant 0 : index
    %0 = vector.load %arg1[%c0, %c0_0] : memref<9x1024xf32, #tpu.memory_space<vmem>>, vector<9x1024xf32>
    %c0_1 = arith.constant 0 : index
    %c0_2 = arith.constant 0 : index
    %1 = vector.load %arg2[%c0_1, %c0_2] : memref<32x9xbf16, #tpu.memory_space<vmem>>, vector<32x9xbf16>
    %2 = arith.truncf %0 : vector<9x1024xf32> to vector<9x1024xbf16>
    %cst = arith.constant dense<0.000000e+00> : vector<32x1024xf32>
    %3 = tpu.matmul %1, %2, %cst {dimension_numbers = #tpu.dot_dimension_numbers<[1], [0], [0], [1], [0, 0, 1, 1], [], []>} : vector<32x9xbf16>, vector<9x1024xbf16>, vector<32x1024xf32> -> vector<32x1024xf32>
    %4 = arith.negf %3 : vector<32x1024xf32>
    %5 = math.exp %4 : vector<32x1024xf32>
    %cst_3 = arith.constant 1.000000e+00 : f32
    %6 = vector.broadcast %cst_3 : f32 to vector<32x1024xf32>
    %7 = arith.addf %6, %5 : vector<32x1024xf32>
    %8 = arith.divf %6, %7 : vector<32x1024xf32>
    %9 = arith.mulf %3, %8 : vector<32x1024xf32>
    %c0_4 = arith.constant 0 : index
    %c0_5 = arith.constant 0 : index
    %10 = vector.load %arg4[%c0_4, %c0_5] : memref<32x1xf32, #tpu.memory_space<vmem>>, vector<32x1xf32>
    %11 = vector.shape_cast %10 : vector<32x1xf32> to vector<32x1xf32>
    %12 = vector.broadcast %11 : vector<32x1xf32> to vector<32x1024xf32>
    %c17_i32 = arith.constant 17 : i32
    %13 = tpu.dynamic_rotate %9 by %c17_i32 dim 1 : vector<32x1024xf32>, i32 -> vector<32x1024xf32>
    %c0_6 = arith.constant 0 : index
    %c0_7 = arith.constant 0 : index
    %c0_8 = arith.constant 0 : index
    %14 = vector.load %arg3[%c0_6, %c0_7, %c0_8] : memref<9x32x1024xf32, #tpu.memory_space<vmem>>, vector<1x32x1024xf32>
    %15 = vector.shape_cast %14 : vector<1x32x1024xf32> to vector<32x1024xf32>
    %16 = arith.mulf %13, %15 : vector<32x1024xf32>
    %17 = arith.addf %12, %16 : vector<32x1024xf32>
    %c16_i32 = arith.constant 16 : i32
    %18 = tpu.dynamic_rotate %9 by %c16_i32 dim 1 : vector<32x1024xf32>, i32 -> vector<32x1024xf32>
    %c1 = arith.constant 1 : index
    %c0_9 = arith.constant 0 : index
    %c0_10 = arith.constant 0 : index
    %19 = vector.load %arg3[%c1, %c0_9, %c0_10] : memref<9x32x1024xf32, #tpu.memory_space<vmem>>, vector<1x32x1024xf32>
    %20 = vector.shape_cast %19 : vector<1x32x1024xf32> to vector<32x1024xf32>
    %21 = arith.mulf %18, %20 : vector<32x1024xf32>
    %22 = arith.addf %17, %21 : vector<32x1024xf32>
    %c15_i32 = arith.constant 15 : i32
    %23 = tpu.dynamic_rotate %9 by %c15_i32 dim 1 : vector<32x1024xf32>, i32 -> vector<32x1024xf32>
    %c2 = arith.constant 2 : index
    %c0_11 = arith.constant 0 : index
    %c0_12 = arith.constant 0 : index
    %24 = vector.load %arg3[%c2, %c0_11, %c0_12] : memref<9x32x1024xf32, #tpu.memory_space<vmem>>, vector<1x32x1024xf32>
    %25 = vector.shape_cast %24 : vector<1x32x1024xf32> to vector<32x1024xf32>
    %26 = arith.mulf %23, %25 : vector<32x1024xf32>
    %27 = arith.addf %22, %26 : vector<32x1024xf32>
    %c1_i32 = arith.constant 1 : i32
    %28 = tpu.dynamic_rotate %9 by %c1_i32 dim 1 : vector<32x1024xf32>, i32 -> vector<32x1024xf32>
    %c3 = arith.constant 3 : index
    %c0_13 = arith.constant 0 : index
    %c0_14 = arith.constant 0 : index
    %29 = vector.load %arg3[%c3, %c0_13, %c0_14] : memref<9x32x1024xf32, #tpu.memory_space<vmem>>, vector<1x32x1024xf32>
    %30 = vector.shape_cast %29 : vector<1x32x1024xf32> to vector<32x1024xf32>
    %31 = arith.mulf %28, %30 : vector<32x1024xf32>
    %32 = arith.addf %27, %31 : vector<32x1024xf32>
    %c4 = arith.constant 4 : index
    %c0_15 = arith.constant 0 : index
    %c0_16 = arith.constant 0 : index
    %33 = vector.load %arg3[%c4, %c0_15, %c0_16] : memref<9x32x1024xf32, #tpu.memory_space<vmem>>, vector<1x32x1024xf32>
    %34 = vector.shape_cast %33 : vector<1x32x1024xf32> to vector<32x1024xf32>
    %35 = arith.mulf %9, %34 : vector<32x1024xf32>
    %36 = arith.addf %32, %35 : vector<32x1024xf32>
    %c1023_i32 = arith.constant 1023 : i32
    %37 = tpu.dynamic_rotate %9 by %c1023_i32 dim 1 : vector<32x1024xf32>, i32 -> vector<32x1024xf32>
    %c5 = arith.constant 5 : index
    %c0_17 = arith.constant 0 : index
    %c0_18 = arith.constant 0 : index
    %38 = vector.load %arg3[%c5, %c0_17, %c0_18] : memref<9x32x1024xf32, #tpu.memory_space<vmem>>, vector<1x32x1024xf32>
    %39 = vector.shape_cast %38 : vector<1x32x1024xf32> to vector<32x1024xf32>
    %40 = arith.mulf %37, %39 : vector<32x1024xf32>
    %41 = arith.addf %36, %40 : vector<32x1024xf32>
    %c1009_i32 = arith.constant 1009 : i32
    %42 = tpu.dynamic_rotate %9 by %c1009_i32 dim 1 : vector<32x1024xf32>, i32 -> vector<32x1024xf32>
    %c6 = arith.constant 6 : index
    %c0_19 = arith.constant 0 : index
    %c0_20 = arith.constant 0 : index
    %43 = vector.load %arg3[%c6, %c0_19, %c0_20] : memref<9x32x1024xf32, #tpu.memory_space<vmem>>, vector<1x32x1024xf32>
    %44 = vector.shape_cast %43 : vector<1x32x1024xf32> to vector<32x1024xf32>
    %45 = arith.mulf %42, %44 : vector<32x1024xf32>
    %46 = arith.addf %41, %45 : vector<32x1024xf32>
    %c1008_i32 = arith.constant 1008 : i32
    %47 = tpu.dynamic_rotate %9 by %c1008_i32 dim 1 : vector<32x1024xf32>, i32 -> vector<32x1024xf32>
    %c7 = arith.constant 7 : index
    %c0_21 = arith.constant 0 : index
    %c0_22 = arith.constant 0 : index
    %48 = vector.load %arg3[%c7, %c0_21, %c0_22] : memref<9x32x1024xf32, #tpu.memory_space<vmem>>, vector<1x32x1024xf32>
    %49 = vector.shape_cast %48 : vector<1x32x1024xf32> to vector<32x1024xf32>
    %50 = arith.mulf %47, %49 : vector<32x1024xf32>
    %51 = arith.addf %46, %50 : vector<32x1024xf32>
    %c1007_i32 = arith.constant 1007 : i32
    %52 = tpu.dynamic_rotate %9 by %c1007_i32 dim 1 : vector<32x1024xf32>, i32 -> vector<32x1024xf32>
    %c8 = arith.constant 8 : index
    %c0_23 = arith.constant 0 : index
    %c0_24 = arith.constant 0 : index
    %53 = vector.load %arg3[%c8, %c0_23, %c0_24] : memref<9x32x1024xf32, #tpu.memory_space<vmem>>, vector<1x32x1024xf32>
    %54 = vector.shape_cast %53 : vector<1x32x1024xf32> to vector<32x1024xf32>
    %55 = arith.mulf %52, %54 : vector<32x1024xf32>
    %56 = arith.addf %51, %55 : vector<32x1024xf32>
    %57 = arith.negf %56 : vector<32x1024xf32>
    %58 = math.exp %57 : vector<32x1024xf32>
    %cst_25 = arith.constant 1.000000e+00 : f32
    %59 = vector.broadcast %cst_25 : f32 to vector<32x1024xf32>
    %60 = arith.addf %59, %58 : vector<32x1024xf32>
    %61 = arith.divf %59, %60 : vector<32x1024xf32>
    %62 = arith.mulf %56, %61 : vector<32x1024xf32>
    %c0_26 = arith.constant 0 : index
    %c0_27 = arith.constant 0 : index
    %63 = vector.load %arg5[%c0_26, %c0_27] : memref<32x2xf32, #tpu.memory_space<vmem>>, vector<32x2xf32>
    %c0_28 = arith.constant 0 : index
    %c0_29 = arith.constant 0 : index
    %64 = vector.load %arg7[%c0_28, %c0_29] : memref<32x2xf32, #tpu.memory_space<vmem>>, vector<32x2xf32>
    %c0_30 = arith.constant 0 : index
    %c0_31 = arith.constant 0 : index
    %65 = vector.load %arg6[%c0_30, %c0_31] : memref<1x2xf32, #tpu.memory_space<vmem>>, vector<1x2xf32>
    %c0_32 = arith.constant 0 : index
    %c0_33 = arith.constant 0 : index
    %66 = vector.load %arg8[%c0_32, %c0_33] : memref<32x1xf32, #tpu.memory_space<vmem>>, vector<32x1xf32>
    %67 = vector.extract_strided_slice %62 {offsets = [0, 0], sizes = [32, 256], strides = [1, 1]} : vector<32x1024xf32> to vector<32x256xf32>
    %cst_34 = arith.constant dense<0.000000e+00> : vector<32xf32>
    %68 = vector.multi_reduction <add>, %67, %cst_34 [1] : vector<32x256xf32> to vector<32xf32>
    %69 = vector.shape_cast %68 : vector<32xf32> to vector<32x1xf32>
    %cst_35 = arith.constant 3.906250e-03 : f32
    %70 = vector.broadcast %cst_35 : f32 to vector<32x1xf32>
    %71 = arith.mulf %69, %70 : vector<32x1xf32>
    %72 = vector.broadcast %71 : vector<32x1xf32> to vector<32x2xf32>
    %73 = arith.mulf %63, %72 : vector<32x2xf32>
    %cst_36 = arith.constant dense<0.000000e+00> : vector<2xf32>
    %74 = vector.multi_reduction <add>, %73, %cst_36 [0] : vector<32x2xf32> to vector<2xf32>
    %75 = vector.shape_cast %74 : vector<2xf32> to vector<1x2xf32>
    %76 = arith.addf %75, %65 : vector<1x2xf32>
    %77 = arith.negf %76 : vector<1x2xf32>
    %78 = math.exp %77 : vector<1x2xf32>
    %cst_37 = arith.constant 1.000000e+00 : f32
    %79 = vector.broadcast %cst_37 : f32 to vector<1x2xf32>
    %80 = arith.addf %79, %78 : vector<1x2xf32>
    %81 = arith.divf %79, %80 : vector<1x2xf32>
    %82 = arith.mulf %76, %81 : vector<1x2xf32>
    %83 = vector.broadcast %82 : vector<1x2xf32> to vector<32x2xf32>
    %84 = arith.mulf %64, %83 : vector<32x2xf32>
    %cst_38 = arith.constant dense<0.000000e+00> : vector<32xf32>
    %85 = vector.multi_reduction <add>, %84, %cst_38 [1] : vector<32x2xf32> to vector<32xf32>
    %86 = vector.shape_cast %85 : vector<32xf32> to vector<32x1xf32>
    %87 = arith.addf %86, %66 : vector<32x1xf32>
    %88 = arith.negf %87 : vector<32x1xf32>
    %89 = math.exp %88 : vector<32x1xf32>
    %cst_39 = arith.constant 1.000000e+00 : f32
    %90 = vector.broadcast %cst_39 : f32 to vector<32x1xf32>
    %91 = arith.addf %90, %89 : vector<32x1xf32>
    %92 = arith.divf %90, %91 : vector<32x1xf32>
    %93 = vector.broadcast %92 : vector<32x1xf32> to vector<32x256xf32>
    %94 = arith.mulf %67, %93 : vector<32x256xf32>
    %95 = vector.extract_strided_slice %62 {offsets = [0, 256], sizes = [32, 256], strides = [1, 1]} : vector<32x1024xf32> to vector<32x256xf32>
    %cst_40 = arith.constant dense<0.000000e+00> : vector<32xf32>
    %96 = vector.multi_reduction <add>, %95, %cst_40 [1] : vector<32x256xf32> to vector<32xf32>
    %97 = vector.shape_cast %96 : vector<32xf32> to vector<32x1xf32>
    %cst_41 = arith.constant 3.906250e-03 : f32
    %98 = vector.broadcast %cst_41 : f32 to vector<32x1xf32>
    %99 = arith.mulf %97, %98 : vector<32x1xf32>
    %100 = vector.broadcast %99 : vector<32x1xf32> to vector<32x2xf32>
    %101 = arith.mulf %63, %100 : vector<32x2xf32>
    %cst_42 = arith.constant dense<0.000000e+00> : vector<2xf32>
    %102 = vector.multi_reduction <add>, %101, %cst_42 [0] : vector<32x2xf32> to vector<2xf32>
    %103 = vector.shape_cast %102 : vector<2xf32> to vector<1x2xf32>
    %104 = arith.addf %103, %65 : vector<1x2xf32>
    %105 = arith.negf %104 : vector<1x2xf32>
    %106 = math.exp %105 : vector<1x2xf32>
    %cst_43 = arith.constant 1.000000e+00 : f32
    %107 = vector.broadcast %cst_43 : f32 to vector<1x2xf32>
    %108 = arith.addf %107, %106 : vector<1x2xf32>
    %109 = arith.divf %107, %108 : vector<1x2xf32>
    %110 = arith.mulf %104, %109 : vector<1x2xf32>
    %111 = vector.broadcast %110 : vector<1x2xf32> to vector<32x2xf32>
    %112 = arith.mulf %64, %111 : vector<32x2xf32>
    %cst_44 = arith.constant dense<0.000000e+00> : vector<32xf32>
    %113 = vector.multi_reduction <add>, %112, %cst_44 [1] : vector<32x2xf32> to vector<32xf32>
    %114 = vector.shape_cast %113 : vector<32xf32> to vector<32x1xf32>
    %115 = arith.addf %114, %66 : vector<32x1xf32>
    %116 = arith.negf %115 : vector<32x1xf32>
    %117 = math.exp %116 : vector<32x1xf32>
    %cst_45 = arith.constant 1.000000e+00 : f32
    %118 = vector.broadcast %cst_45 : f32 to vector<32x1xf32>
    %119 = arith.addf %118, %117 : vector<32x1xf32>
    %120 = arith.divf %118, %119 : vector<32x1xf32>
    %121 = vector.broadcast %120 : vector<32x1xf32> to vector<32x256xf32>
    %122 = arith.mulf %95, %121 : vector<32x256xf32>
    %123 = vector.extract_strided_slice %62 {offsets = [0, 512], sizes = [32, 256], strides = [1, 1]} : vector<32x1024xf32> to vector<32x256xf32>
    %cst_46 = arith.constant dense<0.000000e+00> : vector<32xf32>
    %124 = vector.multi_reduction <add>, %123, %cst_46 [1] : vector<32x256xf32> to vector<32xf32>
    %125 = vector.shape_cast %124 : vector<32xf32> to vector<32x1xf32>
    %cst_47 = arith.constant 3.906250e-03 : f32
    %126 = vector.broadcast %cst_47 : f32 to vector<32x1xf32>
    %127 = arith.mulf %125, %126 : vector<32x1xf32>
    %128 = vector.broadcast %127 : vector<32x1xf32> to vector<32x2xf32>
    %129 = arith.mulf %63, %128 : vector<32x2xf32>
    %cst_48 = arith.constant dense<0.000000e+00> : vector<2xf32>
    %130 = vector.multi_reduction <add>, %129, %cst_48 [0] : vector<32x2xf32> to vector<2xf32>
    %131 = vector.shape_cast %130 : vector<2xf32> to vector<1x2xf32>
    %132 = arith.addf %131, %65 : vector<1x2xf32>
    %133 = arith.negf %132 : vector<1x2xf32>
    %134 = math.exp %133 : vector<1x2xf32>
    %cst_49 = arith.constant 1.000000e+00 : f32
    %135 = vector.broadcast %cst_49 : f32 to vector<1x2xf32>
    %136 = arith.addf %135, %134 : vector<1x2xf32>
    %137 = arith.divf %135, %136 : vector<1x2xf32>
    %138 = arith.mulf %132, %137 : vector<1x2xf32>
    %139 = vector.broadcast %138 : vector<1x2xf32> to vector<32x2xf32>
    %140 = arith.mulf %64, %139 : vector<32x2xf32>
    %cst_50 = arith.constant dense<0.000000e+00> : vector<32xf32>
    %141 = vector.multi_reduction <add>, %140, %cst_50 [1] : vector<32x2xf32> to vector<32xf32>
    %142 = vector.shape_cast %141 : vector<32xf32> to vector<32x1xf32>
    %143 = arith.addf %142, %66 : vector<32x1xf32>
    %144 = arith.negf %143 : vector<32x1xf32>
    %145 = math.exp %144 : vector<32x1xf32>
    %cst_51 = arith.constant 1.000000e+00 : f32
    %146 = vector.broadcast %cst_51 : f32 to vector<32x1xf32>
    %147 = arith.addf %146, %145 : vector<32x1xf32>
    %148 = arith.divf %146, %147 : vector<32x1xf32>
    %149 = vector.broadcast %148 : vector<32x1xf32> to vector<32x256xf32>
    %150 = arith.mulf %123, %149 : vector<32x256xf32>
    %151 = vector.extract_strided_slice %62 {offsets = [0, 768], sizes = [32, 256], strides = [1, 1]} : vector<32x1024xf32> to vector<32x256xf32>
    %cst_52 = arith.constant dense<0.000000e+00> : vector<32xf32>
    %152 = vector.multi_reduction <add>, %151, %cst_52 [1] : vector<32x256xf32> to vector<32xf32>
    %153 = vector.shape_cast %152 : vector<32xf32> to vector<32x1xf32>
    %cst_53 = arith.constant 3.906250e-03 : f32
    %154 = vector.broadcast %cst_53 : f32 to vector<32x1xf32>
    %155 = arith.mulf %153, %154 : vector<32x1xf32>
    %156 = vector.broadcast %155 : vector<32x1xf32> to vector<32x2xf32>
    %157 = arith.mulf %63, %156 : vector<32x2xf32>
    %cst_54 = arith.constant dense<0.000000e+00> : vector<2xf32>
    %158 = vector.multi_reduction <add>, %157, %cst_54 [0] : vector<32x2xf32> to vector<2xf32>
    %159 = vector.shape_cast %158 : vector<2xf32> to vector<1x2xf32>
    %160 = arith.addf %159, %65 : vector<1x2xf32>
    %161 = arith.negf %160 : vector<1x2xf32>
    %162 = math.exp %161 : vector<1x2xf32>
    %cst_55 = arith.constant 1.000000e+00 : f32
    %163 = vector.broadcast %cst_55 : f32 to vector<1x2xf32>
    %164 = arith.addf %163, %162 : vector<1x2xf32>
    %165 = arith.divf %163, %164 : vector<1x2xf32>
    %166 = arith.mulf %160, %165 : vector<1x2xf32>
    %167 = vector.broadcast %166 : vector<1x2xf32> to vector<32x2xf32>
    %168 = arith.mulf %64, %167 : vector<32x2xf32>
    %cst_56 = arith.constant dense<0.000000e+00> : vector<32xf32>
    %169 = vector.multi_reduction <add>, %168, %cst_56 [1] : vector<32x2xf32> to vector<32xf32>
    %170 = vector.shape_cast %169 : vector<32xf32> to vector<32x1xf32>
    %171 = arith.addf %170, %66 : vector<32x1xf32>
    %172 = arith.negf %171 : vector<32x1xf32>
    %173 = math.exp %172 : vector<32x1xf32>
    %cst_57 = arith.constant 1.000000e+00 : f32
    %174 = vector.broadcast %cst_57 : f32 to vector<32x1xf32>
    %175 = arith.addf %174, %173 : vector<32x1xf32>
    %176 = arith.divf %174, %175 : vector<32x1xf32>
    %177 = vector.broadcast %176 : vector<32x1xf32> to vector<32x256xf32>
    %178 = arith.mulf %151, %177 : vector<32x256xf32>
    %179 = tpu.concatenate %94, %122, %150, %178 in 1 : vector<32x256xf32>, vector<32x256xf32>, vector<32x256xf32>, vector<32x256xf32> -> vector<32x1024xf32>
    %c0_58 = arith.constant 0 : index
    %c0_59 = arith.constant 0 : index
    %180 = vector.load %arg9[%c0_58, %c0_59] : memref<8x32xbf16, #tpu.memory_space<vmem>>, vector<8x32xbf16>
    %181 = arith.truncf %179 : vector<32x1024xf32> to vector<32x1024xbf16>
    %cst_60 = arith.constant dense<0.000000e+00> : vector<8x1024xf32>
    %182 = tpu.matmul %180, %181, %cst_60 {dimension_numbers = #tpu.dot_dimension_numbers<[1], [0], [0], [1], [0, 0, 1, 1], [], []>} : vector<8x32xbf16>, vector<32x1024xbf16>, vector<8x1024xf32> -> vector<8x1024xf32>
    %c0_61 = arith.constant 0 : index
    %c0_62 = arith.constant 0 : index
    %183 = vector.load %arg10[%c0_61, %c0_62] : memref<8x1xf32, #tpu.memory_space<vmem>>, vector<8x1xf32>
    %184 = vector.broadcast %183 : vector<8x1xf32> to vector<8x1024xf32>
    %185 = arith.addf %182, %184 : vector<8x1024xf32>
    %186 = vector.extract_strided_slice %0 {offsets = [0, 0], sizes = [8, 1024], strides = [1, 1]} : vector<9x1024xf32> to vector<8x1024xf32>
    %187 = arith.addf %185, %186 : vector<8x1024xf32>
    %c0_63 = arith.constant 0 : index
    %c0_64 = arith.constant 0 : index
    %188 = vector.load %arg11[%c0_63, %c0_64] : memref<8x1024xf32, #tpu.memory_space<vmem>>, vector<8x1024xf32>
    tpu.vector_store %arg11[%c0_63, %c0_64], %187 {strides = array<i32>} : memref<8x1024xf32, #tpu.memory_space<vmem>>, vector<8x1024xf32>,
    return
  }
  func.func @transform_0(%arg0: i32) -> (i32, i32) {
    %c0_i32 = arith.constant 0 : i32
    %c0_i32_0 = arith.constant 0 : i32
    return %c0_i32, %arg0 : i32, i32
  }
  func.func @transform_1(%arg0: i32) -> (i32, i32) {
    %c0_i32 = arith.constant 0 : i32
    %c0_i32_0 = arith.constant 0 : i32
    %c0_i32_1 = arith.constant 0 : i32
    return %c0_i32, %c0_i32_0 : i32, i32
  }
  func.func @transform_2(%arg0: i32) -> (i32, i32, i32) {
    %c0_i32 = arith.constant 0 : i32
    %c0_i32_0 = arith.constant 0 : i32
    %c0_i32_1 = arith.constant 0 : i32
    %c0_i32_2 = arith.constant 0 : i32
    return %c0_i32, %c0_i32_0, %c0_i32_1 : i32, i32, i32
  }
  func.func @transform_3(%arg0: i32) -> (i32, i32) {
    %c0_i32 = arith.constant 0 : i32
    %c0_i32_0 = arith.constant 0 : i32
    %c0_i32_1 = arith.constant 0 : i32
    return %c0_i32, %c0_i32_0 : i32, i32
  }
  func.func @transform_4(%arg0: i32) -> (i32, i32) {
    %c0_i32 = arith.constant 0 : i32
    %c0_i32_0 = arith.constant 0 : i32
    %c0_i32_1 = arith.constant 0 : i32
    return %c0_i32, %c0_i32_0 : i32, i32
  }
  func.func @transform_5(%arg0: i32) -> (i32, i32) {
    %c0_i32 = arith.constant 0 : i32
    %c0_i32_0 = arith.constant 0 : i32
    %c0_i32_1 = arith.constant 0 : i32
    return %c0_i32, %c0_i32_0 : i32, i32
  }
  func.func @transform_6(%arg0: i32) -> (i32, i32) {
    %c0_i32 = arith.constant 0 : i32
    %c0_i32_0 = arith.constant 0 : i32
    %c0_i32_1 = arith.constant 0 : i32
    return %c0_i32, %c0_i32_0 : i32, i32
  }
  func.func @transform_7(%arg0: i32) -> (i32, i32) {
    %c0_i32 = arith.constant 0 : i32
    %c0_i32_0 = arith.constant 0 : i32
    %c0_i32_1 = arith.constant 0 : i32
    return %c0_i32, %c0_i32_0 : i32, i32
  }
  func.func @transform_8(%arg0: i32) -> (i32, i32) {
    %c0_i32 = arith.constant 0 : i32
    %c0_i32_0 = arith.constant 0 : i32
    %c0_i32_1 = arith.constant 0 : i32
    return %c0_i32, %c0_i32_0 : i32, i32
  }
  func.func @transform_9(%arg0: i32) -> (i32, i32) {
    %c0_i32 = arith.constant 0 : i32
    %c0_i32_0 = arith.constant 0 : i32
    %c0_i32_1 = arith.constant 0 : i32
    return %c0_i32, %c0_i32_0 : i32, i32
  }
  func.func @transform_10(%arg0: i32) -> (i32, i32) {
    %c0_i32 = arith.constant 0 : i32
    %c0_i32_0 = arith.constant 0 : i32
    return %c0_i32, %arg0 : i32, i32
  }
}

</mosaic_0001>

<llo_original>
// kernel: tpu_custom_call.1
$region0: #{tpu_custom_call.1}
  #allocation0 [shape = 'u32[]', space=smem, size = 0x4, offset = 0x4, fixed_abs, tag = 'smem constant byte address 0x4 - core index']
  #allocation1 [shape = 'u32[144,128]{1,0:T(1,128)}', space=vmem, size = 0x12000, scoped, tag = 'internal scratch']
  %s0 = inlined_call_operand.hbm [shape: f32[9,2048], index: 0, kind: input, shape index: {}]
  %s1 = inlined_call_operand.vmem [shape: bf16[32,9], index: 1, kind: input, shape index: {}]
  %s2 = inlined_call_operand.hbm [shape: f32[9,32,1024], index: 2, kind: input, shape index: {}]
  %s3 = inlined_call_operand.vmem [shape: f32[32,1], index: 3, kind: input, shape index: {}]
  %s4 = inlined_call_operand.vmem [shape: f32[32,2], index: 4, kind: input, shape index: {}]
  %s5 = inlined_call_operand.hbm [shape: f32[1,2], index: 5, kind: input, shape index: {}]
  %s6 = inlined_call_operand.vmem [shape: f32[32,2], index: 6, kind: input, shape index: {}]
  %s7 = inlined_call_operand.vmem [shape: f32[32,1], index: 7, kind: input, shape index: {}]
  %s8 = inlined_call_operand.hbm [shape: bf16[8,32], index: 8, kind: input, shape index: {}]
  %s9 = inlined_call_operand.vmem [shape: f32[8,1], index: 9, kind: input, shape index: {}]
  %s10 = inlined_call_operand.hbm [shape: f32[8,2048], index: 10, kind: output, shape index: {}]
  %s11 = sld [smem:[#allocation0]]
  $region89: #{tpu_custom_call.1} parent=0
    _
  %s13 = ssub.s32 1, %s11
  %s14 = scalar_select 0, %s13, %s11
  $region1: #{tpu_custom_call.1} parent=0
    #allocation2 [shape = 'u8[131072]{0}', space=vmem, size = 0x20000, scoped, tag = 'input window, operand 0']
    #allocation3 [shape = 's32[2]{0}', space=sflag, size = 0x8, scoped, tag = 'scoped memory for tpu_custom_call.1']
    #allocation4 [shape = 's32[2]{0}', space=sflag, size = 0x8, scoped, tag = 'scoped memory for tpu_custom_call.1']
    #allocation5 [shape = 'u8[1179648]{0}', space=vmem, size = 0x120000, scoped, tag = 'input window, operand 2, single buffered']
    #allocation6 [shape = 's32[1]{0}', space=sflag, size = 0x4, scoped, tag = 'scoped memory for tpu_custom_call.1']
    #allocation7 [shape = 'u8[512]{0}', space=vmem, size = 0x400, scoped, tag = 'input window, operand 5, single buffered']
    #allocation8 [shape = 'u8[2048]{0}', space=vmem, size = 0x800, scoped, tag = 'input window, operand 8, single buffered']
    #allocation9 [shape = 's32[1]{0}', space=sflag, size = 0x4, scoped, tag = 'scoped memory for tpu_custom_call.1']
    #allocation10 [shape = 'u8[65536]{0}', space=vmem, size = 0x10000, scoped, tag = 'output window, operand 0']
    %15 = vsyncpa [#allocation3], 0
    %s16 = scalar_lea.sflag [#allocation3], 1
    %17 = vsyncpa %s16, 0
    %18 = vsyncpa [#allocation6], 0
    %19 = vsyncpa [#allocation9], 0
    %20 = vsyncpa [#allocation4], 0
    %s21 = scalar_lea.sflag [#allocation4], 1
    %22 = vsyncpa %s21, 0
    loop: start=0, step=1, limit=4
    $region2: #{tpu_custom_call.1} parent=1 // loop_pre_header
      _
    $region3: #{tpu_custom_call.1} parent=1 // loop_header
      %s24 = sphi 0, %s28
      %p25 = scmp.ge.s32.totalorder %s24, 4
      %s34 = sphi 0, %s36
      %s37 = sphi 0, %s34
      %s38 = sphi 0, %s37
      %s54 = sphi 0, %s38
      %s58 = sphi 0, %s58
      %s60 = sphi 0, %s58
      %s61 = sphi 0, %s60
      %s75 = sphi 0, %s61
      %s79 = sphi 0, %s79
      %s81 = sphi 0, %s79
      %s82 = sphi 0, %s81
      %s96 = sphi 0, %s82
      %s100 = sphi 0, %s100
      %s102 = sphi 0, %s100
      %s103 = sphi 0, %s102
      %s117 = sphi 0, %s103
      %s121 = sphi 0, %s121
      %s123 = sphi 0, %s121
      %s124 = sphi 0, %s123
      %s138 = sphi 0, %s124
      %s142 = sphi 0, %s142
      %s144 = sphi 0, %s142
      %s145 = sphi 0, %s144
      %s159 = sphi 0, %s145
      %s163 = sphi 0, %s163
      %s165 = sphi 0, %s163
      %s166 = sphi 0, %s165
      %s180 = sphi 0, %s166
      %s184 = sphi 0, %s184
      %s186 = sphi 0, %s184
      %s187 = sphi 0, %s186
      %s201 = sphi 0, %s187
      %s205 = sphi 0, %s205
      %s207 = sphi 0, %s205
      %s208 = sphi 0, %s207
      %s222 = sphi 0, %s208
      %s226 = sphi 0, %s226
      %s228 = sphi 0, %s226
      %s229 = sphi 0, %s228
      %s243 = sphi 0, %s229
      %s249 = sphi 0, %s251
      %s252 = sphi 0, %s249
      %s253 = sphi 0, %s252
      %s269 = sphi 0, %s253
    $region4: #{tpu_custom_call.1} parent=1 // loop_header_branch
      %27 = sbr.rel (%p25) target = $region8
    $region5: #{tpu_custom_call.1} parent=1 // loop_body
      %s29 = ssub.s32 %s24, 1
      %s30 = ssub.s32 %s24, 2
      %s31 = sadd.s32 %s24, 1
      %s32 = ssub.s32 %s24, %s31
      %p33 = scmp.eq.s32.totalorder %s32, 0
      %s35 = sadd.s32 %s34, 1
      %s36 = scalar_select %p33, %s34, %s35
      %p39 = pneg %p33
      %p40 = scmp.eq.s32.totalorder %s24, 1
      %p41 = por %p39, %p40
      %p42 = scmp.ne.s32.totalorder %s34, %s37
      %p43 = scmp.eq.s32.totalorder %s24, 0
      %p44 = por %p42, %p43
      %p45 = scmp.ne.s32.totalorder %s34, %s37
      %p46 = scmp.eq.s32.totalorder %s29, 1
      %p47 = por %p45, %p46
      %p48 = scmp.ne.s32.totalorder %s37, %s38
      %p49 = scmp.eq.s32.totalorder %s29, 0
      %p50 = por %p48, %p49
      %p51 = scmp.ne.s32.totalorder %s37, %s38
      %p52 = scmp.eq.s32.totalorder %s30, 1
      %p53 = por %p51, %p52
      %p55 = scmp.ne.s32.totalorder %s38, %s54
      %p56 = scmp.eq.s32.totalorder %s30, 0
      %p57 = por %p55, %p56
      %s59 = sadd.s32 %s58, 1
      %p62 = scmp.eq.s32.totalorder %s24, 1
      %p63 = scmp.ne.s32.totalorder %s58, %s60
      %p64 = scmp.eq.s32.totalorder %s24, 0
      %p65 = por %p63, %p64
      %p66 = scmp.ne.s32.totalorder %s58, %s60
      %p67 = scmp.eq.s32.totalorder %s29, 1
      %p68 = por %p66, %p67
      %p69 = scmp.ne.s32.totalorder %s60, %s61
      %p70 = scmp.eq.s32.totalorder %s29, 0
      %p71 = por %p69, %p70
      %p72 = scmp.ne.s32.totalorder %s60, %s61
      %p73 = scmp.eq.s32.totalorder %s30, 1
      %p74 = por %p72, %p73
      %p76 = scmp.ne.s32.totalorder %s61, %s75
      %p77 = scmp.eq.s32.totalorder %s30, 0
      %p78 = por %p76, %p77
      %s80 = sadd.s32 %s79, 1
      %p83 = scmp.eq.s32.totalorder %s24, 1
      %p84 = scmp.ne.s32.totalorder %s79, %s81
      %p85 = scmp.eq.s32.totalorder %s24, 0
      %p86 = por %p84, %p85
      %p87 = scmp.ne.s32.totalorder %s79, %s81
      %p88 = scmp.eq.s32.totalorder %s29, 1
      %p89 = por %p87, %p88
      %p90 = scmp.ne.s32.totalorder %s81, %s82
      %p91 = scmp.eq.s32.totalorder %s29, 0
      %p92 = por %p90, %p91
      %p93 = scmp.ne.s32.totalorder %s81, %s82
      %p94 = scmp.eq.s32.totalorder %s30, 1
      %p95 = por %p93, %p94
      %p97 = scmp.ne.s32.totalorder %s82, %s96
      %p98 = scmp.eq.s32.totalorder %s30, 0
      %p99 = por %p97, %p98
      %s101 = sadd.s32 %s100, 1
      %p104 = scmp.eq.s32.totalorder %s24, 1
      %p105 = scmp.ne.s32.totalorder %s100, %s102
      %p106 = scmp.eq.s32.totalorder %s24, 0
      %p107 = por %p105, %p106
      %p108 = scmp.ne.s32.totalorder %s100, %s102
      %p109 = scmp.eq.s32.totalorder %s29, 1
      %p110 = por %p108, %p109
      %p111 = scmp.ne.s32.totalorder %s102, %s103
      %p112 = scmp.eq.s32.totalorder %s29, 0
      %p113 = por %p111, %p112
      %p114 = scmp.ne.s32.totalorder %s102, %s103
      %p115 = scmp.eq.s32.totalorder %s30, 1
      %p116 = por %p114, %p115
      %p118 = scmp.ne.s32.totalorder %s103, %s117
      %p119 = scmp.eq.s32.totalorder %s30, 0
      %p120 = por %p118, %p119
      %s122 = sadd.s32 %s121, 1
      %p125 = scmp.eq.s32.totalorder %s24, 1
      %p126 = scmp.ne.s32.totalorder %s121, %s123
      %p127 = scmp.eq.s32.totalorder %s24, 0
      %p128 = por %p126, %p127
      %p129 = scmp.ne.s32.totalorder %s121, %s123
      %p130 = scmp.eq.s32.totalorder %s29, 1
      %p131 = por %p129, %p130
      %p132 = scmp.ne.s32.totalorder %s123, %s124
      %p133 = scmp.eq.s32.totalorder %s29, 0
      %p134 = por %p132, %p133
      %p135 = scmp.ne.s32.totalorder %s123, %s124
      %p136 = scmp.eq.s32.totalorder %s30, 1
      %p137 = por %p135, %p136
      %p139 = scmp.ne.s32.totalorder %s124, %s138
      %p140 = scmp.eq.s32.totalorder %s30, 0
      %p141 = por %p139, %p140
      %s143 = sadd.s32 %s142, 1
      %p146 = scmp.eq.s32.totalorder %s24, 1
      %p147 = scmp.ne.s32.totalorder %s142, %s144
      %p148 = scmp.eq.s32.totalorder %s24, 0
      %p149 = por %p147, %p148
      %p150 = scmp.ne.s32.totalorder %s142, %s144
      %p151 = scmp.eq.s32.totalorder %s29, 1
      %p152 = por %p150, %p151
      %p153 = scmp.ne.s32.totalorder %s144, %s145
      %p154 = scmp.eq.s32.totalorder %s29, 0
      %p155 = por %p153, %p154
      %p156 = scmp.ne.s32.totalorder %s144, %s145
      %p157 = scmp.eq.s32.totalorder %s30, 1
      %p158 = por %p156, %p157
      %p160 = scmp.ne.s32.totalorder %s145, %s159
      %p161 = scmp.eq.s32.totalorder %s30, 0
      %p162 = por %p160, %p161
      %s164 = sadd.s32 %s163, 1
      %p167 = scmp.eq.s32.totalorder %s24, 1
      %p168 = scmp.ne.s32.totalorder %s163, %s165
      %p169 = scmp.eq.s32.totalorder %s24, 0
      %p170 = por %p168, %p169
      %p171 = scmp.ne.s32.totalorder %s163, %s165
      %p172 = scmp.eq.s32.totalorder %s29, 1
      %p173 = por %p171, %p172
      %p174 = scmp.ne.s32.totalorder %s165, %s166
      %p175 = scmp.eq.s32.totalorder %s29, 0
      %p176 = por %p174, %p175
      %p177 = scmp.ne.s32.totalorder %s165, %s166
      %p178 = scmp.eq.s32.totalorder %s30, 1
      %p179 = por %p177, %p178
      %p181 = scmp.ne.s32.totalorder %s166, %s180
      %p182 = scmp.eq.s32.totalorder %s30, 0
      %p183 = por %p181, %p182
      %s185 = sadd.s32 %s184, 1
      %p188 = scmp.eq.s32.totalorder %s24, 1
      %p189 = scmp.ne.s32.totalorder %s184, %s186
      %p190 = scmp.eq.s32.totalorder %s24, 0
      %p191 = por %p189, %p190
      %p192 = scmp.ne.s32.totalorder %s184, %s186
      %p193 = scmp.eq.s32.totalorder %s29, 1
      %p194 = por %p192, %p193
      %p195 = scmp.ne.s32.totalorder %s186, %s187
      %p196 = scmp.eq.s32.totalorder %s29, 0
      %p197 = por %p195, %p196
      %p198 = scmp.ne.s32.totalorder %s186, %s187
      %p199 = scmp.eq.s32.totalorder %s30, 1
      %p200 = por %p198, %p199
      %p202 = scmp.ne.s32.totalorder %s187, %s201
      %p203 = scmp.eq.s32.totalorder %s30, 0
      %p204 = por %p202, %p203
      %s206 = sadd.s32 %s205, 1
      %p209 = scmp.eq.s32.totalorder %s24, 1
      %p210 = scmp.ne.s32.totalorder %s205, %s207
      %p211 = scmp.eq.s32.totalorder %s24, 0
      %p212 = por %p210, %p211
      %p213 = scmp.ne.s32.totalorder %s205, %s207
      %p214 = scmp.eq.s32.totalorder %s29, 1
      %p215 = por %p213, %p214
      %p216 = scmp.ne.s32.totalorder %s207, %s208
      %p217 = scmp.eq.s32.totalorder %s29, 0
      %p218 = por %p216, %p217
      %p219 = scmp.ne.s32.totalorder %s207, %s208
      %p220 = scmp.eq.s32.totalorder %s30, 1
      %p221 = por %p219, %p220
      %p223 = scmp.ne.s32.totalorder %s208, %s222
      %p224 = scmp.eq.s32.totalorder %s30, 0
      %p225 = por %p223, %p224
      %s227 = sadd.s32 %s226, 1
      %p230 = scmp.eq.s32.totalorder %s24, 1
      %p231 = scmp.ne.s32.totalorder %s226, %s228
      %p232 = scmp.eq.s32.totalorder %s24, 0
      %p233 = por %p231, %p232
      %p234 = scmp.ne.s32.totalorder %s226, %s228
      %p235 = scmp.eq.s32.totalorder %s29, 1
      %p236 = por %p234, %p235
      %p237 = scmp.ne.s32.totalorder %s228, %s229
      %p238 = scmp.eq.s32.totalorder %s29, 0
      %p239 = por %p237, %p238
      %p240 = scmp.ne.s32.totalorder %s228, %s229
      %p241 = scmp.eq.s32.totalorder %s30, 1
      %p242 = por %p240, %p241
      %p244 = scmp.ne.s32.totalorder %s229, %s243
      %p245 = scmp.eq.s32.totalorder %s30, 0
      %p246 = por %p244, %p245
      %s247 = ssub.s32 %s24, %s31
      %p248 = scmp.eq.s32.totalorder %s247, 0
      %s250 = sadd.s32 %s249, 1
      %s251 = scalar_select %p248, %s249, %s250
      %p254 = pneg %p248
      %p255 = scmp.eq.s32.totalorder %s24, 1
      %p256 = por %p254, %p255
      %p257 = scmp.ne.s32.totalorder %s249, %s252
      %p258 = scmp.eq.s32.totalorder %s24, 0
      %p259 = por %p257, %p258
      %p260 = scmp.ne.s32.totalorder %s249, %s252
      %p261 = scmp.eq.s32.totalorder %s29, 1
      %p262 = por %p260, %p261
      %p263 = scmp.ne.s32.totalorder %s252, %s253
      %p264 = scmp.eq.s32.totalorder %s29, 0
      %p265 = por %p263, %p264
      %p266 = scmp.ne.s32.totalorder %s252, %s253
      %p267 = scmp.eq.s32.totalorder %s30, 1
      %p268 = por %p266, %p267
      %p270 = scmp.ne.s32.totalorder %s253, %s269
      %p271 = scmp.eq.s32.totalorder %s30, 0
      %p272 = por %p270, %p271
      %p273 = scmp.le.s32.totalorder 1, %s24
      %p274 = scmp.lt.s32.totalorder %s24, 3
      %p275 = pnand %p273, %p274
      %p276 = pneg %p275
      // Predicated region
      $region9: #{tpu_custom_call.1} parent=5 // pred_check
        _
      $region10: #{tpu_custom_call.1} parent=5 // pred_check_branch
        %278 = sbr.rel (%p275) target = $region12
      $region11: #{tpu_custom_call.1} parent=5 // pred_region
        %s279 = ssub.s32 %s24, 1
        // Predicated region
        $region13: #{tpu_custom_call.1} parent=11 // pred_check
          %p280 = pneg %p71
        $region14: #{tpu_custom_call.1} parent=11 // pred_check_branch
          %282 = sbr.rel (%p280) target = $region16
        $region15: #{tpu_custom_call.1} parent=11 // pred_region
          _
        $region16: #{tpu_custom_call.1} parent=11 // pred_fallthru
          _
        // Predicated region
        $region17: #{tpu_custom_call.1} parent=11 // pred_check
          %p283 = pneg %p92
        $region18: #{tpu_custom_call.1} parent=11 // pred_check_branch
          %285 = sbr.rel (%p283) target = $region20
        $region19: #{tpu_custom_call.1} parent=11 // pred_region
          %s287 = ssub.s32 36864, 36864
          %288 = vsyncadd [#allocation6], %s287
          %s289 = sshll.u32 [#allocation5], 4
          %s290 = int_to_ptr.vmem [resolvable:$true] %s289
          %295 = dma.hbm_to_vmem [thread:$0]  %s2, 36864, %s290, [#allocation6], 1024, 1024, 64
        $region20: #{tpu_custom_call.1} parent=11 // pred_fallthru
          _
        // Predicated region
        $region21: #{tpu_custom_call.1} parent=11 // pred_check
          %p296 = pneg %p113
        $region22: #{tpu_custom_call.1} parent=11 // pred_check_branch
          %298 = sbr.rel (%p296) target = $region24
        $region23: #{tpu_custom_call.1} parent=11 // pred_region
          _
        $region24: #{tpu_custom_call.1} parent=11 // pred_fallthru
          _
        // Predicated region
        $region25: #{tpu_custom_call.1} parent=11 // pred_check
          %p299 = pneg %p134
        $region26: #{tpu_custom_call.1} parent=11 // pred_check_branch
          %301 = sbr.rel (%p299) target = $region28
        $region27: #{tpu_custom_call.1} parent=11 // pred_region
          _
        $region28: #{tpu_custom_call.1} parent=11 // pred_fallthru
          _
        // Predicated region
        $region29: #{tpu_custom_call.1} parent=11 // pred_check
          %p302 = pneg %p155
        $region30: #{tpu_custom_call.1} parent=11 // pred_check_branch
          %304 = sbr.rel (%p302) target = $region32
        $region31: #{tpu_custom_call.1} parent=11 // pred_region
          %s306 = ssub.s32 16, 16
          %307 = vsyncadd [#allocation6], %s306
          %s309 = sshll.u32 [#allocation7], 4
          %s310 = int_to_ptr.vmem [resolvable:$true] %s309
          %312 = dma.hbm_to_vmem [thread:$0]  %s5, 16, %s310, [#allocation6]
        $region32: #{tpu_custom_call.1} parent=11 // pred_fallthru
          _
        // Predicated region
        $region33: #{tpu_custom_call.1} parent=11 // pred_check
          %p313 = pneg %p176
        $region34: #{tpu_custom_call.1} parent=11 // pred_check_branch
          %315 = sbr.rel (%p313) target = $region36
        $region35: #{tpu_custom_call.1} parent=11 // pred_region
          _
        $region36: #{tpu_custom_call.1} parent=11 // pred_fallthru
          _
        // Predicated region
        $region37: #{tpu_custom_call.1} parent=11 // pred_check
          %p316 = pneg %p197
        $region38: #{tpu_custom_call.1} parent=11 // pred_check_branch
          %318 = sbr.rel (%p316) target = $region40
        $region39: #{tpu_custom_call.1} parent=11 // pred_region
          _
        $region40: #{tpu_custom_call.1} parent=11 // pred_fallthru
          _
        // Predicated region
        $region41: #{tpu_custom_call.1} parent=11 // pred_check
          %p319 = pneg %p218
        $region42: #{tpu_custom_call.1} parent=11 // pred_check_branch
          %321 = sbr.rel (%p319) target = $region44
        $region43: #{tpu_custom_call.1} parent=11 // pred_region
          %s323 = ssub.s32 64, 64
          %324 = vsyncadd [#allocation9], %s323
          %s326 = sshll.u32 [#allocation8], 4
          %s327 = int_to_ptr.vmem [resolvable:$true] %s326
          %329 = dma.hbm_to_vmem [thread:$0]  %s8, 64, %s327, [#allocation9]
        $region44: #{tpu_custom_call.1} parent=11 // pred_fallthru
          _
        // Predicated region
        $region45: #{tpu_custom_call.1} parent=11 // pred_check
          %p330 = pneg %p239
        $region46: #{tpu_custom_call.1} parent=11 // pred_check_branch
          %332 = sbr.rel (%p330) target = $region48
        $region47: #{tpu_custom_call.1} parent=11 // pred_region
          _
        $region48: #{tpu_custom_call.1} parent=11 // pred_fallthru
          _
      $region12: #{tpu_custom_call.1} parent=5 // pred_fallthru
        _
      %p333 = scmp.lt.s32.totalorder %s24, 2
      // Predicated region
      $region49: #{tpu_custom_call.1} parent=5 // pred_check
        %p334 = pneg %p333
      $region50: #{tpu_custom_call.1} parent=5 // pred_check_branch
        %336 = sbr.rel (%p334) target = $region52
      $region51: #{tpu_custom_call.1} parent=5 // pred_region
        // Predicated region
        $region53: #{tpu_custom_call.1} parent=51 // pred_check
          %p337 = pneg %p44
        $region54: #{tpu_custom_call.1} parent=51 // pred_check_branch
          %339 = sbr.rel (%p337) target = $region56
        $region55: #{tpu_custom_call.1} parent=51 // pred_region
          %s340 = sand.u32 %s34, 1
          %s341 = scalar_lea.sflag [#allocation3], %s340
          %s342 = sand.u32 %s34, 1
          %s343 = smul.addr %s342, 128
          %s344 = scalar_lea.vmem [#allocation2], %s343
          %s345 = smul.u32 8, %s24
          %s347 = ssub.s32 2048, 2048
          %348 = vsyncadd %s341, %s347
          %s349 = smul.addr %s345, 128
          %s350 = scalar_lea.hbm %s0, %s349
          %s351 = sshll.u32 %s344, 4
          %s352 = int_to_ptr.vmem [resolvable:$true] %s351
          %357 = dma.hbm_to_vmem [thread:$0]  %s350, 2048, %s352, %s341, 2048, 1024, 64
        $region56: #{tpu_custom_call.1} parent=51 // pred_fallthru
          _
      $region52: #{tpu_custom_call.1} parent=5 // pred_fallthru
        _
      %p358 = scmp.le.s32.totalorder 1, %s24
      %p359 = scmp.lt.s32.totalorder %s24, 3
      %p360 = pnand %p358, %p359
      %p361 = pneg %p360
      // Predicated region
      $region57: #{tpu_custom_call.1} parent=5 // pred_check
        _
      $region58: #{tpu_custom_call.1} parent=5 // pred_check_branch
        %363 = sbr.rel (%p360) target = $region60
      $region59: #{tpu_custom_call.1} parent=5 // pred_region
        %s364 = ssub.s32 %s24, 1
        %s365 = sand.u32 %s37, 1
        %s366 = scalar_lea.sflag [#allocation3], %s365
        %s367 = sand.u32 %s37, 1
        %s368 = smul.addr %s367, 128
        %s369 = scalar_lea.vmem [#allocation2], %s368
        // Predicated region
        $region61: #{tpu_custom_call.1} parent=59 // pred_check
          %p370 = pneg %p50
        $region62: #{tpu_custom_call.1} parent=59 // pred_check_branch
          %372 = sbr.rel (%p370) target = $region64
        $region63: #{tpu_custom_call.1} parent=59 // pred_region
          %373 = dma.done %s366, 2048
        $region64: #{tpu_custom_call.1} parent=59 // pred_fallthru
          _
        // Predicated region
        $region65: #{tpu_custom_call.1} parent=59 // pred_check
          %p374 = pneg %p92
        $region66: #{tpu_custom_call.1} parent=59 // pred_check_branch
          %376 = sbr.rel (%p374) target = $region68
        $region67: #{tpu_custom_call.1} parent=59 // pred_region
          %377 = dma.done [#allocation6], 36864
        $region68: #{tpu_custom_call.1} parent=59 // pred_fallthru
          _
        // Predicated region
        $region69: #{tpu_custom_call.1} parent=59 // pred_check
          %p378 = pneg %p155
        $region70: #{tpu_custom_call.1} parent=59 // pred_check_branch
          %380 = sbr.rel (%p378) target = $region72
        $region71: #{tpu_custom_call.1} parent=59 // pred_region
          %381 = dma.done [#allocation6], 16
        $region72: #{tpu_custom_call.1} parent=59 // pred_fallthru
          _
        // Predicated region
        $region73: #{tpu_custom_call.1} parent=59 // pred_check
          %p382 = pneg %p218
        $region74: #{tpu_custom_call.1} parent=59 // pred_check_branch
          %384 = sbr.rel (%p382) target = $region76
        $region75: #{tpu_custom_call.1} parent=59 // pred_region
          %385 = dma.done [#allocation9], 64
        $region76: #{tpu_custom_call.1} parent=59 // pred_fallthru
          _
        %s386 = sand.u32 %s37, 1
        %s387 = scalar_lea.sflag [#allocation3], %s386
        %s388 = sand.u32 %s37, 1
        %s389 = smul.addr %s388, 128
        %s390 = scalar_lea.vmem [#allocation2], %s389
        %p391 = pneg %p50
        %p392 = pneg %p47
        %p393 = pneg %p71
        %p394 = pneg %p68
        %p395 = pneg %p92
        %p396 = pneg %p89
        %p397 = pneg %p113
        %p398 = pneg %p110
        %p399 = pneg %p134
        %p400 = pneg %p131
        %p401 = pneg %p155
        %p402 = pneg %p152
        %p403 = pneg %p176
        %p404 = pneg %p173
        %p405 = pneg %p197
        %p406 = pneg %p194
        %p407 = pneg %p218
        %p408 = pneg %p215
        %p409 = pneg %p239
        %p410 = pneg %p236
        %p411 = pneg %p265
        %p412 = pneg %p262
        %s413 = sand.u32 %s252, 1
        %s414 = scalar_lea.sflag [#allocation4], %s413
        %s415 = sand.u32 %s252, 1
        %s416 = smul.addr %s415, 64
        %s417 = scalar_lea.vmem [#allocation10], %s416
        %s418 = smul.u32 8, %s29
        %s419 = smul.u32 8, %s29
        %v421 = vld [vmem:[%s369] sm:$0xff]
        %v422 = vld [vmem:[%s369 + $0x8] sm:$0xff]
        %v423 = vld [vmem:[%s369 + $0x10] sm:$0xff]
        %v424 = vld [vmem:[%s369 + $0x18] sm:$0xff]
        %v425 = vld [vmem:[%s369 + $0x20] sm:$0xff]
        %v426 = vld [vmem:[%s369 + $0x28] sm:$0xff]
        %v427 = vld [vmem:[%s369 + $0x30] sm:$0xff]
        %v428 = vld [vmem:[%s369 + $0x38] sm:$0xff]
        %v429 = vld [vmem:[%s369 + $0x40] sm:$0x1]
        %v430 = vld [vmem:[%s369 + $0x48] sm:$0x1]
        %v431 = vld [vmem:[%s369 + $0x50] sm:$0x1]
        %v432 = vld [vmem:[%s369 + $0x58] sm:$0x1]
        %v433 = vld [vmem:[%s369 + $0x60] sm:$0x1]
        %v434 = vld [vmem:[%s369 + $0x68] sm:$0x1]
        %v435 = vld [vmem:[%s369 + $0x70] sm:$0x1]
        %v436 = vld [vmem:[%s369 + $0x78] sm:$0x1]
        %v437 = vld [vmem:[%s1] sm:$0xf]
        %v438 = vld [vmem:[%s1 + $0x4] sm:$0xf]
        %v439 = vld [vmem:[%s1 + $0x8] sm:$0xf]
        %v440 = vld [vmem:[%s1 + $0xc] sm:$0xf]
        %v441 = vpack.c.bf16 %v429, %v421
        %v442 = vpack.c.bf16 %v430, %v422
        %v443 = vpack.c.bf16 %v431, %v423
        %v444 = vpack.c.bf16 %v432, %v424
        %v445 = vpack.c.bf16 %v433, %v425
        %v446 = vpack.c.bf16 %v434, %v426
        %v447 = vpack.c.bf16 %v435, %v427
        %v448 = vpack.c.bf16 %v436, %v428
        %v453 = vunpack.c.l.b16 %v437
        %v454 = vunpack.c.l.b16 %v438
        %v455 = vunpack.c.l.b16 %v439
        %v456 = vunpack.c.l.b16 %v440
        %v457 = vpack.c.b16 %v454, %v453
        %v458 = vpack.c.b16 %v456, %v455
        %vm459 = vcmask 72704
        %v461 = vsel %vm459, %v457, 0
        %v464 = vsel %vm459, %v458, 0
        %vm466 = vcmask 1043456
        %vm467 = vcmask 1044480
        %v468 = vsel %vm466, 4294967295, 65535
        %v469 = vsel %vm467, %v468, 0
        %v471 = vand.u32 %v441, %v469
        %v474 = vand.u32 %v442, %v469
        %v477 = vand.u32 %v443, %v469
        %v480 = vand.u32 %v444, %v469
        %v483 = vand.u32 %v445, %v469
        %v486 = vand.u32 %v446, %v469
        %v489 = vand.u32 %v447, %v469
        %v492 = vand.u32 %v448, %v469
        %494 = vmatprep.subr.bf16.mxu0 %v474
        %495 = vmatpush1.bf16.msra.mxu0 %v471
        %496 = vmatprep.subr.bf16.mxu0 0
        %497 = vmatpush1.bf16.msra.mxu0 0
        %498 = vmatprep.subr.bf16.mxu0 0
        %499 = vmatpush1.bf16.msra.mxu0 0
        %500 = vmatprep.subr.bf16.mxu0 0
        %501 = vmatpush1.bf16.msra.mxu0 0
        %502 = vmatprep.subr.bf16.mxu0 0
        %503 = vmatpush1.bf16.msra.mxu0 0
        %504 = vmatprep.subr.bf16.mxu0 0
        %505 = vmatpush1.bf16.msra.mxu0 0
        %506 = vmatprep.subr.bf16.mxu0 0
        %507 = vmatpush1.bf16.msra.mxu0 0
        %508 = vmatprep.subr.bf16.mxu0 0
        %509 = vmatpush1.bf16.msra.mxu0 0
        %510 = vmatprep.subr.bf16.mxu0 0
        %511 = vmatpush1.bf16.msra.mxu0 0
        %512 = vmatprep.subr.bf16.mxu0 0
        %513 = vmatpush1.bf16.msra.mxu0 0
        %514 = vmatprep.subr.bf16.mxu0 0
        %515 = vmatpush1.bf16.msra.mxu0 0
        %516 = vmatprep.subr.bf16.mxu0 0
        %517 = vmatpush1.bf16.msra.mxu0 0
        %518 = vmatprep.subr.bf16.mxu0 0
        %519 = vmatpush1.bf16.msra.mxu0 0
        %520 = vmatprep.subr.bf16.mxu0 0
        %521 = vmatpush1.bf16.msra.mxu0 0
        %522 = vmatprep.subr.bf16.mxu0 0
        %523 = vmatpush1.bf16.msra.mxu0 0
        %524 = vmatprep.subr.bf16.mxu0 0
        %525 = vmatpush1.bf16.msra.mxu0 0
        %526 = vmatprep.mubr.bf16.mxu0 0
        %527 = vmatmul.mubr.bf16.gmra.mrb[0].mxu0 %v461
        %v528 = vpop.f32.mrb[0].mxu0
        %v529 = vadd.f32 0.0, %v528
        %v530 = vpop.f32.mrb[0].mxu0
        %v531 = vadd.f32 0.0, %v530
        %v532 = vpop.f32.mrb[0].mxu0
        %v533 = vadd.f32 0.0, %v532
        %v534 = vpop.f32.mrb[0].mxu0
        %v535 = vadd.f32 0.0, %v534
        %536 = vmatprep.mubr.bf16.mxu0 0
        %537 = vmatmul.mubr.bf16.gmra.mrb[0].mxu0 %v464
        %v538 = vpop.f32.mrb[0].mxu0
        %v539 = vadd.f32 0.0, %v538
        %v540 = vpop.f32.mrb[0].mxu0
        %v541 = vadd.f32 0.0, %v540
        %v542 = vpop.f32.mrb[0].mxu0
        %v543 = vadd.f32 0.0, %v542
        %v544 = vpop.f32.mrb[0].mxu0
        %v545 = vadd.f32 0.0, %v544
        %546 = vdwg.mxu0
        %547 = vmatprep.subr.bf16.mxu0 %v480
        %548 = vmatpush1.bf16.msra.mxu0 %v477
        %549 = vmatprep.subr.bf16.mxu0 0
        %550 = vmatpush1.bf16.msra.mxu0 0
        %551 = vmatprep.subr.bf16.mxu0 0
        %552 = vmatpush1.bf16.msra.mxu0 0
        %553 = vmatprep.subr.bf16.mxu0 0
        %554 = vmatpush1.bf16.msra.mxu0 0
        %555 = vmatprep.subr.bf16.mxu0 0
        %556 = vmatpush1.bf16.msra.mxu0 0
        %557 = vmatprep.subr.bf16.mxu0 0
        %558 = vmatpush1.bf16.msra.mxu0 0
        %559 = vmatprep.subr.bf16.mxu0 0
        %560 = vmatpush1.bf16.msra.mxu0 0
        %561 = vmatprep.subr.bf16.mxu0 0
        %562 = vmatpush1.bf16.msra.mxu0 0
        %563 = vmatprep.subr.bf16.mxu0 0
        %564 = vmatpush1.bf16.msra.mxu0 0
        %565 = vmatprep.subr.bf16.mxu0 0
        %566 = vmatpush1.bf16.msra.mxu0 0
        %567 = vmatprep.subr.bf16.mxu0 0
        %568 = vmatpush1.bf16.msra.mxu0 0
        %569 = vmatprep.subr.bf16.mxu0 0
        %570 = vmatpush1.bf16.msra.mxu0 0
        %571 = vmatprep.subr.bf16.mxu0 0
        %572 = vmatpush1.bf16.msra.mxu0 0
        %573 = vmatprep.subr.bf16.mxu0 0
        %574 = vmatpush1.bf16.msra.mxu0 0
        %575 = vmatprep.subr.bf16.mxu0 0
        %576 = vmatpush1.bf16.msra.mxu0 0
        %577 = vmatprep.subr.bf16.mxu0 0
        %578 = vmatpush1.bf16.msra.mxu0 0
        %579 = vmatprep.mubr.bf16.mxu0 0
        %580 = vmatmul.mubr.bf16.gmra.mrb[0].mxu0 %v461
        %v581 = vpop.f32.mrb[0].mxu0
        %v582 = vadd.f32 0.0, %v581
        %v583 = vpop.f32.mrb[0].mxu0
        %v584 = vadd.f32 0.0, %v583
        %v585 = vpop.f32.mrb[0].mxu0
        %v586 = vadd.f32 0.0, %v585
        %v587 = vpop.f32.mrb[0].mxu0
        %v588 = vadd.f32 0.0, %v587
        %589 = vmatprep.mubr.bf16.mxu0 0
        %590 = vmatmul.mubr.bf16.gmra.mrb[0].mxu0 %v464
        %v591 = vpop.f32.mrb[0].mxu0
        %v592 = vadd.f32 0.0, %v591
        %v593 = vpop.f32.mrb[0].mxu0
        %v594 = vadd.f32 0.0, %v593
        %v595 = vpop.f32.mrb[0].mxu0
        %v596 = vadd.f32 0.0, %v595
        %v597 = vpop.f32.mrb[0].mxu0
        %v598 = vadd.f32 0.0, %v597
        %599 = vdwg.mxu0
        %600 = vmatprep.subr.bf16.mxu0 %v486
        %601 = vmatpush1.bf16.msra.mxu0 %v483
        %602 = vmatprep.subr.bf16.mxu0 0
        %603 = vmatpush1.bf16.msra.mxu0 0
        %604 = vmatprep.subr.bf16.mxu0 0
        %605 = vmatpush1.bf16.msra.mxu0 0
        %606 = vmatprep.subr.bf16.mxu0 0
        %607 = vmatpush1.bf16.msra.mxu0 0
        %608 = vmatprep.subr.bf16.mxu0 0
        %609 = vmatpush1.bf16.msra.mxu0 0
        %610 = vmatprep.subr.bf16.mxu0 0
        %611 = vmatpush1.bf16.msra.mxu0 0
        %612 = vmatprep.subr.bf16.mxu0 0
        %613 = vmatpush1.bf16.msra.mxu0 0
        %614 = vmatprep.subr.bf16.mxu0 0
        %615 = vmatpush1.bf16.msra.mxu0 0
        %616 = vmatprep.subr.bf16.mxu0 0
        %617 = vmatpush1.bf16.msra.mxu0 0
        %618 = vmatprep.subr.bf16.mxu0 0
        %619 = vmatpush1.bf16.msra.mxu0 0
        %620 = vmatprep.subr.bf16.mxu0 0
        %621 = vmatpush1.bf16.msra.mxu0 0
        %622 = vmatprep.subr.bf16.mxu0 0
        %623 = vmatpush1.bf16.msra.mxu0 0
        %624 = vmatprep.subr.bf16.mxu0 0
        %625 = vmatpush1.bf16.msra.mxu0 0
        %626 = vmatprep.subr.bf16.mxu0 0
        %627 = vmatpush1.bf16.msra.mxu0 0
        %628 = vmatprep.subr.bf16.mxu0 0
        %629 = vmatpush1.bf16.msra.mxu0 0
        %630 = vmatprep.subr.bf16.mxu0 0
        %631 = vmatpush1.bf16.msra.mxu0 0
        %632 = vmatprep.mubr.bf16.mxu0 0
        %633 = vmatmul.mubr.bf16.gmra.mrb[0].mxu0 %v461
        %v634 = vpop.f32.mrb[0].mxu0
        %v635 = vadd.f32 0.0, %v634
        %v636 = vpop.f32.mrb[0].mxu0
        %v637 = vadd.f32 0.0, %v636
        %v638 = vpop.f32.mrb[0].mxu0
        %v639 = vadd.f32 0.0, %v638
        %v640 = vpop.f32.mrb[0].mxu0
        %v641 = vadd.f32 0.0, %v640
        %642 = vmatprep.mubr.bf16.mxu0 0
        %643 = vmatmul.mubr.bf16.gmra.mrb[0].mxu0 %v464
        %v644 = vpop.f32.mrb[0].mxu0
        %v645 = vadd.f32 0.0, %v644
        %v646 = vpop.f32.mrb[0].mxu0
        %v647 = vadd.f32 0.0, %v646
        %v648 = vpop.f32.mrb[0].mxu0
        %v649 = vadd.f32 0.0, %v648
        %v650 = vpop.f32.mrb[0].mxu0
        %v651 = vadd.f32 0.0, %v650
        %652 = vdwg.mxu0
        %653 = vmatprep.subr.bf16.mxu0 %v492
        %654 = vmatpush1.bf16.msra.mxu0 %v489
        %655 = vmatprep.subr.bf16.mxu0 0
        %656 = vmatpush1.bf16.msra.mxu0 0
        %657 = vmatprep.subr.bf16.mxu0 0
        %658 = vmatpush1.bf16.msra.mxu0 0
        %659 = vmatprep.subr.bf16.mxu0 0
        %660 = vmatpush1.bf16.msra.mxu0 0
        %661 = vmatprep.subr.bf16.mxu0 0
        %662 = vmatpush1.bf16.msra.mxu0 0
        %663 = vmatprep.subr.bf16.mxu0 0
        %664 = vmatpush1.bf16.msra.mxu0 0
        %665 = vmatprep.subr.bf16.mxu0 0
        %666 = vmatpush1.bf16.msra.mxu0 0
        %667 = vmatprep.subr.bf16.mxu0 0
        %668 = vmatpush1.bf16.msra.mxu0 0
        %669 = vmatprep.subr.bf16.mxu0 0
        %670 = vmatpush1.bf16.msra.mxu0 0
        %671 = vmatprep.subr.bf16.mxu0 0
        %672 = vmatpush1.bf16.msra.mxu0 0
        %673 = vmatprep.subr.bf16.mxu0 0
        %674 = vmatpush1.bf16.msra.mxu0 0
        %675 = vmatprep.subr.bf16.mxu0 0
        %676 = vmatpush1.bf16.msra.mxu0 0
        %677 = vmatprep.subr.bf16.mxu0 0
        %678 = vmatpush1.bf16.msra.mxu0 0
        %679 = vmatprep.subr.bf16.mxu0 0
        %680 = vmatpush1.bf16.msra.mxu0 0
        %681 = vmatprep.subr.bf16.mxu0 0
        %682 = vmatpush1.bf16.msra.mxu0 0
        %683 = vmatprep.subr.bf16.mxu0 0
        %684 = vmatpush1.bf16.msra.mxu0 0
        %685 = vmatprep.mubr.bf16.mxu0 0
        %686 = vmatmul.mubr.bf16.gmra.mrb[0].mxu0 %v461
        %v687 = vpop.f32.mrb[0].mxu0
        %v688 = vadd.f32 0.0, %v687
        %v689 = vpop.f32.mrb[0].mxu0
        %v690 = vadd.f32 0.0, %v689
        %v691 = vpop.f32.mrb[0].mxu0
        %v692 = vadd.f32 0.0, %v691
        %v693 = vpop.f32.mrb[0].mxu0
        %v694 = vadd.f32 0.0, %v693
        %695 = vmatprep.mubr.bf16.mxu0 0
        %696 = vmatmul.mubr.bf16.gmra.mrb[0].mxu0 %v464
        %v697 = vpop.f32.mrb[0].mxu0
        %v698 = vadd.f32 0.0, %v697
        %v699 = vpop.f32.mrb[0].mxu0
        %v700 = vadd.f32 0.0, %v699
        %v701 = vpop.f32.mrb[0].mxu0
        %v702 = vadd.f32 0.0, %v701
        %v703 = vpop.f32.mrb[0].mxu0
        %v704 = vadd.f32 0.0, %v703
        %705 = vdwg.mxu0
        %v706 = vxor.u32 %v529, 2147483648
        %v707 = vxor.u32 %v531, 2147483648
        %v708 = vxor.u32 %v582, 2147483648
        %v709 = vxor.u32 %v584, 2147483648
        %v710 = vxor.u32 %v635, 2147483648
        %v711 = vxor.u32 %v637, 2147483648
        %v712 = vxor.u32 %v688, 2147483648
        %v713 = vxor.u32 %v690, 2147483648
        %v714 = vxor.u32 %v533, 2147483648
        %v715 = vxor.u32 %v535, 2147483648
        %v716 = vxor.u32 %v586, 2147483648
        %v717 = vxor.u32 %v588, 2147483648
        %v718 = vxor.u32 %v639, 2147483648
        %v719 = vxor.u32 %v641, 2147483648
        %v720 = vxor.u32 %v692, 2147483648
        %v721 = vxor.u32 %v694, 2147483648
        %v722 = vxor.u32 %v539, 2147483648
        %v723 = vxor.u32 %v541, 2147483648
        %v724 = vxor.u32 %v592, 2147483648
        %v725 = vxor.u32 %v594, 2147483648
        %v726 = vxor.u32 %v645, 2147483648
        %v727 = vxor.u32 %v647, 2147483648
        %v728 = vxor.u32 %v698, 2147483648
        %v729 = vxor.u32 %v700, 2147483648
        %v730 = vxor.u32 %v543, 2147483648
        %v731 = vxor.u32 %v545, 2147483648
        %v732 = vxor.u32 %v596, 2147483648
        %v733 = vxor.u32 %v598, 2147483648
        %v734 = vxor.u32 %v649, 2147483648
        %v735 = vxor.u32 %v651, 2147483648
        %v736 = vxor.u32 %v702, 2147483648
        %v737 = vxor.u32 %v704, 2147483648
        %v738 = vmul.f32 %v706, 1.442695
        %v739 = vpow.pop %v738
        %v740 = vmul.f32 %v707, 1.442695
        %v741 = vpow.pop %v740
        %v742 = vmul.f32 %v708, 1.442695
        %v743 = vpow.pop %v742
        %v744 = vmul.f32 %v709, 1.442695
        %v745 = vpow.pop %v744
        %v746 = vmul.f32 %v710, 1.442695
        %v747 = vpow.pop %v746
        %v748 = vmul.f32 %v711, 1.442695
        %v749 = vpow.pop %v748
        %v750 = vmul.f32 %v712, 1.442695
        %v751 = vpow.pop %v750
        %v752 = vmul.f32 %v713, 1.442695
        %v753 = vpow.pop %v752
        %v754 = vmul.f32 %v714, 1.442695
        %v755 = vpow.pop %v754
        %v756 = vmul.f32 %v715, 1.442695
        %v757 = vpow.pop %v756
        %v758 = vmul.f32 %v716, 1.442695
        %v759 = vpow.pop %v758
        %v760 = vmul.f32 %v717, 1.442695
        %v761 = vpow.pop %v760
        %v762 = vmul.f32 %v718, 1.442695
        %v763 = vpow.pop %v762
        %v764 = vmul.f32 %v719, 1.442695
        %v765 = vpow.pop %v764
        %v766 = vmul.f32 %v720, 1.442695
        %v767 = vpow.pop %v766
        %v768 = vmul.f32 %v721, 1.442695
        %v769 = vpow.pop %v768
        %v770 = vmul.f32 %v722, 1.442695
        %v771 = vpow.pop %v770
        %v772 = vmul.f32 %v723, 1.442695
        %v773 = vpow.pop %v772
        %v774 = vmul.f32 %v724, 1.442695
        %v775 = vpow.pop %v774
        %v776 = vmul.f32 %v725, 1.442695
        %v777 = vpow.pop %v776
        %v778 = vmul.f32 %v726, 1.442695
        %v779 = vpow.pop %v778
        %v780 = vmul.f32 %v727, 1.442695
        %v781 = vpow.pop %v780
        %v782 = vmul.f32 %v728, 1.442695
        %v783 = vpow.pop %v782
        %v784 = vmul.f32 %v729, 1.442695
        %v785 = vpow.pop %v784
        %v786 = vmul.f32 %v730, 1.442695
        %v787 = vpow.pop %v786
        %v788 = vmul.f32 %v731, 1.442695
        %v789 = vpow.pop %v788
        %v790 = vmul.f32 %v732, 1.442695
        %v791 = vpow.pop %v790
        %v792 = vmul.f32 %v733, 1.442695
        %v793 = vpow.pop %v792
        %v794 = vmul.f32 %v734, 1.442695
        %v795 = vpow.pop %v794
        %v796 = vmul.f32 %v735, 1.442695
        %v797 = vpow.pop %v796
        %v798 = vmul.f32 %v736, 1.442695
        %v799 = vpow.pop %v798
        %v800 = vmul.f32 %v737, 1.442695
        %v801 = vpow.pop %v800
        %v802 = vadd.f32 %v739, 1.0
        %v803 = vadd.f32 %v741, 1.0
        %v804 = vadd.f32 %v743, 1.0
        %v805 = vadd.f32 %v745, 1.0
        %v806 = vadd.f32 %v747, 1.0
        %v807 = vadd.f32 %v749, 1.0
        %v808 = vadd.f32 %v751, 1.0
        %v809 = vadd.f32 %v753, 1.0
        %v810 = vadd.f32 %v755, 1.0
        %v811 = vadd.f32 %v757, 1.0
        %v812 = vadd.f32 %v759, 1.0
        %v813 = vadd.f32 %v761, 1.0
        %v814 = vadd.f32 %v763, 1.0
        %v815 = vadd.f32 %v765, 1.0
        %v816 = vadd.f32 %v767, 1.0
        %v817 = vadd.f32 %v769, 1.0
        %v818 = vadd.f32 %v771, 1.0
        %v819 = vadd.f32 %v773, 1.0
        %v820 = vadd.f32 %v775, 1.0
        %v821 = vadd.f32 %v777, 1.0
        %v822 = vadd.f32 %v779, 1.0
        %v823 = vadd.f32 %v781, 1.0
        %v824 = vadd.f32 %v783, 1.0
        %v825 = vadd.f32 %v785, 1.0
        %v826 = vadd.f32 %v787, 1.0
        %v827 = vadd.f32 %v789, 1.0
        %v828 = vadd.f32 %v791, 1.0
        %v829 = vadd.f32 %v793, 1.0
        %v830 = vadd.f32 %v795, 1.0
        %v831 = vadd.f32 %v797, 1.0
        %v832 = vadd.f32 %v799, 1.0
        %v833 = vadd.f32 %v801, 1.0
        %v834 = vrcp.pop %v802
        %v835 = vmul.f32 1.0, %v834
        %v836 = vrcp.pop %v803
        %v837 = vmul.f32 1.0, %v836
        %v838 = vrcp.pop %v804
        %v839 = vmul.f32 1.0, %v838
        %v840 = vrcp.pop %v805
        %v841 = vmul.f32 1.0, %v840
        %v842 = vrcp.pop %v806
        %v843 = vmul.f32 1.0, %v842
        %v844 = vrcp.pop %v807
        %v845 = vmul.f32 1.0, %v844
        %v846 = vrcp.pop %v808
        %v847 = vmul.f32 1.0, %v846
        %v848 = vrcp.pop %v809
        %v849 = vmul.f32 1.0, %v848
        %v850 = vrcp.pop %v810
        %v851 = vmul.f32 1.0, %v850
        %v852 = vrcp.pop %v811
        %v853 = vmul.f32 1.0, %v852
        %v854 = vrcp.pop %v812
        %v855 = vmul.f32 1.0, %v854
        %v856 = vrcp.pop %v813
        %v857 = vmul.f32 1.0, %v856
        %v858 = vrcp.pop %v814
        %v859 = vmul.f32 1.0, %v858
        %v860 = vrcp.pop %v815
        %v861 = vmul.f32 1.0, %v860
        %v862 = vrcp.pop %v816
        %v863 = vmul.f32 1.0, %v862
        %v864 = vrcp.pop %v817
        %v865 = vmul.f32 1.0, %v864
        %v866 = vrcp.pop %v818
        %v867 = vmul.f32 1.0, %v866
        %v868 = vrcp.pop %v819
        %v869 = vmul.f32 1.0, %v868
        %v870 = vrcp.pop %v820
        %v871 = vmul.f32 1.0, %v870
        %v872 = vrcp.pop %v821
        %v873 = vmul.f32 1.0, %v872
        %v874 = vrcp.pop %v822
        %v875 = vmul.f32 1.0, %v874
        %v876 = vrcp.pop %v823
        %v877 = vmul.f32 1.0, %v876
        %v878 = vrcp.pop %v824
        %v879 = vmul.f32 1.0, %v878
        %v880 = vrcp.pop %v825
        %v881 = vmul.f32 1.0, %v880
        %v882 = vrcp.pop %v826
        %v883 = vmul.f32 1.0, %v882
        %v884 = vrcp.pop %v827
        %v885 = vmul.f32 1.0, %v884
        %v886 = vrcp.pop %v828
        %v887 = vmul.f32 1.0, %v886
        %v888 = vrcp.pop %v829
        %v889 = vmul.f32 1.0, %v888
        %v890 = vrcp.pop %v830
        %v891 = vmul.f32 1.0, %v890
        %v892 = vrcp.pop %v831
        %v893 = vmul.f32 1.0, %v892
        %v894 = vrcp.pop %v832
        %v895 = vmul.f32 1.0, %v894
        %v896 = vrcp.pop %v833
        %v897 = vmul.f32 1.0, %v896
        %v898 = vmul.f32 %v529, %v835
        %v899 = vmul.f32 %v531, %v837
        %v900 = vmul.f32 %v582, %v839
        %v901 = vmul.f32 %v584, %v841
        %v902 = vmul.f32 %v635, %v843
        %v903 = vmul.f32 %v637, %v845
        %v904 = vmul.f32 %v688, %v847
        %v905 = vmul.f32 %v690, %v849
        %v906 = vmul.f32 %v533, %v851
        %v907 = vmul.f32 %v535, %v853
        %v908 = vmul.f32 %v586, %v855
        %v909 = vmul.f32 %v588, %v857
        %v910 = vmul.f32 %v639, %v859
        %v911 = vmul.f32 %v641, %v861
        %v912 = vmul.f32 %v692, %v863
        %v913 = vmul.f32 %v694, %v865
        %v914 = vmul.f32 %v539, %v867
        %v915 = vmul.f32 %v541, %v869
        %v916 = vmul.f32 %v592, %v871
        %v917 = vmul.f32 %v594, %v873
        %v918 = vmul.f32 %v645, %v875
        %v919 = vmul.f32 %v647, %v877
        %v920 = vmul.f32 %v698, %v879
        %v921 = vmul.f32 %v700, %v881
        %v922 = vmul.f32 %v543, %v883
        %v923 = vmul.f32 %v545, %v885
        %v924 = vmul.f32 %v596, %v887
        %v925 = vmul.f32 %v598, %v889
        %v926 = vmul.f32 %v649, %v891
        %v927 = vmul.f32 %v651, %v893
        %v928 = vmul.f32 %v702, %v895
        %v929 = vmul.f32 %v704, %v897
        %v930 = vld [vmem:[%s3] sm:$0xff]
        %v931 = vld [vmem:[%s3 + $0x8] sm:$0xff]
        %v932 = vld [vmem:[%s3 + $0x10] sm:$0xff]
        %v933 = vld [vmem:[%s3 + $0x18] sm:$0xff]
        %935 = vset.pattern.permute.xlu0 0
        %936 = vperm.xlu0 %935, %v930
        %v937 = vpop.permute.xlu0 %936
        %940 = vset.pattern.permute.xlu0 0
        %941 = vperm.xlu0 %940, %v931
        %v942 = vpop.permute.xlu0 %941
        %945 = vset.pattern.permute.xlu0 0
        %946 = vperm.xlu0 %945, %v932
        %v947 = vpop.permute.xlu0 %946
        %950 = vset.pattern.permute.xlu0 0
        %951 = vperm.xlu0 %950, %v933
        %v952 = vpop.permute.xlu0 %951
        %954 = vrot.lane.b32.xlu0 %v898, 17
        %v955 = vpop.permute.xlu0 %954
        %956 = vrot.lane.b32.xlu0 %v906, 17
        %v957 = vpop.permute.xlu0 %956
        %958 = vrot.lane.b32.xlu0 %v914, 17
        %v959 = vpop.permute.xlu0 %958
        %960 = vrot.lane.b32.xlu0 %v922, 17
        %v961 = vpop.permute.xlu0 %960
        %962 = vrot.lane.b32.xlu0 %v899, 17
        %v963 = vpop.permute.xlu0 %962
        %964 = vrot.lane.b32.xlu0 %v907, 17
        %v965 = vpop.permute.xlu0 %964
        %966 = vrot.lane.b32.xlu0 %v915, 17
        %v967 = vpop.permute.xlu0 %966
        %968 = vrot.lane.b32.xlu0 %v923, 17
        %v969 = vpop.permute.xlu0 %968
        %970 = vrot.lane.b32.xlu0 %v900, 17
        %v971 = vpop.permute.xlu0 %970
        %972 = vrot.lane.b32.xlu0 %v908, 17
        %v973 = vpop.permute.xlu0 %972
        %974 = vrot.lane.b32.xlu0 %v916, 17
        %v975 = vpop.permute.xlu0 %974
        %976 = vrot.lane.b32.xlu0 %v924, 17
        %v977 = vpop.permute.xlu0 %976
        %978 = vrot.lane.b32.xlu0 %v901, 17
        %v979 = vpop.permute.xlu0 %978
        %980 = vrot.lane.b32.xlu0 %v909, 17
        %v981 = vpop.permute.xlu0 %980
        %982 = vrot.lane.b32.xlu0 %v917, 17
        %v983 = vpop.permute.xlu0 %982
        %984 = vrot.lane.b32.xlu0 %v925, 17
        %v985 = vpop.permute.xlu0 %984
        %986 = vrot.lane.b32.xlu0 %v902, 17
        %v987 = vpop.permute.xlu0 %986
        %988 = vrot.lane.b32.xlu0 %v910, 17
        %v989 = vpop.permute.xlu0 %988
        %990 = vrot.lane.b32.xlu0 %v918, 17
        %v991 = vpop.permute.xlu0 %990
        %992 = vrot.lane.b32.xlu0 %v926, 17
        %v993 = vpop.permute.xlu0 %992
        %994 = vrot.lane.b32.xlu0 %v903, 17
        %v995 = vpop.permute.xlu0 %994
        %996 = vrot.lane.b32.xlu0 %v911, 17
        %v997 = vpop.permute.xlu0 %996
        %998 = vrot.lane.b32.xlu0 %v919, 17
        %v999 = vpop.permute.xlu0 %998
        %1000 = vrot.lane.b32.xlu0 %v927, 17
        %v1001 = vpop.permute.xlu0 %1000
        %1002 = vrot.lane.b32.xlu0 %v904, 17
        %v1003 = vpop.permute.xlu0 %1002
        %1004 = vrot.lane.b32.xlu0 %v912, 17
        %v1005 = vpop.permute.xlu0 %1004
        %1006 = vrot.lane.b32.xlu0 %v920, 17
        %v1007 = vpop.permute.xlu0 %1006
        %1008 = vrot.lane.b32.xlu0 %v928, 17
        %v1009 = vpop.permute.xlu0 %1008
        %1010 = vrot.lane.b32.xlu0 %v905, 17
        %v1011 = vpop.permute.xlu0 %1010
        %1012 = vrot.lane.b32.xlu0 %v913, 17
        %v1013 = vpop.permute.xlu0 %1012
        %1014 = vrot.lane.b32.xlu0 %v921, 17
        %v1015 = vpop.permute.xlu0 %1014
        %1016 = vrot.lane.b32.xlu0 %v929, 17
        %v1017 = vpop.permute.xlu0 %1016
        %v1018 = vlaneseq
        %v1019 = vand.u32 %v1018, 127
        %vm1020 = vcmp.lt.s32.totalorder %v1019, 17
        %v1021 = vsel %vm1020, %v1003, %v1011
        %v1022 = vsel %vm1020, %v1005, %v1013
        %v1023 = vsel %vm1020, %v1007, %v1015
        %v1024 = vsel %vm1020, %v1009, %v1017
        %v1025 = vsel %vm1020, %v995, %v1003
        %v1026 = vsel %vm1020, %v997, %v1005
        %v1027 = vsel %vm1020, %v999, %v1007
        %v1028 = vsel %vm1020, %v1001, %v1009
        %v1029 = vsel %vm1020, %v987, %v995
        %v1030 = vsel %vm1020, %v989, %v997
        %v1031 = vsel %vm1020, %v991, %v999
        %v1032 = vsel %vm1020, %v993, %v1001
        %v1033 = vsel %vm1020, %v979, %v987
        %v1034 = vsel %vm1020, %v981, %v989
        %v1035 = vsel %vm1020, %v983, %v991
        %v1036 = vsel %vm1020, %v985, %v993
        %v1037 = vsel %vm1020, %v971, %v979
        %v1038 = vsel %vm1020, %v973, %v981
        %v1039 = vsel %vm1020, %v975, %v983
        %v1040 = vsel %vm1020, %v977, %v985
        %v1041 = vsel %vm1020, %v963, %v971
        %v1042 = vsel %vm1020, %v965, %v973
        %v1043 = vsel %vm1020, %v967, %v975
        %v1044 = vsel %vm1020, %v969, %v977
        %v1045 = vsel %vm1020, %v955, %v963
        %v1046 = vsel %vm1020, %v957, %v965
        %v1047 = vsel %vm1020, %v959, %v967
        %v1048 = vsel %vm1020, %v961, %v969
        %v1049 = vsel %vm1020, %v1011, %v955
        %v1050 = vsel %vm1020, %v1013, %v957
        %v1051 = vsel %vm1020, %v1015, %v959
        %v1052 = vsel %vm1020, %v1017, %v961
        %v1053 = vld [vmem:[#allocation5] sm:$0xff]
        %v1054 = vld [vmem:[#allocation5 + $0x8] sm:$0xff]
        %v1055 = vld [vmem:[#allocation5 + $0x10] sm:$0xff]
        %v1056 = vld [vmem:[#allocation5 + $0x18] sm:$0xff]
        %v1057 = vld [vmem:[#allocation5 + $0x20] sm:$0xff]
        %v1058 = vld [vmem:[#allocation5 + $0x28] sm:$0xff]
        %v1059 = vld [vmem:[#allocation5 + $0x30] sm:$0xff]
        %v1060 = vld [vmem:[#allocation5 + $0x38] sm:$0xff]
        %v1061 = vld [vmem:[#allocation5 + $0x40] sm:$0xff]
        %v1062 = vld [vmem:[#allocation5 + $0x48] sm:$0xff]
        %v1063 = vld [vmem:[#allocation5 + $0x50] sm:$0xff]
        %v1064 = vld [vmem:[#allocation5 + $0x58] sm:$0xff]
        %v1065 = vld [vmem:[#allocation5 + $0x60] sm:$0xff]
        %v1066 = vld [vmem:[#allocation5 + $0x68] sm:$0xff]
        %v1067 = vld [vmem:[#allocation5 + $0x70] sm:$0xff]
        %v1068 = vld [vmem:[#allocation5 + $0x78] sm:$0xff]
        %v1069 = vld [vmem:[#allocation5 + $0x80] sm:$0xff]
        %v1070 = vld [vmem:[#allocation5 + $0x88] sm:$0xff]
        %v1071 = vld [vmem:[#allocation5 + $0x90] sm:$0xff]
        %v1072 = vld [vmem:[#allocation5 + $0x98] sm:$0xff]
        %v1073 = vld [vmem:[#allocation5 + $0xa0] sm:$0xff]
        %v1074 = vld [vmem:[#allocation5 + $0xa8] sm:$0xff]
        %v1075 = vld [vmem:[#allocation5 + $0xb0] sm:$0xff]
        %v1076 = vld [vmem:[#allocation5 + $0xb8] sm:$0xff]
        %v1077 = vld [vmem:[#allocation5 + $0xc0] sm:$0xff]
        %v1078 = vld [vmem:[#allocation5 + $0xc8] sm:$0xff]
        %v1079 = vld [vmem:[#allocation5 + $0xd0] sm:$0xff]
        %v1080 = vld [vmem:[#allocation5 + $0xd8] sm:$0xff]
        %v1081 = vld [vmem:[#allocation5 + $0xe0] sm:$0xff]
        %v1082 = vld [vmem:[#allocation5 + $0xe8] sm:$0xff]
        %v1083 = vld [vmem:[#allocation5 + $0xf0] sm:$0xff]
        %v1084 = vld [vmem:[#allocation5 + $0xf8] sm:$0xff]
        %v1085 = vmul.f32 %v1049, %v1053
        %v1086 = vmul.f32 %v1045, %v1054
        %v1087 = vmul.f32 %v1041, %v1055
        %v1088 = vmul.f32 %v1037, %v1056
        %v1089 = vmul.f32 %v1033, %v1057
        %v1090 = vmul.f32 %v1029, %v1058
        %v1091 = vmul.f32 %v1025, %v1059
        %v1092 = vmul.f32 %v1021, %v1060
        %v1093 = vmul.f32 %v1050, %v1061
        %v1094 = vmul.f32 %v1046, %v1062
        %v1095 = vmul.f32 %v1042, %v1063
        %v1096 = vmul.f32 %v1038, %v1064
        %v1097 = vmul.f32 %v1034, %v1065
        %v1098 = vmul.f32 %v1030, %v1066
        %v1099 = vmul.f32 %v1026, %v1067
        %v1100 = vmul.f32 %v1022, %v1068
        %v1101 = vmul.f32 %v1051, %v1069
        %v1102 = vmul.f32 %v1047, %v1070
        %v1103 = vmul.f32 %v1043, %v1071
        %v1104 = vmul.f32 %v1039, %v1072
        %v1105 = vmul.f32 %v1035, %v1073
        %v1106 = vmul.f32 %v1031, %v1074
        %v1107 = vmul.f32 %v1027, %v1075
        %v1108 = vmul.f32 %v1023, %v1076
        %v1109 = vmul.f32 %v1052, %v1077
        %v1110 = vmul.f32 %v1048, %v1078
        %v1111 = vmul.f32 %v1044, %v1079
        %v1112 = vmul.f32 %v1040, %v1080
        %v1113 = vmul.f32 %v1036, %v1081
        %v1114 = vmul.f32 %v1032, %v1082
        %v1115 = vmul.f32 %v1028, %v1083
        %v1116 = vmul.f32 %v1024, %v1084
        %v1117 = vadd.f32 %v937, %v1085
        %v1118 = vadd.f32 %v937, %v1086
        %v1119 = vadd.f32 %v937, %v1087
        %v1120 = vadd.f32 %v937, %v1088
        %v1121 = vadd.f32 %v937, %v1089
        %v1122 = vadd.f32 %v937, %v1090
        %v1123 = vadd.f32 %v937, %v1091
        %v1124 = vadd.f32 %v937, %v1092
        %v1125 = vadd.f32 %v942, %v1093
        %v1126 = vadd.f32 %v942, %v1094
        %v1127 = vadd.f32 %v942, %v1095
        %v1128 = vadd.f32 %v942, %v1096
        %v1129 = vadd.f32 %v942, %v1097
        %v1130 = vadd.f32 %v942, %v1098
        %v1131 = vadd.f32 %v942, %v1099
        %v1132 = vadd.f32 %v942, %v1100
        %v1133 = vadd.f32 %v947, %v1101
        %v1134 = vadd.f32 %v947, %v1102
        %v1135 = vadd.f32 %v947, %v1103
        %v1136 = vadd.f32 %v947, %v1104
        %v1137 = vadd.f32 %v947, %v1105
        %v1138 = vadd.f32 %v947, %v1106
        %v1139 = vadd.f32 %v947, %v1107
        %v1140 = vadd.f32 %v947, %v1108
        %v1141 = vadd.f32 %v952, %v1109
        %v1142 = vadd.f32 %v952, %v1110
        %v1143 = vadd.f32 %v952, %v1111
        %v1144 = vadd.f32 %v952, %v1112
        %v1145 = vadd.f32 %v952, %v1113
        %v1146 = vadd.f32 %v952, %v1114
        %v1147 = vadd.f32 %v952, %v1115
        %v1148 = vadd.f32 %v952, %v1116
        %1149 = vrot.lane.b32.xlu0 %v898, 16
        %v1150 = vpop.permute.xlu0 %1149
        %1151 = vrot.lane.b32.xlu0 %v906, 16
        %v1152 = vpop.permute.xlu0 %1151
        %1153 = vrot.lane.b32.xlu0 %v914, 16
        %v1154 = vpop.permute.xlu0 %1153
        %1155 = vrot.lane.b32.xlu0 %v922, 16
        %v1156 = vpop.permute.xlu0 %1155
        %1157 = vrot.lane.b32.xlu0 %v899, 16
        %v1158 = vpop.permute.xlu0 %1157
        %1159 = vrot.lane.b32.xlu0 %v907, 16
        %v1160 = vpop.permute.xlu0 %1159
        %1161 = vrot.lane.b32.xlu0 %v915, 16
        %v1162 = vpop.permute.xlu0 %1161
        %1163 = vrot.lane.b32.xlu0 %v923, 16
        %v1164 = vpop.permute.xlu0 %1163
        %1165 = vrot.lane.b32.xlu0 %v900, 16
        %v1166 = vpop.permute.xlu0 %1165
        %1167 = vrot.lane.b32.xlu0 %v908, 16
        %v1168 = vpop.permute.xlu0 %1167
        %1169 = vrot.lane.b32.xlu0 %v916, 16
        %v1170 = vpop.permute.xlu0 %1169
        %1171 = vrot.lane.b32.xlu0 %v924, 16
        %v1172 = vpop.permute.xlu0 %1171
        %1173 = vrot.lane.b32.xlu0 %v901, 16
        %v1174 = vpop.permute.xlu0 %1173
        %1175 = vrot.lane.b32.xlu0 %v909, 16
        %v1176 = vpop.permute.xlu0 %1175
        %1177 = vrot.lane.b32.xlu0 %v917, 16
        %v1178 = vpop.permute.xlu0 %1177
        %1179 = vrot.lane.b32.xlu0 %v925, 16
        %v1180 = vpop.permute.xlu0 %1179
        %1181 = vrot.lane.b32.xlu0 %v902, 16
        %v1182 = vpop.permute.xlu0 %1181
        %1183 = vrot.lane.b32.xlu0 %v910, 16
        %v1184 = vpop.permute.xlu0 %1183
        %1185 = vrot.lane.b32.xlu0 %v918, 16
        %v1186 = vpop.permute.xlu0 %1185
        %1187 = vrot.lane.b32.xlu0 %v926, 16
        %v1188 = vpop.permute.xlu0 %1187
        %1189 = vrot.lane.b32.xlu0 %v903, 16
        %v1190 = vpop.permute.xlu0 %1189
        %1191 = vrot.lane.b32.xlu0 %v911, 16
        %v1192 = vpop.permute.xlu0 %1191
        %1193 = vrot.lane.b32.xlu0 %v919, 16
        %v1194 = vpop.permute.xlu0 %1193
        %1195 = vrot.lane.b32.xlu0 %v927, 16
        %v1196 = vpop.permute.xlu0 %1195
        %1197 = vrot.lane.b32.xlu0 %v904, 16
        %v1198 = vpop.permute.xlu0 %1197
        %1199 = vrot.lane.b32.xlu0 %v912, 16
        %v1200 = vpop.permute.xlu0 %1199
        %1201 = vrot.lane.b32.xlu0 %v920, 16
        %v1202 = vpop.permute.xlu0 %1201
        %1203 = vrot.lane.b32.xlu0 %v928, 16
        %v1204 = vpop.permute.xlu0 %1203
        %1205 = vrot.lane.b32.xlu0 %v905, 16
        %v1206 = vpop.permute.xlu0 %1205
        %1207 = vrot.lane.b32.xlu0 %v913, 16
        %v1208 = vpop.permute.xlu0 %1207
        %1209 = vrot.lane.b32.xlu0 %v921, 16
        %v1210 = vpop.permute.xlu0 %1209
        %1211 = vrot.lane.b32.xlu0 %v929, 16
        %v1212 = vpop.permute.xlu0 %1211
        %vm1213 = vcmp.lt.s32.totalorder %v1019, 16
        %v1214 = vsel %vm1213, %v1198, %v1206
        %v1215 = vsel %vm1213, %v1200, %v1208
        %v1216 = vsel %vm1213, %v1202, %v1210
        %v1217 = vsel %vm1213, %v1204, %v1212
        %v1218 = vsel %vm1213, %v1190, %v1198
        %v1219 = vsel %vm1213, %v1192, %v1200
        %v1220 = vsel %vm1213, %v1194, %v1202
        %v1221 = vsel %vm1213, %v1196, %v1204
        %v1222 = vsel %vm1213, %v1182, %v1190
        %v1223 = vsel %vm1213, %v1184, %v1192
        %v1224 = vsel %vm1213, %v1186, %v1194
        %v1225 = vsel %vm1213, %v1188, %v1196
        %v1226 = vsel %vm1213, %v1174, %v1182
        %v1227 = vsel %vm1213, %v1176, %v1184
        %v1228 = vsel %vm1213, %v1178, %v1186
        %v1229 = vsel %vm1213, %v1180, %v1188
        %v1230 = vsel %vm1213, %v1166, %v1174
        %v1231 = vsel %vm1213, %v1168, %v1176
        %v1232 = vsel %vm1213, %v1170, %v1178
        %v1233 = vsel %vm1213, %v1172, %v1180
        %v1234 = vsel %vm1213, %v1158, %v1166
        %v1235 = vsel %vm1213, %v1160, %v1168
        %v1236 = vsel %vm1213, %v1162, %v1170
        %v1237 = vsel %vm1213, %v1164, %v1172
        %v1238 = vsel %vm1213, %v1150, %v1158
        %v1239 = vsel %vm1213, %v1152, %v1160
        %v1240 = vsel %vm1213, %v1154, %v1162
        %v1241 = vsel %vm1213, %v1156, %v1164
        %v1242 = vsel %vm1213, %v1206, %v1150
        %v1243 = vsel %vm1213, %v1208, %v1152
        %v1244 = vsel %vm1213, %v1210, %v1154
        %v1245 = vsel %vm1213, %v1212, %v1156
        %s1246 = scalar_lea.vmem [#allocation5], 256
        %v1247 = vld [vmem:[%s1246] sm:$0xff]
        %v1248 = vld [vmem:[%s1246 + $0x8] sm:$0xff]
        %v1249 = vld [vmem:[%s1246 + $0x10] sm:$0xff]
        %v1250 = vld [vmem:[%s1246 + $0x18] sm:$0xff]
        %v1251 = vld [vmem:[%s1246 + $0x20] sm:$0xff]
        %v1252 = vld [vmem:[%s1246 + $0x28] sm:$0xff]
        %v1253 = vld [vmem:[%s1246 + $0x30] sm:$0xff]
        %v1254 = vld [vmem:[%s1246 + $0x38] sm:$0xff]
        %v1255 = vld [vmem:[%s1246 + $0x40] sm:$0xff]
        %v1256 = vld [vmem:[%s1246 + $0x48] sm:$0xff]
        %v1257 = vld [vmem:[%s1246 + $0x50] sm:$0xff]
        %v1258 = vld [vmem:[%s1246 + $0x58] sm:$0xff]
        %v1259 = vld [vmem:[%s1246 + $0x60] sm:$0xff]
        %v1260 = vld [vmem:[%s1246 + $0x68] sm:$0xff]
        %v1261 = vld [vmem:[%s1246 + $0x70] sm:$0xff]
        %v1262 = vld [vmem:[%s1246 + $0x78] sm:$0xff]
        %v1263 = vld [vmem:[%s1246 + $0x80] sm:$0xff]
        %v1264 = vld [vmem:[%s1246 + $0x88] sm:$0xff]
        %v1265 = vld [vmem:[%s1246 + $0x90] sm:$0xff]
        %v1266 = vld [vmem:[%s1246 + $0x98] sm:$0xff]
        %v1267 = vld [vmem:[%s1246 + $0xa0] sm:$0xff]
        %v1268 = vld [vmem:[%s1246 + $0xa8] sm:$0xff]
        %v1269 = vld [vmem:[%s1246 + $0xb0] sm:$0xff]
        %v1270 = vld [vmem:[%s1246 + $0xb8] sm:$0xff]
        %v1271 = vld [vmem:[%s1246 + $0xc0] sm:$0xff]
        %v1272 = vld [vmem:[%s1246 + $0xc8] sm:$0xff]
        %v1273 = vld [vmem:[%s1246 + $0xd0] sm:$0xff]
        %v1274 = vld [vmem:[%s1246 + $0xd8] sm:$0xff]
        %v1275 = vld [vmem:[%s1246 + $0xe0] sm:$0xff]
        %v1276 = vld [vmem:[%s1246 + $0xe8] sm:$0xff]
        %v1277 = vld [vmem:[%s1246 + $0xf0] sm:$0xff]
        %v1278 = vld [vmem:[%s1246 + $0xf8] sm:$0xff]
        %v1279 = vmul.f32 %v1242, %v1247
        %v1280 = vmul.f32 %v1238, %v1248
        %v1281 = vmul.f32 %v1234, %v1249
        %v1282 = vmul.f32 %v1230, %v1250
        %v1283 = vmul.f32 %v1226, %v1251
        %v1284 = vmul.f32 %v1222, %v1252
        %v1285 = vmul.f32 %v1218, %v1253
        %v1286 = vmul.f32 %v1214, %v1254
        %v1287 = vmul.f32 %v1243, %v1255
        %v1288 = vmul.f32 %v1239, %v1256
        %v1289 = vmul.f32 %v1235, %v1257
        %v1290 = vmul.f32 %v1231, %v1258
        %v1291 = vmul.f32 %v1227, %v1259
        %v1292 = vmul.f32 %v1223, %v1260
        %v1293 = vmul.f32 %v1219, %v1261
        %v1294 = vmul.f32 %v1215, %v1262
        %v1295 = vmul.f32 %v1244, %v1263
        %v1296 = vmul.f32 %v1240, %v1264
        %v1297 = vmul.f32 %v1236, %v1265
        %v1298 = vmul.f32 %v1232, %v1266
        %v1299 = vmul.f32 %v1228, %v1267
        %v1300 = vmul.f32 %v1224, %v1268
        %v1301 = vmul.f32 %v1220, %v1269
        %v1302 = vmul.f32 %v1216, %v1270
        %v1303 = vmul.f32 %v1245, %v1271
        %v1304 = vmul.f32 %v1241, %v1272
        %v1305 = vmul.f32 %v1237, %v1273
        %v1306 = vmul.f32 %v1233, %v1274
        %v1307 = vmul.f32 %v1229, %v1275
        %v1308 = vmul.f32 %v1225, %v1276
        %v1309 = vmul.f32 %v1221, %v1277
        %v1310 = vmul.f32 %v1217, %v1278
        %v1311 = vadd.f32 %v1117, %v1279
        %v1312 = vadd.f32 %v1118, %v1280
        %v1313 = vadd.f32 %v1119, %v1281
        %v1314 = vadd.f32 %v1120, %v1282
        %v1315 = vadd.f32 %v1121, %v1283
        %v1316 = vadd.f32 %v1122, %v1284
        %v1317 = vadd.f32 %v1123, %v1285
        %v1318 = vadd.f32 %v1124, %v1286
        %v1319 = vadd.f32 %v1125, %v1287
        %v1320 = vadd.f32 %v1126, %v1288
        %v1321 = vadd.f32 %v1127, %v1289
        %v1322 = vadd.f32 %v1128, %v1290
        %v1323 = vadd.f32 %v1129, %v1291
        %v1324 = vadd.f32 %v1130, %v1292
        %v1325 = vadd.f32 %v1131, %v1293
        %v1326 = vadd.f32 %v1132, %v1294
        %v1327 = vadd.f32 %v1133, %v1295
        %v1328 = vadd.f32 %v1134, %v1296
        %v1329 = vadd.f32 %v1135, %v1297
        %v1330 = vadd.f32 %v1136, %v1298
        %v1331 = vadd.f32 %v1137, %v1299
        %v1332 = vadd.f32 %v1138, %v1300
        %v1333 = vadd.f32 %v1139, %v1301
        %v1334 = vadd.f32 %v1140, %v1302
        %v1335 = vadd.f32 %v1141, %v1303
        %v1336 = vadd.f32 %v1142, %v1304
        %v1337 = vadd.f32 %v1143, %v1305
        %v1338 = vadd.f32 %v1144, %v1306
        %v1339 = vadd.f32 %v1145, %v1307
        %v1340 = vadd.f32 %v1146, %v1308
        %v1341 = vadd.f32 %v1147, %v1309
        %v1342 = vadd.f32 %v1148, %v1310
        %1343 = vrot.lane.b32.xlu0 %v898, 15
        %v1344 = vpop.permute.xlu0 %1343
        %1345 = vrot.lane.b32.xlu0 %v906, 15
        %v1346 = vpop.permute.xlu0 %1345
        %1347 = vrot.lane.b32.xlu0 %v914, 15
        %v1348 = vpop.permute.xlu0 %1347
        %1349 = vrot.lane.b32.xlu0 %v922, 15
        %v1350 = vpop.permute.xlu0 %1349
        %1351 = vrot.lane.b32.xlu0 %v899, 15
        %v1352 = vpop.permute.xlu0 %1351
        %1353 = vrot.lane.b32.xlu0 %v907, 15
        %v1354 = vpop.permute.xlu0 %1353
        %1355 = vrot.lane.b32.xlu0 %v915, 15
        %v1356 = vpop.permute.xlu0 %1355
        %1357 = vrot.lane.b32.xlu0 %v923, 15
        %v1358 = vpop.permute.xlu0 %1357
        %1359 = vrot.lane.b32.xlu0 %v900, 15
        %v1360 = vpop.permute.xlu0 %1359
        %1361 = vrot.lane.b32.xlu0 %v908, 15
        %v1362 = vpop.permute.xlu0 %1361
        %1363 = vrot.lane.b32.xlu0 %v916, 15
        %v1364 = vpop.permute.xlu0 %1363
        %1365 = vrot.lane.b32.xlu0 %v924, 15
        %v1366 = vpop.permute.xlu0 %1365
        %1367 = vrot.lane.b32.xlu0 %v901, 15
        %v1368 = vpop.permute.xlu0 %1367
        %1369 = vrot.lane.b32.xlu0 %v909, 15
        %v1370 = vpop.permute.xlu0 %1369
        %1371 = vrot.lane.b32.xlu0 %v917, 15
        %v1372 = vpop.permute.xlu0 %1371
        %1373 = vrot.lane.b32.xlu0 %v925, 15
        %v1374 = vpop.permute.xlu0 %1373
        %1375 = vrot.lane.b32.xlu0 %v902, 15
        %v1376 = vpop.permute.xlu0 %1375
        %1377 = vrot.lane.b32.xlu0 %v910, 15
        %v1378 = vpop.permute.xlu0 %1377
        %1379 = vrot.lane.b32.xlu0 %v918, 15
        %v1380 = vpop.permute.xlu0 %1379
        %1381 = vrot.lane.b32.xlu0 %v926, 15
        %v1382 = vpop.permute.xlu0 %1381
        %1383 = vrot.lane.b32.xlu0 %v903, 15
        %v1384 = vpop.permute.xlu0 %1383
        %1385 = vrot.lane.b32.xlu0 %v911, 15
        %v1386 = vpop.permute.xlu0 %1385
        %1387 = vrot.lane.b32.xlu0 %v919, 15
        %v1388 = vpop.permute.xlu0 %1387
        %1389 = vrot.lane.b32.xlu0 %v927, 15
        %v1390 = vpop.permute.xlu0 %1389
        %1391 = vrot.lane.b32.xlu0 %v904, 15
        %v1392 = vpop.permute.xlu0 %1391
        %1393 = vrot.lane.b32.xlu0 %v912, 15
        %v1394 = vpop.permute.xlu0 %1393
        %1395 = vrot.lane.b32.xlu0 %v920, 15
        %v1396 = vpop.permute.xlu0 %1395
        %1397 = vrot.lane.b32.xlu0 %v928, 15
        %v1398 = vpop.permute.xlu0 %1397
        %1399 = vrot.lane.b32.xlu0 %v905, 15
        %v1400 = vpop.permute.xlu0 %1399
        %1401 = vrot.lane.b32.xlu0 %v913, 15
        %v1402 = vpop.permute.xlu0 %1401
        %1403 = vrot.lane.b32.xlu0 %v921, 15
        %v1404 = vpop.permute.xlu0 %1403
        %1405 = vrot.lane.b32.xlu0 %v929, 15
        %v1406 = vpop.permute.xlu0 %1405
        %vm1407 = vcmp.lt.s32.totalorder %v1019, 15
        %v1408 = vsel %vm1407, %v1392, %v1400
        %v1409 = vsel %vm1407, %v1394, %v1402
        %v1410 = vsel %vm1407, %v1396, %v1404
        %v1411 = vsel %vm1407, %v1398, %v1406
        %v1412 = vsel %vm1407, %v1384, %v1392
        %v1413 = vsel %vm1407, %v1386, %v1394
        %v1414 = vsel %vm1407, %v1388, %v1396
        %v1415 = vsel %vm1407, %v1390, %v1398
        %v1416 = vsel %vm1407, %v1376, %v1384
        %v1417 = vsel %vm1407, %v1378, %v1386
        %v1418 = vsel %vm1407, %v1380, %v1388
        %v1419 = vsel %vm1407, %v1382, %v1390
        %v1420 = vsel %vm1407, %v1368, %v1376
        %v1421 = vsel %vm1407, %v1370, %v1378
        %v1422 = vsel %vm1407, %v1372, %v1380
        %v1423 = vsel %vm1407, %v1374, %v1382
        %v1424 = vsel %vm1407, %v1360, %v1368
        %v1425 = vsel %vm1407, %v1362, %v1370
        %v1426 = vsel %vm1407, %v1364, %v1372
        %v1427 = vsel %vm1407, %v1366, %v1374
        %v1428 = vsel %vm1407, %v1352, %v1360
        %v1429 = vsel %vm1407, %v1354, %v1362
        %v1430 = vsel %vm1407, %v1356, %v1364
        %v1431 = vsel %vm1407, %v1358, %v1366
        %v1432 = vsel %vm1407, %v1344, %v1352
        %v1433 = vsel %vm1407, %v1346, %v1354
        %v1434 = vsel %vm1407, %v1348, %v1356
        %v1435 = vsel %vm1407, %v1350, %v1358
        %v1436 = vsel %vm1407, %v1400, %v1344
        %v1437 = vsel %vm1407, %v1402, %v1346
        %v1438 = vsel %vm1407, %v1404, %v1348
        %v1439 = vsel %vm1407, %v1406, %v1350
        %s1440 = scalar_lea.vmem [#allocation5], 512
        %v1441 = vld [vmem:[%s1440] sm:$0xff]
        %v1442 = vld [vmem:[%s1440 + $0x8] sm:$0xff]
        %v1443 = vld [vmem:[%s1440 + $0x10] sm:$0xff]
        %v1444 = vld [vmem:[%s1440 + $0x18] sm:$0xff]
        %v1445 = vld [vmem:[%s1440 + $0x20] sm:$0xff]
        %v1446 = vld [vmem:[%s1440 + $0x28] sm:$0xff]
        %v1447 = vld [vmem:[%s1440 + $0x30] sm:$0xff]
        %v1448 = vld [vmem:[%s1440 + $0x38] sm:$0xff]
        %v1449 = vld [vmem:[%s1440 + $0x40] sm:$0xff]
        %v1450 = vld [vmem:[%s1440 + $0x48] sm:$0xff]
        %v1451 = vld [vmem:[%s1440 + $0x50] sm:$0xff]
        %v1452 = vld [vmem:[%s1440 + $0x58] sm:$0xff]
        %v1453 = vld [vmem:[%s1440 + $0x60] sm:$0xff]
        %v1454 = vld [vmem:[%s1440 + $0x68] sm:$0xff]
        %v1455 = vld [vmem:[%s1440 + $0x70] sm:$0xff]
        %v1456 = vld [vmem:[%s1440 + $0x78] sm:$0xff]
        %v1457 = vld [vmem:[%s1440 + $0x80] sm:$0xff]
        %v1458 = vld [vmem:[%s1440 + $0x88] sm:$0xff]
        %v1459 = vld [vmem:[%s1440 + $0x90] sm:$0xff]
        %v1460 = vld [vmem:[%s1440 + $0x98] sm:$0xff]
        %v1461 = vld [vmem:[%s1440 + $0xa0] sm:$0xff]
        %v1462 = vld [vmem:[%s1440 + $0xa8] sm:$0xff]
        %v1463 = vld [vmem:[%s1440 + $0xb0] sm:$0xff]
        %v1464 = vld [vmem:[%s1440 + $0xb8] sm:$0xff]
        %v1465 = vld [vmem:[%s1440 + $0xc0] sm:$0xff]
        %v1466 = vld [vmem:[%s1440 + $0xc8] sm:$0xff]
        %v1467 = vld [vmem:[%s1440 + $0xd0] sm:$0xff]
        %v1468 = vld [vmem:[%s1440 + $0xd8] sm:$0xff]
        %v1469 = vld [vmem:[%s1440 + $0xe0] sm:$0xff]
        %v1470 = vld [vmem:[%s1440 + $0xe8] sm:$0xff]
        %v1471 = vld [vmem:[%s1440 + $0xf0] sm:$0xff]
        %v1472 = vld [vmem:[%s1440 + $0xf8] sm:$0xff]
        %v1473 = vmul.f32 %v1436, %v1441
        %v1474 = vmul.f32 %v1432, %v1442
        %v1475 = vmul.f32 %v1428, %v1443
        %v1476 = vmul.f32 %v1424, %v1444
        %v1477 = vmul.f32 %v1420, %v1445
        %v1478 = vmul.f32 %v1416, %v1446
        %v1479 = vmul.f32 %v1412, %v1447
        %v1480 = vmul.f32 %v1408, %v1448
        %v1481 = vmul.f32 %v1437, %v1449
        %v1482 = vmul.f32 %v1433, %v1450
        %v1483 = vmul.f32 %v1429, %v1451
        %v1484 = vmul.f32 %v1425, %v1452
        %v1485 = vmul.f32 %v1421, %v1453
        %v1486 = vmul.f32 %v1417, %v1454
        %v1487 = vmul.f32 %v1413, %v1455
        %v1488 = vmul.f32 %v1409, %v1456
        %v1489 = vmul.f32 %v1438, %v1457
        %v1490 = vmul.f32 %v1434, %v1458
        %v1491 = vmul.f32 %v1430, %v1459
        %v1492 = vmul.f32 %v1426, %v1460
        %v1493 = vmul.f32 %v1422, %v1461
        %v1494 = vmul.f32 %v1418, %v1462
        %v1495 = vmul.f32 %v1414, %v1463
        %v1496 = vmul.f32 %v1410, %v1464
        %v1497 = vmul.f32 %v1439, %v1465
        %v1498 = vmul.f32 %v1435, %v1466
        %v1499 = vmul.f32 %v1431, %v1467
        %v1500 = vmul.f32 %v1427, %v1468
        %v1501 = vmul.f32 %v1423, %v1469
        %v1502 = vmul.f32 %v1419, %v1470
        %v1503 = vmul.f32 %v1415, %v1471
        %v1504 = vmul.f32 %v1411, %v1472
        %v1505 = vadd.f32 %v1311, %v1473
        %v1506 = vadd.f32 %v1312, %v1474
        %v1507 = vadd.f32 %v1313, %v1475
        %v1508 = vadd.f32 %v1314, %v1476
        %v1509 = vadd.f32 %v1315, %v1477
        %v1510 = vadd.f32 %v1316, %v1478
        %v1511 = vadd.f32 %v1317, %v1479
        %v1512 = vadd.f32 %v1318, %v1480
        %v1513 = vadd.f32 %v1319, %v1481
        %v1514 = vadd.f32 %v1320, %v1482
        %v1515 = vadd.f32 %v1321, %v1483
        %v1516 = vadd.f32 %v1322, %v1484
        %v1517 = vadd.f32 %v1323, %v1485
        %v1518 = vadd.f32 %v1324, %v1486
        %v1519 = vadd.f32 %v1325, %v1487
        %v1520 = vadd.f32 %v1326, %v1488
        %v1521 = vadd.f32 %v1327, %v1489
        %v1522 = vadd.f32 %v1328, %v1490
        %v1523 = vadd.f32 %v1329, %v1491
        %v1524 = vadd.f32 %v1330, %v1492
        %v1525 = vadd.f32 %v1331, %v1493
        %v1526 = vadd.f32 %v1332, %v1494
        %v1527 = vadd.f32 %v1333, %v1495
        %v1528 = vadd.f32 %v1334, %v1496
        %v1529 = vadd.f32 %v1335, %v1497
        %v1530 = vadd.f32 %v1336, %v1498
        %v1531 = vadd.f32 %v1337, %v1499
        %v1532 = vadd.f32 %v1338, %v1500
        %v1533 = vadd.f32 %v1339, %v1501
        %v1534 = vadd.f32 %v1340, %v1502
        %v1535 = vadd.f32 %v1341, %v1503
        %v1536 = vadd.f32 %v1342, %v1504
        %1537 = vrot.lane.b32.xlu0 %v898, 1
        %v1538 = vpop.permute.xlu0 %1537
        %1539 = vrot.lane.b32.xlu0 %v906, 1
        %v1540 = vpop.permute.xlu0 %1539
        %1541 = vrot.lane.b32.xlu0 %v914, 1
        %v1542 = vpop.permute.xlu0 %1541
        %1543 = vrot.lane.b32.xlu0 %v922, 1
        %v1544 = vpop.permute.xlu0 %1543
        %1545 = vrot.lane.b32.xlu0 %v899, 1
        %v1546 = vpop.permute.xlu0 %1545
        %1547 = vrot.lane.b32.xlu0 %v907, 1
        %v1548 = vpop.permute.xlu0 %1547
        %1549 = vrot.lane.b32.xlu0 %v915, 1
        %v1550 = vpop.permute.xlu0 %1549
        %1551 = vrot.lane.b32.xlu0 %v923, 1
        %v1552 = vpop.permute.xlu0 %1551
        %1553 = vrot.lane.b32.xlu0 %v900, 1
        %v1554 = vpop.permute.xlu0 %1553
        %1555 = vrot.lane.b32.xlu0 %v908, 1
        %v1556 = vpop.permute.xlu0 %1555
        %1557 = vrot.lane.b32.xlu0 %v916, 1
        %v1558 = vpop.permute.xlu0 %1557
        %1559 = vrot.lane.b32.xlu0 %v924, 1
        %v1560 = vpop.permute.xlu0 %1559
        %1561 = vrot.lane.b32.xlu0 %v901, 1
        %v1562 = vpop.permute.xlu0 %1561
        %1563 = vrot.lane.b32.xlu0 %v909, 1
        %v1564 = vpop.permute.xlu0 %1563
        %1565 = vrot.lane.b32.xlu0 %v917, 1
        %v1566 = vpop.permute.xlu0 %1565
        %1567 = vrot.lane.b32.xlu0 %v925, 1
        %v1568 = vpop.permute.xlu0 %1567
        %1569 = vrot.lane.b32.xlu0 %v902, 1
        %v1570 = vpop.permute.xlu0 %1569
        %1571 = vrot.lane.b32.xlu0 %v910, 1
        %v1572 = vpop.permute.xlu0 %1571
        %1573 = vrot.lane.b32.xlu0 %v918, 1
        %v1574 = vpop.permute.xlu0 %1573
        %1575 = vrot.lane.b32.xlu0 %v926, 1
        %v1576 = vpop.permute.xlu0 %1575
        %1577 = vrot.lane.b32.xlu0 %v903, 1
        %v1578 = vpop.permute.xlu0 %1577
        %1579 = vrot.lane.b32.xlu0 %v911, 1
        %v1580 = vpop.permute.xlu0 %1579
        %1581 = vrot.lane.b32.xlu0 %v919, 1
        %v1582 = vpop.permute.xlu0 %1581
        %1583 = vrot.lane.b32.xlu0 %v927, 1
        %v1584 = vpop.permute.xlu0 %1583
        %1585 = vrot.lane.b32.xlu0 %v904, 1
        %v1586 = vpop.permute.xlu0 %1585
        %1587 = vrot.lane.b32.xlu0 %v912, 1
        %v1588 = vpop.permute.xlu0 %1587
        %1589 = vrot.lane.b32.xlu0 %v920, 1
        %v1590 = vpop.permute.xlu0 %1589
        %1591 = vrot.lane.b32.xlu0 %v928, 1
        %v1592 = vpop.permute.xlu0 %1591
        %1593 = vrot.lane.b32.xlu0 %v905, 1
        %v1594 = vpop.permute.xlu0 %1593
        %1595 = vrot.lane.b32.xlu0 %v913, 1
        %v1596 = vpop.permute.xlu0 %1595
        %1597 = vrot.lane.b32.xlu0 %v921, 1
        %v1598 = vpop.permute.xlu0 %1597
        %1599 = vrot.lane.b32.xlu0 %v929, 1
        %v1600 = vpop.permute.xlu0 %1599
        %vm1601 = vcmp.lt.s32.totalorder %v1019, 1
        %v1602 = vsel %vm1601, %v1586, %v1594
        %v1603 = vsel %vm1601, %v1588, %v1596
        %v1604 = vsel %vm1601, %v1590, %v1598
        %v1605 = vsel %vm1601, %v1592, %v1600
        %v1606 = vsel %vm1601, %v1578, %v1586
        %v1607 = vsel %vm1601, %v1580, %v1588
        %v1608 = vsel %vm1601, %v1582, %v1590
        %v1609 = vsel %vm1601, %v1584, %v1592
        %v1610 = vsel %vm1601, %v1570, %v1578
        %v1611 = vsel %vm1601, %v1572, %v1580
        %v1612 = vsel %vm1601, %v1574, %v1582
        %v1613 = vsel %vm1601, %v1576, %v1584
        %v1614 = vsel %vm1601, %v1562, %v1570
        %v1615 = vsel %vm1601, %v1564, %v1572
        %v1616 = vsel %vm1601, %v1566, %v1574
        %v1617 = vsel %vm1601, %v1568, %v1576
        %v1618 = vsel %vm1601, %v1554, %v1562
        %v1619 = vsel %vm1601, %v1556, %v1564
        %v1620 = vsel %vm1601, %v1558, %v1566
        %v1621 = vsel %vm1601, %v1560, %v1568
        %v1622 = vsel %vm1601, %v1546, %v1554
        %v1623 = vsel %vm1601, %v1548, %v1556
        %v1624 = vsel %vm1601, %v1550, %v1558
        %v1625 = vsel %vm1601, %v1552, %v1560
        %v1626 = vsel %vm1601, %v1538, %v1546
        %v1627 = vsel %vm1601, %v1540, %v1548
        %v1628 = vsel %vm1601, %v1542, %v1550
        %v1629 = vsel %vm1601, %v1544, %v1552
        %v1630 = vsel %vm1601, %v1594, %v1538
        %v1631 = vsel %vm1601, %v1596, %v1540
        %v1632 = vsel %vm1601, %v1598, %v1542
        %v1633 = vsel %vm1601, %v1600, %v1544
        %s1634 = scalar_lea.vmem [#allocation5], 768
        %v1635 = vld [vmem:[%s1634] sm:$0xff]
        %v1636 = vld [vmem:[%s1634 + $0x8] sm:$0xff]
        %v1637 = vld [vmem:[%s1634 + $0x10] sm:$0xff]
        %v1638 = vld [vmem:[%s1634 + $0x18] sm:$0xff]
        %v1639 = vld [vmem:[%s1634 + $0x20] sm:$0xff]
        %v1640 = vld [vmem:[%s1634 + $0x28] sm:$0xff]
        %v1641 = vld [vmem:[%s1634 + $0x30] sm:$0xff]
        %v1642 = vld [vmem:[%s1634 + $0x38] sm:$0xff]
        %v1643 = vld [vmem:[%s1634 + $0x40] sm:$0xff]
        %v1644 = vld [vmem:[%s1634 + $0x48] sm:$0xff]
        %v1645 = vld [vmem:[%s1634 + $0x50] sm:$0xff]
        %v1646 = vld [vmem:[%s1634 + $0x58] sm:$0xff]
        %v1647 = vld [vmem:[%s1634 + $0x60] sm:$0xff]
        %v1648 = vld [vmem:[%s1634 + $0x68] sm:$0xff]
        %v1649 = vld [vmem:[%s1634 + $0x70] sm:$0xff]
        %v1650 = vld [vmem:[%s1634 + $0x78] sm:$0xff]
        %v1651 = vld [vmem:[%s1634 + $0x80] sm:$0xff]
        %v1652 = vld [vmem:[%s1634 + $0x88] sm:$0xff]
        %v1653 = vld [vmem:[%s1634 + $0x90] sm:$0xff]
        %v1654 = vld [vmem:[%s1634 + $0x98] sm:$0xff]
        %v1655 = vld [vmem:[%s1634 + $0xa0] sm:$0xff]
        %v1656 = vld [vmem:[%s1634 + $0xa8] sm:$0xff]
        %v1657 = vld [vmem:[%s1634 + $0xb0] sm:$0xff]
        %v1658 = vld [vmem:[%s1634 + $0xb8] sm:$0xff]
        %v1659 = vld [vmem:[%s1634 + $0xc0] sm:$0xff]
        %v1660 = vld [vmem:[%s1634 + $0xc8] sm:$0xff]
        %v1661 = vld [vmem:[%s1634 + $0xd0] sm:$0xff]
        %v1662 = vld [vmem:[%s1634 + $0xd8] sm:$0xff]
        %v1663 = vld [vmem:[%s1634 + $0xe0] sm:$0xff]
        %v1664 = vld [vmem:[%s1634 + $0xe8] sm:$0xff]
        %v1665 = vld [vmem:[%s1634 + $0xf0] sm:$0xff]
        %v1666 = vld [vmem:[%s1634 + $0xf8] sm:$0xff]
        %v1667 = vmul.f32 %v1630, %v1635
        %v1668 = vmul.f32 %v1626, %v1636
        %v1669 = vmul.f32 %v1622, %v1637
        %v1670 = vmul.f32 %v1618, %v1638
        %v1671 = vmul.f32 %v1614, %v1639
        %v1672 = vmul.f32 %v1610, %v1640
        %v1673 = vmul.f32 %v1606, %v1641
        %v1674 = vmul.f32 %v1602, %v1642
        %v1675 = vmul.f32 %v1631, %v1643
        %v1676 = vmul.f32 %v1627, %v1644
        %v1677 = vmul.f32 %v1623, %v1645
        %v1678 = vmul.f32 %v1619, %v1646
        %v1679 = vmul.f32 %v1615, %v1647
        %v1680 = vmul.f32 %v1611, %v1648
        %v1681 = vmul.f32 %v1607, %v1649
        %v1682 = vmul.f32 %v1603, %v1650
        %v1683 = vmul.f32 %v1632, %v1651
        %v1684 = vmul.f32 %v1628, %v1652
        %v1685 = vmul.f32 %v1624, %v1653
        %v1686 = vmul.f32 %v1620, %v1654
        %v1687 = vmul.f32 %v1616, %v1655
        %v1688 = vmul.f32 %v1612, %v1656
        %v1689 = vmul.f32 %v1608, %v1657
        %v1690 = vmul.f32 %v1604, %v1658
        %v1691 = vmul.f32 %v1633, %v1659
        %v1692 = vmul.f32 %v1629, %v1660
        %v1693 = vmul.f32 %v1625, %v1661
        %v1694 = vmul.f32 %v1621, %v1662
        %v1695 = vmul.f32 %v1617, %v1663
        %v1696 = vmul.f32 %v1613, %v1664
        %v1697 = vmul.f32 %v1609, %v1665
        %v1698 = vmul.f32 %v1605, %v1666
        %v1699 = vadd.f32 %v1505, %v1667
        %v1700 = vadd.f32 %v1506, %v1668
        %v1701 = vadd.f32 %v1507, %v1669
        %v1702 = vadd.f32 %v1508, %v1670
        %v1703 = vadd.f32 %v1509, %v1671
        %v1704 = vadd.f32 %v1510, %v1672
        %v1705 = vadd.f32 %v1511, %v1673
        %v1706 = vadd.f32 %v1512, %v1674
        %v1707 = vadd.f32 %v1513, %v1675
        %v1708 = vadd.f32 %v1514, %v1676
        %v1709 = vadd.f32 %v1515, %v1677
        %v1710 = vadd.f32 %v1516, %v1678
        %v1711 = vadd.f32 %v1517, %v1679
        %v1712 = vadd.f32 %v1518, %v1680
        %v1713 = vadd.f32 %v1519, %v1681
        %v1714 = vadd.f32 %v1520, %v1682
        %v1715 = vadd.f32 %v1521, %v1683
        %v1716 = vadd.f32 %v1522, %v1684
        %v1717 = vadd.f32 %v1523, %v1685
        %v1718 = vadd.f32 %v1524, %v1686
        %v1719 = vadd.f32 %v1525, %v1687
        %v1720 = vadd.f32 %v1526, %v1688
        %v1721 = vadd.f32 %v1527, %v1689
        %v1722 = vadd.f32 %v1528, %v1690
        %v1723 = vadd.f32 %v1529, %v1691
        %v1724 = vadd.f32 %v1530, %v1692
        %v1725 = vadd.f32 %v1531, %v1693
        %v1726 = vadd.f32 %v1532, %v1694
        %v1727 = vadd.f32 %v1533, %v1695
        %v1728 = vadd.f32 %v1534, %v1696
        %v1729 = vadd.f32 %v1535, %v1697
        %v1730 = vadd.f32 %v1536, %v1698
        %s1731 = scalar_lea.vmem [#allocation5], 1024
        %v1732 = vld [vmem:[%s1731] sm:$0xff]
        %v1733 = vld [vmem:[%s1731 + $0x8] sm:$0xff]
        %v1734 = vld [vmem:[%s1731 + $0x10] sm:$0xff]
        %v1735 = vld [vmem:[%s1731 + $0x18] sm:$0xff]
        %v1736 = vld [vmem:[%s1731 + $0x20] sm:$0xff]
        %v1737 = vld [vmem:[%s1731 + $0x28] sm:$0xff]
        %v1738 = vld [vmem:[%s1731 + $0x30] sm:$0xff]
        %v1739 = vld [vmem:[%s1731 + $0x38] sm:$0xff]
        %v1740 = vld [vmem:[%s1731 + $0x40] sm:$0xff]
        %v1741 = vld [vmem:[%s1731 + $0x48] sm:$0xff]
        %v1742 = vld [vmem:[%s1731 + $0x50] sm:$0xff]
        %v1743 = vld [vmem:[%s1731 + $0x58] sm:$0xff]
        %v1744 = vld [vmem:[%s1731 + $0x60] sm:$0xff]
        %v1745 = vld [vmem:[%s1731 + $0x68] sm:$0xff]
        %v1746 = vld [vmem:[%s1731 + $0x70] sm:$0xff]
        %v1747 = vld [vmem:[%s1731 + $0x78] sm:$0xff]
        %v1748 = vld [vmem:[%s1731 + $0x80] sm:$0xff]
        %v1749 = vld [vmem:[%s1731 + $0x88] sm:$0xff]
        %v1750 = vld [vmem:[%s1731 + $0x90] sm:$0xff]
        %v1751 = vld [vmem:[%s1731 + $0x98] sm:$0xff]
        %v1752 = vld [vmem:[%s1731 + $0xa0] sm:$0xff]
        %v1753 = vld [vmem:[%s1731 + $0xa8] sm:$0xff]
        %v1754 = vld [vmem:[%s1731 + $0xb0] sm:$0xff]
        %v1755 = vld [vmem:[%s1731 + $0xb8] sm:$0xff]
        %v1756 = vld [vmem:[%s1731 + $0xc0] sm:$0xff]
        %v1757 = vld [vmem:[%s1731 + $0xc8] sm:$0xff]
        %v1758 = vld [vmem:[%s1731 + $0xd0] sm:$0xff]
        %v1759 = vld [vmem:[%s1731 + $0xd8] sm:$0xff]
        %v1760 = vld [vmem:[%s1731 + $0xe0] sm:$0xff]
        %v1761 = vld [vmem:[%s1731 + $0xe8] sm:$0xff]
        %v1762 = vld [vmem:[%s1731 + $0xf0] sm:$0xff]
        %v1763 = vld [vmem:[%s1731 + $0xf8] sm:$0xff]
        %v1764 = vmul.f32 %v898, %v1732
        %v1765 = vmul.f32 %v899, %v1733
        %v1766 = vmul.f32 %v900, %v1734
        %v1767 = vmul.f32 %v901, %v1735
        %v1768 = vmul.f32 %v902, %v1736
        %v1769 = vmul.f32 %v903, %v1737
        %v1770 = vmul.f32 %v904, %v1738
        %v1771 = vmul.f32 %v905, %v1739
        %v1772 = vmul.f32 %v906, %v1740
        %v1773 = vmul.f32 %v907, %v1741
        %v1774 = vmul.f32 %v908, %v1742
        %v1775 = vmul.f32 %v909, %v1743
        %v1776 = vmul.f32 %v910, %v1744
        %v1777 = vmul.f32 %v911, %v1745
        %v1778 = vmul.f32 %v912, %v1746
        %v1779 = vmul.f32 %v913, %v1747
        %v1780 = vmul.f32 %v914, %v1748
        %v1781 = vmul.f32 %v915, %v1749
        %v1782 = vmul.f32 %v916, %v1750
        %v1783 = vmul.f32 %v917, %v1751
        %v1784 = vmul.f32 %v918, %v1752
        %v1785 = vmul.f32 %v919, %v1753
        %v1786 = vmul.f32 %v920, %v1754
        %v1787 = vmul.f32 %v921, %v1755
        %v1788 = vmul.f32 %v922, %v1756
        %v1789 = vmul.f32 %v923, %v1757
        %v1790 = vmul.f32 %v924, %v1758
        %v1791 = vmul.f32 %v925, %v1759
        %v1792 = vmul.f32 %v926, %v1760
        %v1793 = vmul.f32 %v927, %v1761
        %v1794 = vmul.f32 %v928, %v1762
        %v1795 = vmul.f32 %v929, %v1763
        %v1796 = vadd.f32 %v1699, %v1764
        %v1797 = vadd.f32 %v1700, %v1765
        %v1798 = vadd.f32 %v1701, %v1766
        %v1799 = vadd.f32 %v1702, %v1767
        %v1800 = vadd.f32 %v1703, %v1768
        %v1801 = vadd.f32 %v1704, %v1769
        %v1802 = vadd.f32 %v1705, %v1770
        %v1803 = vadd.f32 %v1706, %v1771
        %v1804 = vadd.f32 %v1707, %v1772
        %v1805 = vadd.f32 %v1708, %v1773
        %v1806 = vadd.f32 %v1709, %v1774
        %v1807 = vadd.f32 %v1710, %v1775
        %v1808 = vadd.f32 %v1711, %v1776
        %v1809 = vadd.f32 %v1712, %v1777
        %v1810 = vadd.f32 %v1713, %v1778
        %v1811 = vadd.f32 %v1714, %v1779
        %v1812 = vadd.f32 %v1715, %v1780
        %v1813 = vadd.f32 %v1716, %v1781
        %v1814 = vadd.f32 %v1717, %v1782
        %v1815 = vadd.f32 %v1718, %v1783
        %v1816 = vadd.f32 %v1719, %v1784
        %v1817 = vadd.f32 %v1720, %v1785
        %v1818 = vadd.f32 %v1721, %v1786
        %v1819 = vadd.f32 %v1722, %v1787
        %v1820 = vadd.f32 %v1723, %v1788
        %v1821 = vadd.f32 %v1724, %v1789
        %v1822 = vadd.f32 %v1725, %v1790
        %v1823 = vadd.f32 %v1726, %v1791
        %v1824 = vadd.f32 %v1727, %v1792
        %v1825 = vadd.f32 %v1728, %v1793
        %v1826 = vadd.f32 %v1729, %v1794
        %v1827 = vadd.f32 %v1730, %v1795
        %1828 = vrot.lane.b32.xlu0 %v898, 127
        %v1829 = vpop.permute.xlu0 %1828
        %1830 = vrot.lane.b32.xlu0 %v906, 127
        %v1831 = vpop.permute.xlu0 %1830
        %1832 = vrot.lane.b32.xlu0 %v914, 127
        %v1833 = vpop.permute.xlu0 %1832
        %1834 = vrot.lane.b32.xlu0 %v922, 127
        %v1835 = vpop.permute.xlu0 %1834
        %1836 = vrot.lane.b32.xlu0 %v899, 127
        %v1837 = vpop.permute.xlu0 %1836
        %1838 = vrot.lane.b32.xlu0 %v907, 127
        %v1839 = vpop.permute.xlu0 %1838
        %1840 = vrot.lane.b32.xlu0 %v915, 127
        %v1841 = vpop.permute.xlu0 %1840
        %1842 = vrot.lane.b32.xlu0 %v923, 127
        %v1843 = vpop.permute.xlu0 %1842
        %1844 = vrot.lane.b32.xlu0 %v900, 127
        %v1845 = vpop.permute.xlu0 %1844
        %1846 = vrot.lane.b32.xlu0 %v908, 127
        %v1847 = vpop.permute.xlu0 %1846
        %1848 = vrot.lane.b32.xlu0 %v916, 127
        %v1849 = vpop.permute.xlu0 %1848
        %1850 = vrot.lane.b32.xlu0 %v924, 127
        %v1851 = vpop.permute.xlu0 %1850
        %1852 = vrot.lane.b32.xlu0 %v901, 127
        %v1853 = vpop.permute.xlu0 %1852
        %1854 = vrot.lane.b32.xlu0 %v909, 127
        %v1855 = vpop.permute.xlu0 %1854
        %1856 = vrot.lane.b32.xlu0 %v917, 127
        %v1857 = vpop.permute.xlu0 %1856
        %1858 = vrot.lane.b32.xlu0 %v925, 127
        %v1859 = vpop.permute.xlu0 %1858
        %1860 = vrot.lane.b32.xlu0 %v902, 127
        %v1861 = vpop.permute.xlu0 %1860
        %1862 = vrot.lane.b32.xlu0 %v910, 127
        %v1863 = vpop.permute.xlu0 %1862
        %1864 = vrot.lane.b32.xlu0 %v918, 127
        %v1865 = vpop.permute.xlu0 %1864
        %1866 = vrot.lane.b32.xlu0 %v926, 127
        %v1867 = vpop.permute.xlu0 %1866
        %1868 = vrot.lane.b32.xlu0 %v903, 127
        %v1869 = vpop.permute.xlu0 %1868
        %1870 = vrot.lane.b32.xlu0 %v911, 127
        %v1871 = vpop.permute.xlu0 %1870
        %1872 = vrot.lane.b32.xlu0 %v919, 127
        %v1873 = vpop.permute.xlu0 %1872
        %1874 = vrot.lane.b32.xlu0 %v927, 127
        %v1875 = vpop.permute.xlu0 %1874
        %1876 = vrot.lane.b32.xlu0 %v904, 127
        %v1877 = vpop.permute.xlu0 %1876
        %1878 = vrot.lane.b32.xlu0 %v912, 127
        %v1879 = vpop.permute.xlu0 %1878
        %1880 = vrot.lane.b32.xlu0 %v920, 127
        %v1881 = vpop.permute.xlu0 %1880
        %1882 = vrot.lane.b32.xlu0 %v928, 127
        %v1883 = vpop.permute.xlu0 %1882
        %1884 = vrot.lane.b32.xlu0 %v905, 127
        %v1885 = vpop.permute.xlu0 %1884
        %1886 = vrot.lane.b32.xlu0 %v913, 127
        %v1887 = vpop.permute.xlu0 %1886
        %1888 = vrot.lane.b32.xlu0 %v921, 127
        %v1889 = vpop.permute.xlu0 %1888
        %1890 = vrot.lane.b32.xlu0 %v929, 127
        %v1891 = vpop.permute.xlu0 %1890
        %vm1892 = vcmp.lt.s32.totalorder %v1019, 127
        %v1893 = vsel %vm1892, %v1877, %v1885
        %v1894 = vsel %vm1892, %v1879, %v1887
        %v1895 = vsel %vm1892, %v1881, %v1889
        %v1896 = vsel %vm1892, %v1883, %v1891
        %v1897 = vsel %vm1892, %v1869, %v1877
        %v1898 = vsel %vm1892, %v1871, %v1879
        %v1899 = vsel %vm1892, %v1873, %v1881
        %v1900 = vsel %vm1892, %v1875, %v1883
        %v1901 = vsel %vm1892, %v1861, %v1869
        %v1902 = vsel %vm1892, %v1863, %v1871
        %v1903 = vsel %vm1892, %v1865, %v1873
        %v1904 = vsel %vm1892, %v1867, %v1875
        %v1905 = vsel %vm1892, %v1853, %v1861
        %v1906 = vsel %vm1892, %v1855, %v1863
        %v1907 = vsel %vm1892, %v1857, %v1865
        %v1908 = vsel %vm1892, %v1859, %v1867
        %v1909 = vsel %vm1892, %v1845, %v1853
        %v1910 = vsel %vm1892, %v1847, %v1855
        %v1911 = vsel %vm1892, %v1849, %v1857
        %v1912 = vsel %vm1892, %v1851, %v1859
        %v1913 = vsel %vm1892, %v1837, %v1845
        %v1914 = vsel %vm1892, %v1839, %v1847
        %v1915 = vsel %vm1892, %v1841, %v1849
        %v1916 = vsel %vm1892, %v1843, %v1851
        %v1917 = vsel %vm1892, %v1829, %v1837
        %v1918 = vsel %vm1892, %v1831, %v1839
        %v1919 = vsel %vm1892, %v1833, %v1841
        %v1920 = vsel %vm1892, %v1835, %v1843
        %v1921 = vsel %vm1892, %v1885, %v1829
        %v1922 = vsel %vm1892, %v1887, %v1831
        %v1923 = vsel %vm1892, %v1889, %v1833
        %v1924 = vsel %vm1892, %v1891, %v1835
        %s1925 = scalar_lea.vmem [#allocation5], 1280
        %v1926 = vld [vmem:[%s1925] sm:$0xff]
        %v1927 = vld [vmem:[%s1925 + $0x8] sm:$0xff]
        %v1928 = vld [vmem:[%s1925 + $0x10] sm:$0xff]
        %v1929 = vld [vmem:[%s1925 + $0x18] sm:$0xff]
        %v1930 = vld [vmem:[%s1925 + $0x20] sm:$0xff]
        %v1931 = vld [vmem:[%s1925 + $0x28] sm:$0xff]
        %v1932 = vld [vmem:[%s1925 + $0x30] sm:$0xff]
        %v1933 = vld [vmem:[%s1925 + $0x38] sm:$0xff]
        %v1934 = vld [vmem:[%s1925 + $0x40] sm:$0xff]
        %v1935 = vld [vmem:[%s1925 + $0x48] sm:$0xff]
        %v1936 = vld [vmem:[%s1925 + $0x50] sm:$0xff]
        %v1937 = vld [vmem:[%s1925 + $0x58] sm:$0xff]
        %v1938 = vld [vmem:[%s1925 + $0x60] sm:$0xff]
        %v1939 = vld [vmem:[%s1925 + $0x68] sm:$0xff]
        %v1940 = vld [vmem:[%s1925 + $0x70] sm:$0xff]
        %v1941 = vld [vmem:[%s1925 + $0x78] sm:$0xff]
        %v1942 = vld [vmem:[%s1925 + $0x80] sm:$0xff]
        %v1943 = vld [vmem:[%s1925 + $0x88] sm:$0xff]
        %v1944 = vld [vmem:[%s1925 + $0x90] sm:$0xff]
        %v1945 = vld [vmem:[%s1925 + $0x98] sm:$0xff]
        %v1946 = vld [vmem:[%s1925 + $0xa0] sm:$0xff]
        %v1947 = vld [vmem:[%s1925 + $0xa8] sm:$0xff]
        %v1948 = vld [vmem:[%s1925 + $0xb0] sm:$0xff]
        %v1949 = vld [vmem:[%s1925 + $0xb8] sm:$0xff]
        %v1950 = vld [vmem:[%s1925 + $0xc0] sm:$0xff]
        %v1951 = vld [vmem:[%s1925 + $0xc8] sm:$0xff]
        %v1952 = vld [vmem:[%s1925 + $0xd0] sm:$0xff]
        %v1953 = vld [vmem:[%s1925 + $0xd8] sm:$0xff]
        %v1954 = vld [vmem:[%s1925 + $0xe0] sm:$0xff]
        %v1955 = vld [vmem:[%s1925 + $0xe8] sm:$0xff]
        %v1956 = vld [vmem:[%s1925 + $0xf0] sm:$0xff]
        %v1957 = vld [vmem:[%s1925 + $0xf8] sm:$0xff]
        %v1958 = vmul.f32 %v1917, %v1926
        %v1959 = vmul.f32 %v1913, %v1927
        %v1960 = vmul.f32 %v1909, %v1928
        %v1961 = vmul.f32 %v1905, %v1929
        %v1962 = vmul.f32 %v1901, %v1930
        %v1963 = vmul.f32 %v1897, %v1931
        %v1964 = vmul.f32 %v1893, %v1932
        %v1965 = vmul.f32 %v1921, %v1933
        %v1966 = vmul.f32 %v1918, %v1934
        %v1967 = vmul.f32 %v1914, %v1935
        %v1968 = vmul.f32 %v1910, %v1936
        %v1969 = vmul.f32 %v1906, %v1937
        %v1970 = vmul.f32 %v1902, %v1938
        %v1971 = vmul.f32 %v1898, %v1939
        %v1972 = vmul.f32 %v1894, %v1940
        %v1973 = vmul.f32 %v1922, %v1941
        %v1974 = vmul.f32 %v1919, %v1942
        %v1975 = vmul.f32 %v1915, %v1943
        %v1976 = vmul.f32 %v1911, %v1944
        %v1977 = vmul.f32 %v1907, %v1945
        %v1978 = vmul.f32 %v1903, %v1946
        %v1979 = vmul.f32 %v1899, %v1947
        %v1980 = vmul.f32 %v1895, %v1948
        %v1981 = vmul.f32 %v1923, %v1949
        %v1982 = vmul.f32 %v1920, %v1950
        %v1983 = vmul.f32 %v1916, %v1951
        %v1984 = vmul.f32 %v1912, %v1952
        %v1985 = vmul.f32 %v1908, %v1953
        %v1986 = vmul.f32 %v1904, %v1954
        %v1987 = vmul.f32 %v1900, %v1955
        %v1988 = vmul.f32 %v1896, %v1956
        %v1989 = vmul.f32 %v1924, %v1957
        %v1990 = vadd.f32 %v1796, %v1958
        %v1991 = vadd.f32 %v1797, %v1959
        %v1992 = vadd.f32 %v1798, %v1960
        %v1993 = vadd.f32 %v1799, %v1961
        %v1994 = vadd.f32 %v1800, %v1962
        %v1995 = vadd.f32 %v1801, %v1963
        %v1996 = vadd.f32 %v1802, %v1964
        %v1997 = vadd.f32 %v1803, %v1965
        %v1998 = vadd.f32 %v1804, %v1966
        %v1999 = vadd.f32 %v1805, %v1967
        %v2000 = vadd.f32 %v1806, %v1968
        %v2001 = vadd.f32 %v1807, %v1969
        %v2002 = vadd.f32 %v1808, %v1970
        %v2003 = vadd.f32 %v1809, %v1971
        %v2004 = vadd.f32 %v1810, %v1972
        %v2005 = vadd.f32 %v1811, %v1973
        %v2006 = vadd.f32 %v1812, %v1974
        %v2007 = vadd.f32 %v1813, %v1975
        %v2008 = vadd.f32 %v1814, %v1976
        %v2009 = vadd.f32 %v1815, %v1977
        %v2010 = vadd.f32 %v1816, %v1978
        %v2011 = vadd.f32 %v1817, %v1979
        %v2012 = vadd.f32 %v1818, %v1980
        %v2013 = vadd.f32 %v1819, %v1981
        %v2014 = vadd.f32 %v1820, %v1982
        %v2015 = vadd.f32 %v1821, %v1983
        %v2016 = vadd.f32 %v1822, %v1984
        %v2017 = vadd.f32 %v1823, %v1985
        %v2018 = vadd.f32 %v1824, %v1986
        %v2019 = vadd.f32 %v1825, %v1987
        %v2020 = vadd.f32 %v1826, %v1988
        %v2021 = vadd.f32 %v1827, %v1989
        %2022 = vrot.lane.b32.xlu0 %v898, 113
        %v2023 = vpop.permute.xlu0 %2022
        %2024 = vrot.lane.b32.xlu0 %v906, 113
        %v2025 = vpop.permute.xlu0 %2024
        %2026 = vrot.lane.b32.xlu0 %v914, 113
        %v2027 = vpop.permute.xlu0 %2026
        %2028 = vrot.lane.b32.xlu0 %v922, 113
        %v2029 = vpop.permute.xlu0 %2028
        %2030 = vrot.lane.b32.xlu0 %v899, 113
        %v2031 = vpop.permute.xlu0 %2030
        %2032 = vrot.lane.b32.xlu0 %v907, 113
        %v2033 = vpop.permute.xlu0 %2032
        %2034 = vrot.lane.b32.xlu0 %v915, 113
        %v2035 = vpop.permute.xlu0 %2034
        %2036 = vrot.lane.b32.xlu0 %v923, 113
        %v2037 = vpop.permute.xlu0 %2036
        %2038 = vrot.lane.b32.xlu0 %v900, 113
        %v2039 = vpop.permute.xlu0 %2038
        %2040 = vrot.lane.b32.xlu0 %v908, 113
        %v2041 = vpop.permute.xlu0 %2040
        %2042 = vrot.lane.b32.xlu0 %v916, 113
        %v2043 = vpop.permute.xlu0 %2042
        %2044 = vrot.lane.b32.xlu0 %v924, 113
        %v2045 = vpop.permute.xlu0 %2044
        %2046 = vrot.lane.b32.xlu0 %v901, 113
        %v2047 = vpop.permute.xlu0 %2046
        %2048 = vrot.lane.b32.xlu0 %v909, 113
        %v2049 = vpop.permute.xlu0 %2048
        %2050 = vrot.lane.b32.xlu0 %v917, 113
        %v2051 = vpop.permute.xlu0 %2050
        %2052 = vrot.lane.b32.xlu0 %v925, 113
        %v2053 = vpop.permute.xlu0 %2052
        %2054 = vrot.lane.b32.xlu0 %v902, 113
        %v2055 = vpop.permute.xlu0 %2054
        %2056 = vrot.lane.b32.xlu0 %v910, 113
        %v2057 = vpop.permute.xlu0 %2056
        %2058 = vrot.lane.b32.xlu0 %v918, 113
        %v2059 = vpop.permute.xlu0 %2058
        %2060 = vrot.lane.b32.xlu0 %v926, 113
        %v2061 = vpop.permute.xlu0 %2060
        %2062 = vrot.lane.b32.xlu0 %v903, 113
        %v2063 = vpop.permute.xlu0 %2062
        %2064 = vrot.lane.b32.xlu0 %v911, 113
        %v2065 = vpop.permute.xlu0 %2064
        %2066 = vrot.lane.b32.xlu0 %v919, 113
        %v2067 = vpop.permute.xlu0 %2066
        %2068 = vrot.lane.b32.xlu0 %v927, 113
        %v2069 = vpop.permute.xlu0 %2068
        %2070 = vrot.lane.b32.xlu0 %v904, 113
        %v2071 = vpop.permute.xlu0 %2070
        %2072 = vrot.lane.b32.xlu0 %v912, 113
        %v2073 = vpop.permute.xlu0 %2072
        %2074 = vrot.lane.b32.xlu0 %v920, 113
        %v2075 = vpop.permute.xlu0 %2074
        %2076 = vrot.lane.b32.xlu0 %v928, 113
        %v2077 = vpop.permute.xlu0 %2076
        %2078 = vrot.lane.b32.xlu0 %v905, 113
        %v2079 = vpop.permute.xlu0 %2078
        %2080 = vrot.lane.b32.xlu0 %v913, 113
        %v2081 = vpop.permute.xlu0 %2080
        %2082 = vrot.lane.b32.xlu0 %v921, 113
        %v2083 = vpop.permute.xlu0 %2082
        %2084 = vrot.lane.b32.xlu0 %v929, 113
        %v2085 = vpop.permute.xlu0 %2084
        %vm2086 = vcmp.lt.s32.totalorder %v1019, 113
        %v2087 = vsel %vm2086, %v2071, %v2079
        %v2088 = vsel %vm2086, %v2073, %v2081
        %v2089 = vsel %vm2086, %v2075, %v2083
        %v2090 = vsel %vm2086, %v2077, %v2085
        %v2091 = vsel %vm2086, %v2063, %v2071
        %v2092 = vsel %vm2086, %v2065, %v2073
        %v2093 = vsel %vm2086, %v2067, %v2075
        %v2094 = vsel %vm2086, %v2069, %v2077
        %v2095 = vsel %vm2086, %v2055, %v2063
        %v2096 = vsel %vm2086, %v2057, %v2065
        %v2097 = vsel %vm2086, %v2059, %v2067
        %v2098 = vsel %vm2086, %v2061, %v2069
        %v2099 = vsel %vm2086, %v2047, %v2055
        %v2100 = vsel %vm2086, %v2049, %v2057
        %v2101 = vsel %vm2086, %v2051, %v2059
        %v2102 = vsel %vm2086, %v2053, %v2061
        %v2103 = vsel %vm2086, %v2039, %v2047
        %v2104 = vsel %vm2086, %v2041, %v2049
        %v2105 = vsel %vm2086, %v2043, %v2051
        %v2106 = vsel %vm2086, %v2045, %v2053
        %v2107 = vsel %vm2086, %v2031, %v2039
        %v2108 = vsel %vm2086, %v2033, %v2041
        %v2109 = vsel %vm2086, %v2035, %v2043
        %v2110 = vsel %vm2086, %v2037, %v2045
        %v2111 = vsel %vm2086, %v2023, %v2031
        %v2112 = vsel %vm2086, %v2025, %v2033
        %v2113 = vsel %vm2086, %v2027, %v2035
        %v2114 = vsel %vm2086, %v2029, %v2037
        %v2115 = vsel %vm2086, %v2079, %v2023
        %v2116 = vsel %vm2086, %v2081, %v2025
        %v2117 = vsel %vm2086, %v2083, %v2027
        %v2118 = vsel %vm2086, %v2085, %v2029
        %s2119 = scalar_lea.vmem [#allocation5], 1536
        %v2120 = vld [vmem:[%s2119] sm:$0xff]
        %v2121 = vld [vmem:[%s2119 + $0x8] sm:$0xff]
        %v2122 = vld [vmem:[%s2119 + $0x10] sm:$0xff]
        %v2123 = vld [vmem:[%s2119 + $0x18] sm:$0xff]
        %v2124 = vld [vmem:[%s2119 + $0x20] sm:$0xff]
        %v2125 = vld [vmem:[%s2119 + $0x28] sm:$0xff]
        %v2126 = vld [vmem:[%s2119 + $0x30] sm:$0xff]
        %v2127 = vld [vmem:[%s2119 + $0x38] sm:$0xff]
        %v2128 = vld [vmem:[%s2119 + $0x40] sm:$0xff]
        %v2129 = vld [vmem:[%s2119 + $0x48] sm:$0xff]
        %v2130 = vld [vmem:[%s2119 + $0x50] sm:$0xff]
        %v2131 = vld [vmem:[%s2119 + $0x58] sm:$0xff]
        %v2132 = vld [vmem:[%s2119 + $0x60] sm:$0xff]
        %v2133 = vld [vmem:[%s2119 + $0x68] sm:$0xff]
        %v2134 = vld [vmem:[%s2119 + $0x70] sm:$0xff]
        %v2135 = vld [vmem:[%s2119 + $0x78] sm:$0xff]
        %v2136 = vld [vmem:[%s2119 + $0x80] sm:$0xff]
        %v2137 = vld [vmem:[%s2119 + $0x88] sm:$0xff]
        %v2138 = vld [vmem:[%s2119 + $0x90] sm:$0xff]
        %v2139 = vld [vmem:[%s2119 + $0x98] sm:$0xff]
        %v2140 = vld [vmem:[%s2119 + $0xa0] sm:$0xff]
        %v2141 = vld [vmem:[%s2119 + $0xa8] sm:$0xff]
        %v2142 = vld [vmem:[%s2119 + $0xb0] sm:$0xff]
        %v2143 = vld [vmem:[%s2119 + $0xb8] sm:$0xff]
        %v2144 = vld [vmem:[%s2119 + $0xc0] sm:$0xff]
        %v2145 = vld [vmem:[%s2119 + $0xc8] sm:$0xff]
        %v2146 = vld [vmem:[%s2119 + $0xd0] sm:$0xff]
        %v2147 = vld [vmem:[%s2119 + $0xd8] sm:$0xff]
        %v2148 = vld [vmem:[%s2119 + $0xe0] sm:$0xff]
        %v2149 = vld [vmem:[%s2119 + $0xe8] sm:$0xff]
        %v2150 = vld [vmem:[%s2119 + $0xf0] sm:$0xff]
        %v2151 = vld [vmem:[%s2119 + $0xf8] sm:$0xff]
        %v2152 = vmul.f32 %v2111, %v2120
        %v2153 = vmul.f32 %v2107, %v2121
        %v2154 = vmul.f32 %v2103, %v2122
        %v2155 = vmul.f32 %v2099, %v2123
        %v2156 = vmul.f32 %v2095, %v2124
        %v2157 = vmul.f32 %v2091, %v2125
        %v2158 = vmul.f32 %v2087, %v2126
        %v2159 = vmul.f32 %v2115, %v2127
        %v2160 = vmul.f32 %v2112, %v2128
        %v2161 = vmul.f32 %v2108, %v2129
        %v2162 = vmul.f32 %v2104, %v2130
        %v2163 = vmul.f32 %v2100, %v2131
        %v2164 = vmul.f32 %v2096, %v2132
        %v2165 = vmul.f32 %v2092, %v2133
        %v2166 = vmul.f32 %v2088, %v2134
        %v2167 = vmul.f32 %v2116, %v2135
        %v2168 = vmul.f32 %v2113, %v2136
        %v2169 = vmul.f32 %v2109, %v2137
        %v2170 = vmul.f32 %v2105, %v2138
        %v2171 = vmul.f32 %v2101, %v2139
        %v2172 = vmul.f32 %v2097, %v2140
        %v2173 = vmul.f32 %v2093, %v2141
        %v2174 = vmul.f32 %v2089, %v2142
        %v2175 = vmul.f32 %v2117, %v2143
        %v2176 = vmul.f32 %v2114, %v2144
        %v2177 = vmul.f32 %v2110, %v2145
        %v2178 = vmul.f32 %v2106, %v2146
        %v2179 = vmul.f32 %v2102, %v2147
        %v2180 = vmul.f32 %v2098, %v2148
        %v2181 = vmul.f32 %v2094, %v2149
        %v2182 = vmul.f32 %v2090, %v2150
        %v2183 = vmul.f32 %v2118, %v2151
        %v2184 = vadd.f32 %v1990, %v2152
        %v2185 = vadd.f32 %v1991, %v2153
        %v2186 = vadd.f32 %v1992, %v2154
        %v2187 = vadd.f32 %v1993, %v2155
        %v2188 = vadd.f32 %v1994, %v2156
        %v2189 = vadd.f32 %v1995, %v2157
        %v2190 = vadd.f32 %v1996, %v2158
        %v2191 = vadd.f32 %v1997, %v2159
        %v2192 = vadd.f32 %v1998, %v2160
        %v2193 = vadd.f32 %v1999, %v2161
        %v2194 = vadd.f32 %v2000, %v2162
        %v2195 = vadd.f32 %v2001, %v2163
        %v2196 = vadd.f32 %v2002, %v2164
        %v2197 = vadd.f32 %v2003, %v2165
        %v2198 = vadd.f32 %v2004, %v2166
        %v2199 = vadd.f32 %v2005, %v2167
        %v2200 = vadd.f32 %v2006, %v2168
        %v2201 = vadd.f32 %v2007, %v2169
        %v2202 = vadd.f32 %v2008, %v2170
        %v2203 = vadd.f32 %v2009, %v2171
        %v2204 = vadd.f32 %v2010, %v2172
        %v2205 = vadd.f32 %v2011, %v2173
        %v2206 = vadd.f32 %v2012, %v2174
        %v2207 = vadd.f32 %v2013, %v2175
        %v2208 = vadd.f32 %v2014, %v2176
        %v2209 = vadd.f32 %v2015, %v2177
        %v2210 = vadd.f32 %v2016, %v2178
        %v2211 = vadd.f32 %v2017, %v2179
        %v2212 = vadd.f32 %v2018, %v2180
        %v2213 = vadd.f32 %v2019, %v2181
        %v2214 = vadd.f32 %v2020, %v2182
        %v2215 = vadd.f32 %v2021, %v2183
        %2216 = vrot.lane.b32.xlu0 %v898, 112
        %v2217 = vpop.permute.xlu0 %2216
        %2218 = vrot.lane.b32.xlu0 %v906, 112
        %v2219 = vpop.permute.xlu0 %2218
        %2220 = vrot.lane.b32.xlu0 %v914, 112
        %v2221 = vpop.permute.xlu0 %2220
        %2222 = vrot.lane.b32.xlu0 %v922, 112
        %v2223 = vpop.permute.xlu0 %2222
        %2224 = vrot.lane.b32.xlu0 %v899, 112
        %v2225 = vpop.permute.xlu0 %2224
        %2226 = vrot.lane.b32.xlu0 %v907, 112
        %v2227 = vpop.permute.xlu0 %2226
        %2228 = vrot.lane.b32.xlu0 %v915, 112
        %v2229 = vpop.permute.xlu0 %2228
        %2230 = vrot.lane.b32.xlu0 %v923, 112
        %v2231 = vpop.permute.xlu0 %2230
        %2232 = vrot.lane.b32.xlu0 %v900, 112
        %v2233 = vpop.permute.xlu0 %2232
        %2234 = vrot.lane.b32.xlu0 %v908, 112
        %v2235 = vpop.permute.xlu0 %2234
        %2236 = vrot.lane.b32.xlu0 %v916, 112
        %v2237 = vpop.permute.xlu0 %2236
        %2238 = vrot.lane.b32.xlu0 %v924, 112
        %v2239 = vpop.permute.xlu0 %2238
        %2240 = vrot.lane.b32.xlu0 %v901, 112
        %v2241 = vpop.permute.xlu0 %2240
        %2242 = vrot.lane.b32.xlu0 %v909, 112
        %v2243 = vpop.permute.xlu0 %2242
        %2244 = vrot.lane.b32.xlu0 %v917, 112
        %v2245 = vpop.permute.xlu0 %2244
        %2246 = vrot.lane.b32.xlu0 %v925, 112
        %v2247 = vpop.permute.xlu0 %2246
        %2248 = vrot.lane.b32.xlu0 %v902, 112
        %v2249 = vpop.permute.xlu0 %2248
        %2250 = vrot.lane.b32.xlu0 %v910, 112
        %v2251 = vpop.permute.xlu0 %2250
        %2252 = vrot.lane.b32.xlu0 %v918, 112
        %v2253 = vpop.permute.xlu0 %2252
        %2254 = vrot.lane.b32.xlu0 %v926, 112
        %v2255 = vpop.permute.xlu0 %2254
        %2256 = vrot.lane.b32.xlu0 %v903, 112
        %v2257 = vpop.permute.xlu0 %2256
        %2258 = vrot.lane.b32.xlu0 %v911, 112
        %v2259 = vpop.permute.xlu0 %2258
        %2260 = vrot.lane.b32.xlu0 %v919, 112
        %v2261 = vpop.permute.xlu0 %2260
        %2262 = vrot.lane.b32.xlu0 %v927, 112
        %v2263 = vpop.permute.xlu0 %2262
        %2264 = vrot.lane.b32.xlu0 %v904, 112
        %v2265 = vpop.permute.xlu0 %2264
        %2266 = vrot.lane.b32.xlu0 %v912, 112
        %v2267 = vpop.permute.xlu0 %2266
        %2268 = vrot.lane.b32.xlu0 %v920, 112
        %v2269 = vpop.permute.xlu0 %2268
        %2270 = vrot.lane.b32.xlu0 %v928, 112
        %v2271 = vpop.permute.xlu0 %2270
        %2272 = vrot.lane.b32.xlu0 %v905, 112
        %v2273 = vpop.permute.xlu0 %2272
        %2274 = vrot.lane.b32.xlu0 %v913, 112
        %v2275 = vpop.permute.xlu0 %2274
        %2276 = vrot.lane.b32.xlu0 %v921, 112
        %v2277 = vpop.permute.xlu0 %2276
        %2278 = vrot.lane.b32.xlu0 %v929, 112
        %v2279 = vpop.permute.xlu0 %2278
        %vm2280 = vcmp.lt.s32.totalorder %v1019, 112
        %v2281 = vsel %vm2280, %v2265, %v2273
        %v2282 = vsel %vm2280, %v2267, %v2275
        %v2283 = vsel %vm2280, %v2269, %v2277
        %v2284 = vsel %vm2280, %v2271, %v2279
        %v2285 = vsel %vm2280, %v2257, %v2265
        %v2286 = vsel %vm2280, %v2259, %v2267
        %v2287 = vsel %vm2280, %v2261, %v2269
        %v2288 = vsel %vm2280, %v2263, %v2271
        %v2289 = vsel %vm2280, %v2249, %v2257
        %v2290 = vsel %vm2280, %v2251, %v2259
        %v2291 = vsel %vm2280, %v2253, %v2261
        %v2292 = vsel %vm2280, %v2255, %v2263
        %v2293 = vsel %vm2280, %v2241, %v2249
        %v2294 = vsel %vm2280, %v2243, %v2251
        %v2295 = vsel %vm2280, %v2245, %v2253
        %v2296 = vsel %vm2280, %v2247, %v2255
        %v2297 = vsel %vm2280, %v2233, %v2241
        %v2298 = vsel %vm2280, %v2235, %v2243
        %v2299 = vsel %vm2280, %v2237, %v2245
        %v2300 = vsel %vm2280, %v2239, %v2247
        %v2301 = vsel %vm2280, %v2225, %v2233
        %v2302 = vsel %vm2280, %v2227, %v2235
        %v2303 = vsel %vm2280, %v2229, %v2237
        %v2304 = vsel %vm2280, %v2231, %v2239
        %v2305 = vsel %vm2280, %v2217, %v2225
        %v2306 = vsel %vm2280, %v2219, %v2227
        %v2307 = vsel %vm2280, %v2221, %v2229
        %v2308 = vsel %vm2280, %v2223, %v2231
        %v2309 = vsel %vm2280, %v2273, %v2217
        %v2310 = vsel %vm2280, %v2275, %v2219
        %v2311 = vsel %vm2280, %v2277, %v2221
        %v2312 = vsel %vm2280, %v2279, %v2223
        %s2313 = scalar_lea.vmem [#allocation5], 1792
        %v2314 = vld [vmem:[%s2313] sm:$0xff]
        %v2315 = vld [vmem:[%s2313 + $0x8] sm:$0xff]
        %v2316 = vld [vmem:[%s2313 + $0x10] sm:$0xff]
        %v2317 = vld [vmem:[%s2313 + $0x18] sm:$0xff]
        %v2318 = vld [vmem:[%s2313 + $0x20] sm:$0xff]
        %v2319 = vld [vmem:[%s2313 + $0x28] sm:$0xff]
        %v2320 = vld [vmem:[%s2313 + $0x30] sm:$0xff]
        %v2321 = vld [vmem:[%s2313 + $0x38] sm:$0xff]
        %v2322 = vld [vmem:[%s2313 + $0x40] sm:$0xff]
        %v2323 = vld [vmem:[%s2313 + $0x48] sm:$0xff]
        %v2324 = vld [vmem:[%s2313 + $0x50] sm:$0xff]
        %v2325 = vld [vmem:[%s2313 + $0x58] sm:$0xff]
        %v2326 = vld [vmem:[%s2313 + $0x60] sm:$0xff]
        %v2327 = vld [vmem:[%s2313 + $0x68] sm:$0xff]
        %v2328 = vld [vmem:[%s2313 + $0x70] sm:$0xff]
        %v2329 = vld [vmem:[%s2313 + $0x78] sm:$0xff]
        %v2330 = vld [vmem:[%s2313 + $0x80] sm:$0xff]
        %v2331 = vld [vmem:[%s2313 + $0x88] sm:$0xff]
        %v2332 = vld [vmem:[%s2313 + $0x90] sm:$0xff]
        %v2333 = vld [vmem:[%s2313 + $0x98] sm:$0xff]
        %v2334 = vld [vmem:[%s2313 + $0xa0] sm:$0xff]
        %v2335 = vld [vmem:[%s2313 + $0xa8] sm:$0xff]
        %v2336 = vld [vmem:[%s2313 + $0xb0] sm:$0xff]
        %v2337 = vld [vmem:[%s2313 + $0xb8] sm:$0xff]
        %v2338 = vld [vmem:[%s2313 + $0xc0] sm:$0xff]
        %v2339 = vld [vmem:[%s2313 + $0xc8] sm:$0xff]
        %v2340 = vld [vmem:[%s2313 + $0xd0] sm:$0xff]
        %v2341 = vld [vmem:[%s2313 + $0xd8] sm:$0xff]
        %v2342 = vld [vmem:[%s2313 + $0xe0] sm:$0xff]
        %v2343 = vld [vmem:[%s2313 + $0xe8] sm:$0xff]
        %v2344 = vld [vmem:[%s2313 + $0xf0] sm:$0xff]
        %v2345 = vld [vmem:[%s2313 + $0xf8] sm:$0xff]
        %v2346 = vmul.f32 %v2305, %v2314
        %v2347 = vmul.f32 %v2301, %v2315
        %v2348 = vmul.f32 %v2297, %v2316
        %v2349 = vmul.f32 %v2293, %v2317
        %v2350 = vmul.f32 %v2289, %v2318
        %v2351 = vmul.f32 %v2285, %v2319
        %v2352 = vmul.f32 %v2281, %v2320
        %v2353 = vmul.f32 %v2309, %v2321
        %v2354 = vmul.f32 %v2306, %v2322
        %v2355 = vmul.f32 %v2302, %v2323
        %v2356 = vmul.f32 %v2298, %v2324
        %v2357 = vmul.f32 %v2294, %v2325
        %v2358 = vmul.f32 %v2290, %v2326
        %v2359 = vmul.f32 %v2286, %v2327
        %v2360 = vmul.f32 %v2282, %v2328
        %v2361 = vmul.f32 %v2310, %v2329
        %v2362 = vmul.f32 %v2307, %v2330
        %v2363 = vmul.f32 %v2303, %v2331
        %v2364 = vmul.f32 %v2299, %v2332
        %v2365 = vmul.f32 %v2295, %v2333
        %v2366 = vmul.f32 %v2291, %v2334
        %v2367 = vmul.f32 %v2287, %v2335
        %v2368 = vmul.f32 %v2283, %v2336
        %v2369 = vmul.f32 %v2311, %v2337
        %v2370 = vmul.f32 %v2308, %v2338
        %v2371 = vmul.f32 %v2304, %v2339
        %v2372 = vmul.f32 %v2300, %v2340
        %v2373 = vmul.f32 %v2296, %v2341
        %v2374 = vmul.f32 %v2292, %v2342
        %v2375 = vmul.f32 %v2288, %v2343
        %v2376 = vmul.f32 %v2284, %v2344
        %v2377 = vmul.f32 %v2312, %v2345
        %v2378 = vadd.f32 %v2184, %v2346
        %v2379 = vadd.f32 %v2185, %v2347
        %v2380 = vadd.f32 %v2186, %v2348
        %v2381 = vadd.f32 %v2187, %v2349
        %v2382 = vadd.f32 %v2188, %v2350
        %v2383 = vadd.f32 %v2189, %v2351
        %v2384 = vadd.f32 %v2190, %v2352
        %v2385 = vadd.f32 %v2191, %v2353
        %v2386 = vadd.f32 %v2192, %v2354
        %v2387 = vadd.f32 %v2193, %v2355
        %v2388 = vadd.f32 %v2194, %v2356
        %v2389 = vadd.f32 %v2195, %v2357
        %v2390 = vadd.f32 %v2196, %v2358
        %v2391 = vadd.f32 %v2197, %v2359
        %v2392 = vadd.f32 %v2198, %v2360
        %v2393 = vadd.f32 %v2199, %v2361
        %v2394 = vadd.f32 %v2200, %v2362
        %v2395 = vadd.f32 %v2201, %v2363
        %v2396 = vadd.f32 %v2202, %v2364
        %v2397 = vadd.f32 %v2203, %v2365
        %v2398 = vadd.f32 %v2204, %v2366
        %v2399 = vadd.f32 %v2205, %v2367
        %v2400 = vadd.f32 %v2206, %v2368
        %v2401 = vadd.f32 %v2207, %v2369
        %v2402 = vadd.f32 %v2208, %v2370
        %v2403 = vadd.f32 %v2209, %v2371
        %v2404 = vadd.f32 %v2210, %v2372
        %v2405 = vadd.f32 %v2211, %v2373
        %v2406 = vadd.f32 %v2212, %v2374
        %v2407 = vadd.f32 %v2213, %v2375
        %v2408 = vadd.f32 %v2214, %v2376
        %v2409 = vadd.f32 %v2215, %v2377
        %2410 = vrot.lane.b32.xlu0 %v898, 111
        %v2411 = vpop.permute.xlu0 %2410
        %2412 = vrot.lane.b32.xlu0 %v906, 111
        %v2413 = vpop.permute.xlu0 %2412
        %2414 = vrot.lane.b32.xlu0 %v914, 111
        %v2415 = vpop.permute.xlu0 %2414
        %2416 = vrot.lane.b32.xlu0 %v922, 111
        %v2417 = vpop.permute.xlu0 %2416
        %2418 = vrot.lane.b32.xlu0 %v899, 111
        %v2419 = vpop.permute.xlu0 %2418
        %2420 = vrot.lane.b32.xlu0 %v907, 111
        %v2421 = vpop.permute.xlu0 %2420
        %2422 = vrot.lane.b32.xlu0 %v915, 111
        %v2423 = vpop.permute.xlu0 %2422
        %2424 = vrot.lane.b32.xlu0 %v923, 111
        %v2425 = vpop.permute.xlu0 %2424
        %2426 = vrot.lane.b32.xlu0 %v900, 111
        %v2427 = vpop.permute.xlu0 %2426
        %2428 = vrot.lane.b32.xlu0 %v908, 111
        %v2429 = vpop.permute.xlu0 %2428
        %2430 = vrot.lane.b32.xlu0 %v916, 111
        %v2431 = vpop.permute.xlu0 %2430
        %2432 = vrot.lane.b32.xlu0 %v924, 111
        %v2433 = vpop.permute.xlu0 %2432
        %2434 = vrot.lane.b32.xlu0 %v901, 111
        %v2435 = vpop.permute.xlu0 %2434
        %2436 = vrot.lane.b32.xlu0 %v909, 111
        %v2437 = vpop.permute.xlu0 %2436
        %2438 = vrot.lane.b32.xlu0 %v917, 111
        %v2439 = vpop.permute.xlu0 %2438
        %2440 = vrot.lane.b32.xlu0 %v925, 111
        %v2441 = vpop.permute.xlu0 %2440
        %2442 = vrot.lane.b32.xlu0 %v902, 111
        %v2443 = vpop.permute.xlu0 %2442
        %2444 = vrot.lane.b32.xlu0 %v910, 111
        %v2445 = vpop.permute.xlu0 %2444
        %2446 = vrot.lane.b32.xlu0 %v918, 111
        %v2447 = vpop.permute.xlu0 %2446
        %2448 = vrot.lane.b32.xlu0 %v926, 111
        %v2449 = vpop.permute.xlu0 %2448
        %2450 = vrot.lane.b32.xlu0 %v903, 111
        %v2451 = vpop.permute.xlu0 %2450
        %2452 = vrot.lane.b32.xlu0 %v911, 111
        %v2453 = vpop.permute.xlu0 %2452
        %2454 = vrot.lane.b32.xlu0 %v919, 111
        %v2455 = vpop.permute.xlu0 %2454
        %2456 = vrot.lane.b32.xlu0 %v927, 111
        %v2457 = vpop.permute.xlu0 %2456
        %2458 = vrot.lane.b32.xlu0 %v904, 111
        %v2459 = vpop.permute.xlu0 %2458
        %2460 = vrot.lane.b32.xlu0 %v912, 111
        %v2461 = vpop.permute.xlu0 %2460
        %2462 = vrot.lane.b32.xlu0 %v920, 111
        %v2463 = vpop.permute.xlu0 %2462
        %2464 = vrot.lane.b32.xlu0 %v928, 111
        %v2465 = vpop.permute.xlu0 %2464
        %2466 = vrot.lane.b32.xlu0 %v905, 111
        %v2467 = vpop.permute.xlu0 %2466
        %2468 = vrot.lane.b32.xlu0 %v913, 111
        %v2469 = vpop.permute.xlu0 %2468
        %2470 = vrot.lane.b32.xlu0 %v921, 111
        %v2471 = vpop.permute.xlu0 %2470
        %2472 = vrot.lane.b32.xlu0 %v929, 111
        %v2473 = vpop.permute.xlu0 %2472
        %vm2474 = vcmp.lt.s32.totalorder %v1019, 111
        %v2475 = vsel %vm2474, %v2459, %v2467
        %v2476 = vsel %vm2474, %v2461, %v2469
        %v2477 = vsel %vm2474, %v2463, %v2471
        %v2478 = vsel %vm2474, %v2465, %v2473
        %v2479 = vsel %vm2474, %v2451, %v2459
        %v2480 = vsel %vm2474, %v2453, %v2461
        %v2481 = vsel %vm2474, %v2455, %v2463
        %v2482 = vsel %vm2474, %v2457, %v2465
        %v2483 = vsel %vm2474, %v2443, %v2451
        %v2484 = vsel %vm2474, %v2445, %v2453
        %v2485 = vsel %vm2474, %v2447, %v2455
        %v2486 = vsel %vm2474, %v2449, %v2457
        %v2487 = vsel %vm2474, %v2435, %v2443
        %v2488 = vsel %vm2474, %v2437, %v2445
        %v2489 = vsel %vm2474, %v2439, %v2447
        %v2490 = vsel %vm2474, %v2441, %v2449
        %v2491 = vsel %vm2474, %v2427, %v2435
        %v2492 = vsel %vm2474, %v2429, %v2437
        %v2493 = vsel %vm2474, %v2431, %v2439
        %v2494 = vsel %vm2474, %v2433, %v2441
        %v2495 = vsel %vm2474, %v2419, %v2427
        %v2496 = vsel %vm2474, %v2421, %v2429
        %v2497 = vsel %vm2474, %v2423, %v2431
        %v2498 = vsel %vm2474, %v2425, %v2433
        %v2499 = vsel %vm2474, %v2411, %v2419
        %v2500 = vsel %vm2474, %v2413, %v2421
        %v2501 = vsel %vm2474, %v2415, %v2423
        %v2502 = vsel %vm2474, %v2417, %v2425
        %v2503 = vsel %vm2474, %v2467, %v2411
        %v2504 = vsel %vm2474, %v2469, %v2413
        %v2505 = vsel %vm2474, %v2471, %v2415
        %v2506 = vsel %vm2474, %v2473, %v2417
        %s2507 = scalar_lea.vmem [#allocation5], 2048
        %v2508 = vld [vmem:[%s2507] sm:$0xff]
        %v2509 = vld [vmem:[%s2507 + $0x8] sm:$0xff]
        %v2510 = vld [vmem:[%s2507 + $0x10] sm:$0xff]
        %v2511 = vld [vmem:[%s2507 + $0x18] sm:$0xff]
        %v2512 = vld [vmem:[%s2507 + $0x20] sm:$0xff]
        %v2513 = vld [vmem:[%s2507 + $0x28] sm:$0xff]
        %v2514 = vld [vmem:[%s2507 + $0x30] sm:$0xff]
        %v2515 = vld [vmem:[%s2507 + $0x38] sm:$0xff]
        %v2516 = vld [vmem:[%s2507 + $0x40] sm:$0xff]
        %v2517 = vld [vmem:[%s2507 + $0x48] sm:$0xff]
        %v2518 = vld [vmem:[%s2507 + $0x50] sm:$0xff]
        %v2519 = vld [vmem:[%s2507 + $0x58] sm:$0xff]
        %v2520 = vld [vmem:[%s2507 + $0x60] sm:$0xff]
        %v2521 = vld [vmem:[%s2507 + $0x68] sm:$0xff]
        %v2522 = vld [vmem:[%s2507 + $0x70] sm:$0xff]
        %v2523 = vld [vmem:[%s2507 + $0x78] sm:$0xff]
        %v2524 = vld [vmem:[%s2507 + $0x80] sm:$0xff]
        %v2525 = vld [vmem:[%s2507 + $0x88] sm:$0xff]
        %v2526 = vld [vmem:[%s2507 + $0x90] sm:$0xff]
        %v2527 = vld [vmem:[%s2507 + $0x98] sm:$0xff]
        %v2528 = vld [vmem:[%s2507 + $0xa0] sm:$0xff]
        %v2529 = vld [vmem:[%s2507 + $0xa8] sm:$0xff]
        %v2530 = vld [vmem:[%s2507 + $0xb0] sm:$0xff]
        %v2531 = vld [vmem:[%s2507 + $0xb8] sm:$0xff]
        %v2532 = vld [vmem:[%s2507 + $0xc0] sm:$0xff]
        %v2533 = vld [vmem:[%s2507 + $0xc8] sm:$0xff]
        %v2534 = vld [vmem:[%s2507 + $0xd0] sm:$0xff]
        %v2535 = vld [vmem:[%s2507 + $0xd8] sm:$0xff]
        %v2536 = vld [vmem:[%s2507 + $0xe0] sm:$0xff]
        %v2537 = vld [vmem:[%s2507 + $0xe8] sm:$0xff]
        %v2538 = vld [vmem:[%s2507 + $0xf0] sm:$0xff]
        %v2539 = vld [vmem:[%s2507 + $0xf8] sm:$0xff]
        %v2540 = vmul.f32 %v2499, %v2508
        %v2541 = vmul.f32 %v2495, %v2509
        %v2542 = vmul.f32 %v2491, %v2510
        %v2543 = vmul.f32 %v2487, %v2511
        %v2544 = vmul.f32 %v2483, %v2512
        %v2545 = vmul.f32 %v2479, %v2513
        %v2546 = vmul.f32 %v2475, %v2514
        %v2547 = vmul.f32 %v2503, %v2515
        %v2548 = vmul.f32 %v2500, %v2516
        %v2549 = vmul.f32 %v2496, %v2517
        %v2550 = vmul.f32 %v2492, %v2518
        %v2551 = vmul.f32 %v2488, %v2519
        %v2552 = vmul.f32 %v2484, %v2520
        %v2553 = vmul.f32 %v2480, %v2521
        %v2554 = vmul.f32 %v2476, %v2522
        %v2555 = vmul.f32 %v2504, %v2523
        %v2556 = vmul.f32 %v2501, %v2524
        %v2557 = vmul.f32 %v2497, %v2525
        %v2558 = vmul.f32 %v2493, %v2526
        %v2559 = vmul.f32 %v2489, %v2527
        %v2560 = vmul.f32 %v2485, %v2528
        %v2561 = vmul.f32 %v2481, %v2529
        %v2562 = vmul.f32 %v2477, %v2530
        %v2563 = vmul.f32 %v2505, %v2531
        %v2564 = vmul.f32 %v2502, %v2532
        %v2565 = vmul.f32 %v2498, %v2533
        %v2566 = vmul.f32 %v2494, %v2534
        %v2567 = vmul.f32 %v2490, %v2535
        %v2568 = vmul.f32 %v2486, %v2536
        %v2569 = vmul.f32 %v2482, %v2537
        %v2570 = vmul.f32 %v2478, %v2538
        %v2571 = vmul.f32 %v2506, %v2539
        %v2572 = vadd.f32 %v2378, %v2540
        %v2573 = vadd.f32 %v2379, %v2541
        %v2574 = vadd.f32 %v2380, %v2542
        %v2575 = vadd.f32 %v2381, %v2543
        %v2576 = vadd.f32 %v2382, %v2544
        %v2577 = vadd.f32 %v2383, %v2545
        %v2578 = vadd.f32 %v2384, %v2546
        %v2579 = vadd.f32 %v2385, %v2547
        %v2580 = vadd.f32 %v2386, %v2548
        %v2581 = vadd.f32 %v2387, %v2549
        %v2582 = vadd.f32 %v2388, %v2550
        %v2583 = vadd.f32 %v2389, %v2551
        %v2584 = vadd.f32 %v2390, %v2552
        %v2585 = vadd.f32 %v2391, %v2553
        %v2586 = vadd.f32 %v2392, %v2554
        %v2587 = vadd.f32 %v2393, %v2555
        %v2588 = vadd.f32 %v2394, %v2556
        %v2589 = vadd.f32 %v2395, %v2557
        %v2590 = vadd.f32 %v2396, %v2558
        %v2591 = vadd.f32 %v2397, %v2559
        %v2592 = vadd.f32 %v2398, %v2560
        %v2593 = vadd.f32 %v2399, %v2561
        %v2594 = vadd.f32 %v2400, %v2562
        %v2595 = vadd.f32 %v2401, %v2563
        %v2596 = vadd.f32 %v2402, %v2564
        %v2597 = vadd.f32 %v2403, %v2565
        %v2598 = vadd.f32 %v2404, %v2566
        %v2599 = vadd.f32 %v2405, %v2567
        %v2600 = vadd.f32 %v2406, %v2568
        %v2601 = vadd.f32 %v2407, %v2569
        %v2602 = vadd.f32 %v2408, %v2570
        %v2603 = vadd.f32 %v2409, %v2571
        %v2604 = vxor.u32 %v2572, 2147483648
        %v2605 = vxor.u32 %v2573, 2147483648
        %v2606 = vxor.u32 %v2574, 2147483648
        %v2607 = vxor.u32 %v2575, 2147483648
        %v2608 = vxor.u32 %v2576, 2147483648
        %v2609 = vxor.u32 %v2577, 2147483648
        %v2610 = vxor.u32 %v2578, 2147483648
        %v2611 = vxor.u32 %v2579, 2147483648
        %v2612 = vxor.u32 %v2580, 2147483648
        %v2613 = vxor.u32 %v2581, 2147483648
        %v2614 = vxor.u32 %v2582, 2147483648
        %v2615 = vxor.u32 %v2583, 2147483648
        %v2616 = vxor.u32 %v2584, 2147483648
        %v2617 = vxor.u32 %v2585, 2147483648
        %v2618 = vxor.u32 %v2586, 2147483648
        %v2619 = vxor.u32 %v2587, 2147483648
        %v2620 = vxor.u32 %v2588, 2147483648
        %v2621 = vxor.u32 %v2589, 2147483648
        %v2622 = vxor.u32 %v2590, 2147483648
        %v2623 = vxor.u32 %v2591, 2147483648
        %v2624 = vxor.u32 %v2592, 2147483648
        %v2625 = vxor.u32 %v2593, 2147483648
        %v2626 = vxor.u32 %v2594, 2147483648
        %v2627 = vxor.u32 %v2595, 2147483648
        %v2628 = vxor.u32 %v2596, 2147483648
        %v2629 = vxor.u32 %v2597, 2147483648
        %v2630 = vxor.u32 %v2598, 2147483648
        %v2631 = vxor.u32 %v2599, 2147483648
        %v2632 = vxor.u32 %v2600, 2147483648
        %v2633 = vxor.u32 %v2601, 2147483648
        %v2634 = vxor.u32 %v2602, 2147483648
        %v2635 = vxor.u32 %v2603, 2147483648
        %v2636 = vmul.f32 %v2604, 1.442695
        %v2637 = vpow.pop %v2636
        %v2638 = vmul.f32 %v2605, 1.442695
        %v2639 = vpow.pop %v2638
        %v2640 = vmul.f32 %v2606, 1.442695
        %v2641 = vpow.pop %v2640
        %v2642 = vmul.f32 %v2607, 1.442695
        %v2643 = vpow.pop %v2642
        %v2644 = vmul.f32 %v2608, 1.442695
        %v2645 = vpow.pop %v2644
        %v2646 = vmul.f32 %v2609, 1.442695
        %v2647 = vpow.pop %v2646
        %v2648 = vmul.f32 %v2610, 1.442695
        %v2649 = vpow.pop %v2648
        %v2650 = vmul.f32 %v2611, 1.442695
        %v2651 = vpow.pop %v2650
        %v2652 = vmul.f32 %v2612, 1.442695
        %v2653 = vpow.pop %v2652
        %v2654 = vmul.f32 %v2613, 1.442695
        %v2655 = vpow.pop %v2654
        %v2656 = vmul.f32 %v2614, 1.442695
        %v2657 = vpow.pop %v2656
        %v2658 = vmul.f32 %v2615, 1.442695
        %v2659 = vpow.pop %v2658
        %v2660 = vmul.f32 %v2616, 1.442695
        %v2661 = vpow.pop %v2660
        %v2662 = vmul.f32 %v2617, 1.442695
        %v2663 = vpow.pop %v2662
        %v2664 = vmul.f32 %v2618, 1.442695
        %v2665 = vpow.pop %v2664
        %v2666 = vmul.f32 %v2619, 1.442695
        %v2667 = vpow.pop %v2666
        %v2668 = vmul.f32 %v2620, 1.442695
        %v2669 = vpow.pop %v2668
        %v2670 = vmul.f32 %v2621, 1.442695
        %v2671 = vpow.pop %v2670
        %v2672 = vmul.f32 %v2622, 1.442695
        %v2673 = vpow.pop %v2672
        %v2674 = vmul.f32 %v2623, 1.442695
        %v2675 = vpow.pop %v2674
        %v2676 = vmul.f32 %v2624, 1.442695
        %v2677 = vpow.pop %v2676
        %v2678 = vmul.f32 %v2625, 1.442695
        %v2679 = vpow.pop %v2678
        %v2680 = vmul.f32 %v2626, 1.442695
        %v2681 = vpow.pop %v2680
        %v2682 = vmul.f32 %v2627, 1.442695
        %v2683 = vpow.pop %v2682
        %v2684 = vmul.f32 %v2628, 1.442695
        %v2685 = vpow.pop %v2684
        %v2686 = vmul.f32 %v2629, 1.442695
        %v2687 = vpow.pop %v2686
        %v2688 = vmul.f32 %v2630, 1.442695
        %v2689 = vpow.pop %v2688
        %v2690 = vmul.f32 %v2631, 1.442695
        %v2691 = vpow.pop %v2690
        %v2692 = vmul.f32 %v2632, 1.442695
        %v2693 = vpow.pop %v2692
        %v2694 = vmul.f32 %v2633, 1.442695
        %v2695 = vpow.pop %v2694
        %v2696 = vmul.f32 %v2634, 1.442695
        %v2697 = vpow.pop %v2696
        %v2698 = vmul.f32 %v2635, 1.442695
        %v2699 = vpow.pop %v2698
        %v2700 = vadd.f32 %v2637, 1.0
        %v2701 = vadd.f32 %v2639, 1.0
        %v2702 = vadd.f32 %v2641, 1.0
        %v2703 = vadd.f32 %v2643, 1.0
        %v2704 = vadd.f32 %v2645, 1.0
        %v2705 = vadd.f32 %v2647, 1.0
        %v2706 = vadd.f32 %v2649, 1.0
        %v2707 = vadd.f32 %v2651, 1.0
        %v2708 = vadd.f32 %v2653, 1.0
        %v2709 = vadd.f32 %v2655, 1.0
        %v2710 = vadd.f32 %v2657, 1.0
        %v2711 = vadd.f32 %v2659, 1.0
        %v2712 = vadd.f32 %v2661, 1.0
        %v2713 = vadd.f32 %v2663, 1.0
        %v2714 = vadd.f32 %v2665, 1.0
        %v2715 = vadd.f32 %v2667, 1.0
        %v2716 = vadd.f32 %v2669, 1.0
        %v2717 = vadd.f32 %v2671, 1.0
        %v2718 = vadd.f32 %v2673, 1.0
        %v2719 = vadd.f32 %v2675, 1.0
        %v2720 = vadd.f32 %v2677, 1.0
        %v2721 = vadd.f32 %v2679, 1.0
        %v2722 = vadd.f32 %v2681, 1.0
        %v2723 = vadd.f32 %v2683, 1.0
        %v2724 = vadd.f32 %v2685, 1.0
        %v2725 = vadd.f32 %v2687, 1.0
        %v2726 = vadd.f32 %v2689, 1.0
        %v2727 = vadd.f32 %v2691, 1.0
        %v2728 = vadd.f32 %v2693, 1.0
        %v2729 = vadd.f32 %v2695, 1.0
        %v2730 = vadd.f32 %v2697, 1.0
        %v2731 = vadd.f32 %v2699, 1.0
        %v2732 = vrcp.pop %v2700
        %v2733 = vmul.f32 1.0, %v2732
        %v2734 = vrcp.pop %v2701
        %v2735 = vmul.f32 1.0, %v2734
        %v2736 = vrcp.pop %v2702
        %v2737 = vmul.f32 1.0, %v2736
        %v2738 = vrcp.pop %v2703
        %v2739 = vmul.f32 1.0, %v2738
        %v2740 = vrcp.pop %v2704
        %v2741 = vmul.f32 1.0, %v2740
        %v2742 = vrcp.pop %v2705
        %v2743 = vmul.f32 1.0, %v2742
        %v2744 = vrcp.pop %v2706
        %v2745 = vmul.f32 1.0, %v2744
        %v2746 = vrcp.pop %v2707
        %v2747 = vmul.f32 1.0, %v2746
        %v2748 = vrcp.pop %v2708
        %v2749 = vmul.f32 1.0, %v2748
        %v2750 = vrcp.pop %v2709
        %v2751 = vmul.f32 1.0, %v2750
        %v2752 = vrcp.pop %v2710
        %v2753 = vmul.f32 1.0, %v2752
        %v2754 = vrcp.pop %v2711
        %v2755 = vmul.f32 1.0, %v2754
        %v2756 = vrcp.pop %v2712
        %v2757 = vmul.f32 1.0, %v2756
        %v2758 = vrcp.pop %v2713
        %v2759 = vmul.f32 1.0, %v2758
        %v2760 = vrcp.pop %v2714
        %v2761 = vmul.f32 1.0, %v2760
        %v2762 = vrcp.pop %v2715
        %v2763 = vmul.f32 1.0, %v2762
        %v2764 = vrcp.pop %v2716
        %v2765 = vmul.f32 1.0, %v2764
        %v2766 = vrcp.pop %v2717
        %v2767 = vmul.f32 1.0, %v2766
        %v2768 = vrcp.pop %v2718
        %v2769 = vmul.f32 1.0, %v2768
        %v2770 = vrcp.pop %v2719
        %v2771 = vmul.f32 1.0, %v2770
        %v2772 = vrcp.pop %v2720
        %v2773 = vmul.f32 1.0, %v2772
        %v2774 = vrcp.pop %v2721
        %v2775 = vmul.f32 1.0, %v2774
        %v2776 = vrcp.pop %v2722
        %v2777 = vmul.f32 1.0, %v2776
        %v2778 = vrcp.pop %v2723
        %v2779 = vmul.f32 1.0, %v2778
        %v2780 = vrcp.pop %v2724
        %v2781 = vmul.f32 1.0, %v2780
        %v2782 = vrcp.pop %v2725
        %v2783 = vmul.f32 1.0, %v2782
        %v2784 = vrcp.pop %v2726
        %v2785 = vmul.f32 1.0, %v2784
        %v2786 = vrcp.pop %v2727
        %v2787 = vmul.f32 1.0, %v2786
        %v2788 = vrcp.pop %v2728
        %v2789 = vmul.f32 1.0, %v2788
        %v2790 = vrcp.pop %v2729
        %v2791 = vmul.f32 1.0, %v2790
        %v2792 = vrcp.pop %v2730
        %v2793 = vmul.f32 1.0, %v2792
        %v2794 = vrcp.pop %v2731
        %v2795 = vmul.f32 1.0, %v2794
        %v2796 = vmul.f32 %v2572, %v2733
        %v2797 = vmul.f32 %v2573, %v2735
        %v2798 = vmul.f32 %v2574, %v2737
        %v2799 = vmul.f32 %v2575, %v2739
        %v2800 = vmul.f32 %v2576, %v2741
        %v2801 = vmul.f32 %v2577, %v2743
        %v2802 = vmul.f32 %v2578, %v2745
        %v2803 = vmul.f32 %v2579, %v2747
        %v2804 = vmul.f32 %v2580, %v2749
        %v2805 = vmul.f32 %v2581, %v2751
        %v2806 = vmul.f32 %v2582, %v2753
        %v2807 = vmul.f32 %v2583, %v2755
        %v2808 = vmul.f32 %v2584, %v2757
        %v2809 = vmul.f32 %v2585, %v2759
        %v2810 = vmul.f32 %v2586, %v2761
        %v2811 = vmul.f32 %v2587, %v2763
        %v2812 = vmul.f32 %v2588, %v2765
        %v2813 = vmul.f32 %v2589, %v2767
        %v2814 = vmul.f32 %v2590, %v2769
        %v2815 = vmul.f32 %v2591, %v2771
        %v2816 = vmul.f32 %v2592, %v2773
        %v2817 = vmul.f32 %v2593, %v2775
        %v2818 = vmul.f32 %v2594, %v2777
        %v2819 = vmul.f32 %v2595, %v2779
        %v2820 = vmul.f32 %v2596, %v2781
        %v2821 = vmul.f32 %v2597, %v2783
        %v2822 = vmul.f32 %v2598, %v2785
        %v2823 = vmul.f32 %v2599, %v2787
        %v2824 = vmul.f32 %v2600, %v2789
        %v2825 = vmul.f32 %v2601, %v2791
        %v2826 = vmul.f32 %v2602, %v2793
        %v2827 = vmul.f32 %v2603, %v2795
        %v2828 = vld [vmem:[%s4] sm:$0xff]
        %v2829 = vld [vmem:[%s4 + $0x8] sm:$0xff]
        %v2830 = vld [vmem:[%s4 + $0x10] sm:$0xff]
        %v2831 = vld [vmem:[%s4 + $0x18] sm:$0xff]
        %v2832 = vld [vmem:[%s6] sm:$0xff]
        %v2833 = vld [vmem:[%s6 + $0x8] sm:$0xff]
        %v2834 = vld [vmem:[%s6 + $0x10] sm:$0xff]
        %v2835 = vld [vmem:[%s6 + $0x18] sm:$0xff]
        %v2836 = vld [vmem:[#allocation7] sm:$0x1]
        %v2837 = vld [vmem:[%s7] sm:$0xff]
        %v2838 = vld [vmem:[%s7 + $0x8] sm:$0xff]
        %v2839 = vld [vmem:[%s7 + $0x10] sm:$0xff]
        %v2840 = vld [vmem:[%s7 + $0x18] sm:$0xff]
        %v2841 = vadd.f32 %v2796, %v2797
        %2842 = vadd.xlane.f32.xlu0 %v2841
        %v2843 = vpop.xlane.xlu0 %2842
        %v2844 = vadd.f32 %v2804, %v2805
        %2845 = vadd.xlane.f32.xlu0 %v2844
        %v2846 = vpop.xlane.xlu0 %2845
        %v2847 = vadd.f32 %v2812, %v2813
        %2848 = vadd.xlane.f32.xlu0 %v2847
        %v2849 = vpop.xlane.xlu0 %2848
        %v2850 = vadd.f32 %v2820, %v2821
        %2851 = vadd.xlane.f32.xlu0 %v2850
        %v2852 = vpop.xlane.xlu0 %2851
        %v2853 = vmul.f32 %v2843, 0.00390625
        %v2854 = vmul.f32 %v2846, 0.00390625
        %v2855 = vmul.f32 %v2849, 0.00390625
        %v2856 = vmul.f32 %v2852, 0.00390625
        %v2857 = vmul.f32 %v2828, %v2853
        %v2858 = vmul.f32 %v2829, %v2854
        %v2859 = vmul.f32 %v2830, %v2855
        %v2860 = vmul.f32 %v2831, %v2856
        %vm2861 = vcmask 15360
        %v2862 = vsel %vm2861, %v2857, 0.0
        %v2863 = vsel %vm2861, %v2858, 0.0
        %v2864 = vadd.f32 %v2862, %v2863
        %v2865 = vsel %vm2861, %v2859, 0.0
        %v2866 = vadd.f32 %v2864, %v2865
        %v2867 = vsel %vm2861, %v2860, 0.0
        %v2868 = vadd.f32 %v2866, %v2867
        %v2869 = vrot.slane %v2868, 4
        %v2870 = vadd.f32 %v2868, %v2869
        %v2871 = vrot.slane %v2870, 2
        %v2872 = vadd.f32 %v2870, %v2871
        %v2873 = vrot.slane %v2872, 1
        %v2874 = vadd.f32 %v2872, %v2873
        %v2875 = vadd.f32 %v2874, %v2836
        %v2876 = vxor.u32 %v2875, 2147483648
        %v2877 = vmul.f32 %v2876, 1.442695
        %v2878 = vpow.pop %v2877
        %v2879 = vadd.f32 %v2878, 1.0
        %v2880 = vrcp.pop %v2879
        %v2881 = vmul.f32 1.0, %v2880
        %v2882 = vmul.f32 %v2875, %v2881
        %v2883 = vlaneseq
        %v2884 = vshrl.u32 %v2883, 7
        %v2885 = vsub.s32 0, %v2884
        %v2886 = vrot.slane %v2882, %v2885
        %v2887 = vmul.f32 %v2832, %v2886
        %v2888 = vmul.f32 %v2833, %v2886
        %v2889 = vmul.f32 %v2834, %v2886
        %v2890 = vmul.f32 %v2835, %v2886
        %v2891 = vsel %vm2861, %v2887, 0.0
        %2892 = vadd.xlane.f32.xlu0 %v2891
        %v2893 = vpop.xlane.xlu0 %2892
        %v2894 = vsel %vm2861, %v2888, 0.0
        %2895 = vadd.xlane.f32.xlu0 %v2894
        %v2896 = vpop.xlane.xlu0 %2895
        %v2897 = vsel %vm2861, %v2889, 0.0
        %2898 = vadd.xlane.f32.xlu0 %v2897
        %v2899 = vpop.xlane.xlu0 %2898
        %v2900 = vsel %vm2861, %v2890, 0.0
        %2901 = vadd.xlane.f32.xlu0 %v2900
        %v2902 = vpop.xlane.xlu0 %2901
        %v2903 = vadd.f32 %v2893, %v2837
        %v2904 = vadd.f32 %v2896, %v2838
        %v2905 = vadd.f32 %v2899, %v2839
        %v2906 = vadd.f32 %v2902, %v2840
        %v2907 = vxor.u32 %v2903, 2147483648
        %v2908 = vxor.u32 %v2904, 2147483648
        %v2909 = vxor.u32 %v2905, 2147483648
        %v2910 = vxor.u32 %v2906, 2147483648
        %v2911 = vmul.f32 %v2907, 1.442695
        %v2912 = vpow.pop %v2911
        %v2913 = vmul.f32 %v2908, 1.442695
        %v2914 = vpow.pop %v2913
        %v2915 = vmul.f32 %v2909, 1.442695
        %v2916 = vpow.pop %v2915
        %v2917 = vmul.f32 %v2910, 1.442695
        %v2918 = vpow.pop %v2917
        %v2919 = vadd.f32 %v2912, 1.0
        %v2920 = vadd.f32 %v2914, 1.0
        %v2921 = vadd.f32 %v2916, 1.0
        %v2922 = vadd.f32 %v2918, 1.0
        %v2923 = vrcp.pop %v2919
        %v2924 = vmul.f32 1.0, %v2923
        %v2925 = vrcp.pop %v2920
        %v2926 = vmul.f32 1.0, %v2925
        %v2927 = vrcp.pop %v2921
        %v2928 = vmul.f32 1.0, %v2927
        %v2929 = vrcp.pop %v2922
        %v2930 = vmul.f32 1.0, %v2929
        %2932 = vset.pattern.permute.xlu0 0
        %2933 = vperm.xlu0 %2932, %v2924
        %v2934 = vpop.permute.xlu0 %2933
        %2937 = vset.pattern.permute.xlu0 0
        %2938 = vperm.xlu0 %2937, %v2926
        %v2939 = vpop.permute.xlu0 %2938
        %2942 = vset.pattern.permute.xlu0 0
        %2943 = vperm.xlu0 %2942, %v2928
        %v2944 = vpop.permute.xlu0 %2943
        %2947 = vset.pattern.permute.xlu0 0
        %2948 = vperm.xlu0 %2947, %v2930
        %v2949 = vpop.permute.xlu0 %2948
        %v2951 = vmul.f32 %v2796, %v2934
        %v2952 = vmul.f32 %v2797, %v2934
        %v2953 = vmul.f32 %v2804, %v2939
        %v2954 = vmul.f32 %v2805, %v2939
        %v2955 = vmul.f32 %v2812, %v2944
        %v2956 = vmul.f32 %v2813, %v2944
        %v2957 = vmul.f32 %v2820, %v2949
        %v2958 = vmul.f32 %v2821, %v2949
        %v2959 = vadd.f32 %v2798, %v2799
        %2960 = vadd.xlane.f32.xlu0 %v2959
        %v2961 = vpop.xlane.xlu0 %2960
        %v2962 = vadd.f32 %v2806, %v2807
        %2963 = vadd.xlane.f32.xlu0 %v2962
        %v2964 = vpop.xlane.xlu0 %2963
        %v2965 = vadd.f32 %v2814, %v2815
        %2966 = vadd.xlane.f32.xlu0 %v2965
        %v2967 = vpop.xlane.xlu0 %2966
        %v2968 = vadd.f32 %v2822, %v2823
        %2969 = vadd.xlane.f32.xlu0 %v2968
        %v2970 = vpop.xlane.xlu0 %2969
        %v2971 = vmul.f32 %v2961, 0.00390625
        %v2972 = vmul.f32 %v2964, 0.00390625
        %v2973 = vmul.f32 %v2967, 0.00390625
        %v2974 = vmul.f32 %v2970, 0.00390625
        %v2975 = vmul.f32 %v2828, %v2971
        %v2976 = vmul.f32 %v2829, %v2972
        %v2977 = vmul.f32 %v2830, %v2973
        %v2978 = vmul.f32 %v2831, %v2974
        %v2979 = vsel %vm2861, %v2975, 0.0
        %v2980 = vsel %vm2861, %v2976, 0.0
        %v2981 = vadd.f32 %v2979, %v2980
        %v2982 = vsel %vm2861, %v2977, 0.0
        %v2983 = vadd.f32 %v2981, %v2982
        %v2984 = vsel %vm2861, %v2978, 0.0
        %v2985 = vadd.f32 %v2983, %v2984
        %v2986 = vrot.slane %v2985, 4
        %v2987 = vadd.f32 %v2985, %v2986
        %v2988 = vrot.slane %v2987, 2
        %v2989 = vadd.f32 %v2987, %v2988
        %v2990 = vrot.slane %v2989, 1
        %v2991 = vadd.f32 %v2989, %v2990
        %v2992 = vadd.f32 %v2991, %v2836
        %v2993 = vxor.u32 %v2992, 2147483648
        %v2994 = vmul.f32 %v2993, 1.442695
        %v2995 = vpow.pop %v2994
        %v2996 = vadd.f32 %v2995, 1.0
        %v2997 = vrcp.pop %v2996
        %v2998 = vmul.f32 1.0, %v2997
        %v2999 = vmul.f32 %v2992, %v2998
        %v3000 = vlaneseq
        %v3001 = vshrl.u32 %v3000, 7
        %v3002 = vsub.s32 0, %v3001
        %v3003 = vrot.slane %v2999, %v3002
        %v3004 = vmul.f32 %v2832, %v3003
        %v3005 = vmul.f32 %v2833, %v3003
        %v3006 = vmul.f32 %v2834, %v3003
        %v3007 = vmul.f32 %v2835, %v3003
        %v3008 = vsel %vm2861, %v3004, 0.0
        %3009 = vadd.xlane.f32.xlu0 %v3008
        %v3010 = vpop.xlane.xlu0 %3009
        %v3011 = vsel %vm2861, %v3005, 0.0
        %3012 = vadd.xlane.f32.xlu0 %v3011
        %v3013 = vpop.xlane.xlu0 %3012
        %v3014 = vsel %vm2861, %v3006, 0.0
        %3015 = vadd.xlane.f32.xlu0 %v3014
        %v3016 = vpop.xlane.xlu0 %3015
        %v3017 = vsel %vm2861, %v3007, 0.0
        %3018 = vadd.xlane.f32.xlu0 %v3017
        %v3019 = vpop.xlane.xlu0 %3018
        %v3020 = vadd.f32 %v3010, %v2837
        %v3021 = vadd.f32 %v3013, %v2838
        %v3022 = vadd.f32 %v3016, %v2839
        %v3023 = vadd.f32 %v3019, %v2840
        %v3024 = vxor.u32 %v3020, 2147483648
        %v3025 = vxor.u32 %v3021, 2147483648
        %v3026 = vxor.u32 %v3022, 2147483648
        %v3027 = vxor.u32 %v3023, 2147483648
        %v3028 = vmul.f32 %v3024, 1.442695
        %v3029 = vpow.pop %v3028
        %v3030 = vmul.f32 %v3025, 1.442695
        %v3031 = vpow.pop %v3030
        %v3032 = vmul.f32 %v3026, 1.442695
        %v3033 = vpow.pop %v3032
        %v3034 = vmul.f32 %v3027, 1.442695
        %v3035 = vpow.pop %v3034
        %v3036 = vadd.f32 %v3029, 1.0
        %v3037 = vadd.f32 %v3031, 1.0
        %v3038 = vadd.f32 %v3033, 1.0
        %v3039 = vadd.f32 %v3035, 1.0
        %v3040 = vrcp.pop %v3036
        %v3041 = vmul.f32 1.0, %v3040
        %v3042 = vrcp.pop %v3037
        %v3043 = vmul.f32 1.0, %v3042
        %v3044 = vrcp.pop %v3038
        %v3045 = vmul.f32 1.0, %v3044
        %v3046 = vrcp.pop %v3039
        %v3047 = vmul.f32 1.0, %v3046
        %3049 = vset.pattern.permute.xlu0 0
        %3050 = vperm.xlu0 %3049, %v3041
        %v3051 = vpop.permute.xlu0 %3050
        %3054 = vset.pattern.permute.xlu0 0
        %3055 = vperm.xlu0 %3054, %v3043
        %v3056 = vpop.permute.xlu0 %3055
        %3059 = vset.pattern.permute.xlu0 0
        %3060 = vperm.xlu0 %3059, %v3045
        %v3061 = vpop.permute.xlu0 %3060
        %3064 = vset.pattern.permute.xlu0 0
        %3065 = vperm.xlu0 %3064, %v3047
        %v3066 = vpop.permute.xlu0 %3065
        %v3068 = vmul.f32 %v2798, %v3051
        %v3069 = vmul.f32 %v2799, %v3051
        %v3070 = vmul.f32 %v2806, %v3056
        %v3071 = vmul.f32 %v2807, %v3056
        %v3072 = vmul.f32 %v2814, %v3061
        %v3073 = vmul.f32 %v2815, %v3061
        %v3074 = vmul.f32 %v2822, %v3066
        %v3075 = vmul.f32 %v2823, %v3066
        %v3076 = vadd.f32 %v2800, %v2801
        %3077 = vadd.xlane.f32.xlu0 %v3076
        %v3078 = vpop.xlane.xlu0 %3077
        %v3079 = vadd.f32 %v2808, %v2809
        %3080 = vadd.xlane.f32.xlu0 %v3079
        %v3081 = vpop.xlane.xlu0 %3080
        %v3082 = vadd.f32 %v2816, %v2817
        %3083 = vadd.xlane.f32.xlu0 %v3082
        %v3084 = vpop.xlane.xlu0 %3083
        %v3085 = vadd.f32 %v2824, %v2825
        %3086 = vadd.xlane.f32.xlu0 %v3085
        %v3087 = vpop.xlane.xlu0 %3086
        %v3088 = vmul.f32 %v3078, 0.00390625
        %v3089 = vmul.f32 %v3081, 0.00390625
        %v3090 = vmul.f32 %v3084, 0.00390625
        %v3091 = vmul.f32 %v3087, 0.00390625
        %v3092 = vmul.f32 %v2828, %v3088
        %v3093 = vmul.f32 %v2829, %v3089
        %v3094 = vmul.f32 %v2830, %v3090
        %v3095 = vmul.f32 %v2831, %v3091
        %v3096 = vsel %vm2861, %v3092, 0.0
        %v3097 = vsel %vm2861, %v3093, 0.0
        %v3098 = vadd.f32 %v3096, %v3097
        %v3099 = vsel %vm2861, %v3094, 0.0
        %v3100 = vadd.f32 %v3098, %v3099
        %v3101 = vsel %vm2861, %v3095, 0.0
        %v3102 = vadd.f32 %v3100, %v3101
        %v3103 = vrot.slane %v3102, 4
        %v3104 = vadd.f32 %v3102, %v3103
        %v3105 = vrot.slane %v3104, 2
        %v3106 = vadd.f32 %v3104, %v3105
        %v3107 = vrot.slane %v3106, 1
        %v3108 = vadd.f32 %v3106, %v3107
        %v3109 = vadd.f32 %v3108, %v2836
        %v3110 = vxor.u32 %v3109, 2147483648
        %v3111 = vmul.f32 %v3110, 1.442695
        %v3112 = vpow.pop %v3111
        %v3113 = vadd.f32 %v3112, 1.0
        %v3114 = vrcp.pop %v3113
        %v3115 = vmul.f32 1.0, %v3114
        %v3116 = vmul.f32 %v3109, %v3115
        %v3117 = vlaneseq
        %v3118 = vshrl.u32 %v3117, 7
        %v3119 = vsub.s32 0, %v3118
        %v3120 = vrot.slane %v3116, %v3119
        %v3121 = vmul.f32 %v2832, %v3120
        %v3122 = vmul.f32 %v2833, %v3120
        %v3123 = vmul.f32 %v2834, %v3120
        %v3124 = vmul.f32 %v2835, %v3120
        %v3125 = vsel %vm2861, %v3121, 0.0
        %3126 = vadd.xlane.f32.xlu0 %v3125
        %v3127 = vpop.xlane.xlu0 %3126
        %v3128 = vsel %vm2861, %v3122, 0.0
        %3129 = vadd.xlane.f32.xlu0 %v3128
        %v3130 = vpop.xlane.xlu0 %3129
        %v3131 = vsel %vm2861, %v3123, 0.0
        %3132 = vadd.xlane.f32.xlu0 %v3131
        %v3133 = vpop.xlane.xlu0 %3132
        %v3134 = vsel %vm2861, %v3124, 0.0
        %3135 = vadd.xlane.f32.xlu0 %v3134
        %v3136 = vpop.xlane.xlu0 %3135
        %v3137 = vadd.f32 %v3127, %v2837
        %v3138 = vadd.f32 %v3130, %v2838
        %v3139 = vadd.f32 %v3133, %v2839
        %v3140 = vadd.f32 %v3136, %v2840
        %v3141 = vxor.u32 %v3137, 2147483648
        %v3142 = vxor.u32 %v3138, 2147483648
        %v3143 = vxor.u32 %v3139, 2147483648
        %v3144 = vxor.u32 %v3140, 2147483648
        %v3145 = vmul.f32 %v3141, 1.442695
        %v3146 = vpow.pop %v3145
        %v3147 = vmul.f32 %v3142, 1.442695
        %v3148 = vpow.pop %v3147
        %v3149 = vmul.f32 %v3143, 1.442695
        %v3150 = vpow.pop %v3149
        %v3151 = vmul.f32 %v3144, 1.442695
        %v3152 = vpow.pop %v3151
        %v3153 = vadd.f32 %v3146, 1.0
        %v3154 = vadd.f32 %v3148, 1.0
        %v3155 = vadd.f32 %v3150, 1.0
        %v3156 = vadd.f32 %v3152, 1.0
        %v3157 = vrcp.pop %v3153
        %v3158 = vmul.f32 1.0, %v3157
        %v3159 = vrcp.pop %v3154
        %v3160 = vmul.f32 1.0, %v3159
        %v3161 = vrcp.pop %v3155
        %v3162 = vmul.f32 1.0, %v3161
        %v3163 = vrcp.pop %v3156
        %v3164 = vmul.f32 1.0, %v3163
        %3166 = vset.pattern.permute.xlu0 0
        %3167 = vperm.xlu0 %3166, %v3158
        %v3168 = vpop.permute.xlu0 %3167
        %3171 = vset.pattern.permute.xlu0 0
        %3172 = vperm.xlu0 %3171, %v3160
        %v3173 = vpop.permute.xlu0 %3172
        %3176 = vset.pattern.permute.xlu0 0
        %3177 = vperm.xlu0 %3176, %v3162
        %v3178 = vpop.permute.xlu0 %3177
        %3181 = vset.pattern.permute.xlu0 0
        %3182 = vperm.xlu0 %3181, %v3164
        %v3183 = vpop.permute.xlu0 %3182
        %v3185 = vmul.f32 %v2800, %v3168
        %v3186 = vmul.f32 %v2801, %v3168
        %v3187 = vmul.f32 %v2808, %v3173
        %v3188 = vmul.f32 %v2809, %v3173
        %v3189 = vmul.f32 %v2816, %v3178
        %v3190 = vmul.f32 %v2817, %v3178
        %v3191 = vmul.f32 %v2824, %v3183
        %v3192 = vmul.f32 %v2825, %v3183
        %v3193 = vadd.f32 %v2802, %v2803
        %3194 = vadd.xlane.f32.xlu0 %v3193
        %v3195 = vpop.xlane.xlu0 %3194
        %v3196 = vadd.f32 %v2810, %v2811
        %3197 = vadd.xlane.f32.xlu0 %v3196
        %v3198 = vpop.xlane.xlu0 %3197
        %v3199 = vadd.f32 %v2818, %v2819
        %3200 = vadd.xlane.f32.xlu0 %v3199
        %v3201 = vpop.xlane.xlu0 %3200
        %v3202 = vadd.f32 %v2826, %v2827
        %3203 = vadd.xlane.f32.xlu0 %v3202
        %v3204 = vpop.xlane.xlu0 %3203
        %v3205 = vmul.f32 %v3195, 0.00390625
        %v3206 = vmul.f32 %v3198, 0.00390625
        %v3207 = vmul.f32 %v3201, 0.00390625
        %v3208 = vmul.f32 %v3204, 0.00390625
        %v3209 = vmul.f32 %v2828, %v3205
        %v3210 = vmul.f32 %v2829, %v3206
        %v3211 = vmul.f32 %v2830, %v3207
        %v3212 = vmul.f32 %v2831, %v3208
        %v3213 = vsel %vm2861, %v3209, 0.0
        %v3214 = vsel %vm2861, %v3210, 0.0
        %v3215 = vadd.f32 %v3213, %v3214
        %v3216 = vsel %vm2861, %v3211, 0.0
        %v3217 = vadd.f32 %v3215, %v3216
        %v3218 = vsel %vm2861, %v3212, 0.0
        %v3219 = vadd.f32 %v3217, %v3218
        %v3220 = vrot.slane %v3219, 4
        %v3221 = vadd.f32 %v3219, %v3220
        %v3222 = vrot.slane %v3221, 2
        %v3223 = vadd.f32 %v3221, %v3222
        %v3224 = vrot.slane %v3223, 1
        %v3225 = vadd.f32 %v3223, %v3224
        %v3226 = vadd.f32 %v3225, %v2836
        %v3227 = vxor.u32 %v3226, 2147483648
        %v3228 = vmul.f32 %v3227, 1.442695
        %v3229 = vpow.pop %v3228
        %v3230 = vadd.f32 %v3229, 1.0
        %v3231 = vrcp.pop %v3230
        %v3232 = vmul.f32 1.0, %v3231
        %v3233 = vmul.f32 %v3226, %v3232
        %v3234 = vlaneseq
        %v3235 = vshrl.u32 %v3234, 7
        %v3236 = vsub.s32 0, %v3235
        %v3237 = vrot.slane %v3233, %v3236
        %v3238 = vmul.f32 %v2832, %v3237
        %v3239 = vmul.f32 %v2833, %v3237
        %v3240 = vmul.f32 %v2834, %v3237
        %v3241 = vmul.f32 %v2835, %v3237
        %v3242 = vsel %vm2861, %v3238, 0.0
        %3243 = vadd.xlane.f32.xlu0 %v3242
        %v3244 = vpop.xlane.xlu0 %3243
        %v3245 = vsel %vm2861, %v3239, 0.0
        %3246 = vadd.xlane.f32.xlu0 %v3245
        %v3247 = vpop.xlane.xlu0 %3246
        %v3248 = vsel %vm2861, %v3240, 0.0
        %3249 = vadd.xlane.f32.xlu0 %v3248
        %v3250 = vpop.xlane.xlu0 %3249
        %v3251 = vsel %vm2861, %v3241, 0.0
        %3252 = vadd.xlane.f32.xlu0 %v3251
        %v3253 = vpop.xlane.xlu0 %3252
        %v3254 = vadd.f32 %v3244, %v2837
        %v3255 = vadd.f32 %v3247, %v2838
        %v3256 = vadd.f32 %v3250, %v2839
        %v3257 = vadd.f32 %v3253, %v2840
        %v3258 = vxor.u32 %v3254, 2147483648
        %v3259 = vxor.u32 %v3255, 2147483648
        %v3260 = vxor.u32 %v3256, 2147483648
        %v3261 = vxor.u32 %v3257, 2147483648
        %v3262 = vmul.f32 %v3258, 1.442695
        %v3263 = vpow.pop %v3262
        %v3264 = vmul.f32 %v3259, 1.442695
        %v3265 = vpow.pop %v3264
        %v3266 = vmul.f32 %v3260, 1.442695
        %v3267 = vpow.pop %v3266
        %v3268 = vmul.f32 %v3261, 1.442695
        %v3269 = vpow.pop %v3268
        %v3270 = vadd.f32 %v3263, 1.0
        %v3271 = vadd.f32 %v3265, 1.0
        %v3272 = vadd.f32 %v3267, 1.0
        %v3273 = vadd.f32 %v3269, 1.0
        %v3274 = vrcp.pop %v3270
        %v3275 = vmul.f32 1.0, %v3274
        %v3276 = vrcp.pop %v3271
        %v3277 = vmul.f32 1.0, %v3276
        %v3278 = vrcp.pop %v3272
        %v3279 = vmul.f32 1.0, %v3278
        %v3280 = vrcp.pop %v3273
        %v3281 = vmul.f32 1.0, %v3280
        %3283 = vset.pattern.permute.xlu0 0
        %3284 = vperm.xlu0 %3283, %v3275
        %v3285 = vpop.permute.xlu0 %3284
        %3288 = vset.pattern.permute.xlu0 0
        %3289 = vperm.xlu0 %3288, %v3277
        %v3290 = vpop.permute.xlu0 %3289
        %3293 = vset.pattern.permute.xlu0 0
        %3294 = vperm.xlu0 %3293, %v3279
        %v3295 = vpop.permute.xlu0 %3294
        %3298 = vset.pattern.permute.xlu0 0
        %3299 = vperm.xlu0 %3298, %v3281
        %v3300 = vpop.permute.xlu0 %3299
        %v3302 = vmul.f32 %v2802, %v3285
        %v3303 = vmul.f32 %v2803, %v3285
        %v3304 = vmul.f32 %v2810, %v3290
        %v3305 = vmul.f32 %v2811, %v3290
        %v3306 = vmul.f32 %v2818, %v3295
        %v3307 = vmul.f32 %v2819, %v3295
        %v3308 = vmul.f32 %v2826, %v3300
        %v3309 = vmul.f32 %v2827, %v3300
        %v3310 = vld [vmem:[#allocation8] sm:$0xf]
        %v3311 = vpack.c.bf16 %v2953, %v2951
        %v3312 = vpack.c.bf16 %v2954, %v2952
        %v3313 = vpack.c.bf16 %v3070, %v3068
        %v3314 = vpack.c.bf16 %v3071, %v3069
        %v3315 = vpack.c.bf16 %v3187, %v3185
        %v3316 = vpack.c.bf16 %v3188, %v3186
        %v3317 = vpack.c.bf16 %v3304, %v3302
        %v3318 = vpack.c.bf16 %v3305, %v3303
        %v3319 = vpack.c.bf16 %v2957, %v2955
        %v3320 = vpack.c.bf16 %v2958, %v2956
        %v3321 = vpack.c.bf16 %v3074, %v3072
        %v3322 = vpack.c.bf16 %v3075, %v3073
        %v3323 = vpack.c.bf16 %v3191, %v3189
        %v3324 = vpack.c.bf16 %v3192, %v3190
        %v3325 = vpack.c.bf16 %v3308, %v3306
        %v3326 = vpack.c.bf16 %v3309, %v3307
        %v3327 = vld [vmem:[%s9] sm:$0xff]
        %3329 = vset.pattern.permute.xlu0 0
        %3330 = vperm.xlu0 %3329, %v3327
        %v3331 = vpop.permute.xlu0 %3330
        %vm3333 = vcmask 261120
        %v3335 = vsel %vm3333, %v3310, 0
        %3337 = vmatprep.subr.bf16.mxu0 %v3312
        %3338 = vmatpush1.bf16.msra.mxu0 %v3311
        %3339 = vmatprep.subr.bf16.mxu0 %v3320
        %3340 = vmatpush1.bf16.msra.mxu0 %v3319
        %3341 = vmatprep.subr.bf16.mxu0 0
        %3342 = vmatpush1.bf16.msra.mxu0 0
        %3343 = vmatprep.subr.bf16.mxu0 0
        %3344 = vmatpush1.bf16.msra.mxu0 0
        %3345 = vmatprep.subr.bf16.mxu0 0
        %3346 = vmatpush1.bf16.msra.mxu0 0
        %3347 = vmatprep.subr.bf16.mxu0 0
        %3348 = vmatpush1.bf16.msra.mxu0 0
        %3349 = vmatprep.subr.bf16.mxu0 0
        %3350 = vmatpush1.bf16.msra.mxu0 0
        %3351 = vmatprep.subr.bf16.mxu0 0
        %3352 = vmatpush1.bf16.msra.mxu0 0
        %3353 = vmatprep.subr.bf16.mxu0 0
        %3354 = vmatpush1.bf16.msra.mxu0 0
        %3355 = vmatprep.subr.bf16.mxu0 0
        %3356 = vmatpush1.bf16.msra.mxu0 0
        %3357 = vmatprep.subr.bf16.mxu0 0
        %3358 = vmatpush1.bf16.msra.mxu0 0
        %3359 = vmatprep.subr.bf16.mxu0 0
        %3360 = vmatpush1.bf16.msra.mxu0 0
        %3361 = vmatprep.subr.bf16.mxu0 0
        %3362 = vmatpush1.bf16.msra.mxu0 0
        %3363 = vmatprep.subr.bf16.mxu0 0
        %3364 = vmatpush1.bf16.msra.mxu0 0
        %3365 = vmatprep.subr.bf16.mxu0 0
        %3366 = vmatpush1.bf16.msra.mxu0 0
        %3367 = vmatprep.subr.bf16.mxu0 0
        %3368 = vmatpush1.bf16.msra.mxu0 0
        %3369 = vmatprep.mubr.bf16.mxu0 0
        %3370 = vmatmul.mubr.bf16.gmra.mrb[0].mxu0 %v3335
        %v3371 = vpop.f32.mrb[0].mxu0
        %v3372 = vadd.f32 %v3331, %v3371
        %v3373 = vpop.f32.mrb[0].mxu0
        %v3374 = vadd.f32 %v3331, %v3373
        %v3375 = vpop.f32.mrb[0].mxu0
        %v3376 = vpop.f32.mrb[0].mxu0
        %3377 = vdwg.mxu0
        %3378 = vmatprep.subr.bf16.mxu0 %v3314
        %3379 = vmatpush1.bf16.msra.mxu0 %v3313
        %3380 = vmatprep.subr.bf16.mxu0 %v3322
        %3381 = vmatpush1.bf16.msra.mxu0 %v3321
        %3382 = vmatprep.subr.bf16.mxu0 0
        %3383 = vmatpush1.bf16.msra.mxu0 0
        %3384 = vmatprep.subr.bf16.mxu0 0
        %3385 = vmatpush1.bf16.msra.mxu0 0
        %3386 = vmatprep.subr.bf16.mxu0 0
        %3387 = vmatpush1.bf16.msra.mxu0 0
        %3388 = vmatprep.subr.bf16.mxu0 0
        %3389 = vmatpush1.bf16.msra.mxu0 0
        %3390 = vmatprep.subr.bf16.mxu0 0
        %3391 = vmatpush1.bf16.msra.mxu0 0
        %3392 = vmatprep.subr.bf16.mxu0 0
        %3393 = vmatpush1.bf16.msra.mxu0 0
        %3394 = vmatprep.subr.bf16.mxu0 0
        %3395 = vmatpush1.bf16.msra.mxu0 0
        %3396 = vmatprep.subr.bf16.mxu0 0
        %3397 = vmatpush1.bf16.msra.mxu0 0
        %3398 = vmatprep.subr.bf16.mxu0 0
        %3399 = vmatpush1.bf16.msra.mxu0 0
        %3400 = vmatprep.subr.bf16.mxu0 0
        %3401 = vmatpush1.bf16.msra.mxu0 0
        %3402 = vmatprep.subr.bf16.mxu0 0
        %3403 = vmatpush1.bf16.msra.mxu0 0
        %3404 = vmatprep.subr.bf16.mxu0 0
        %3405 = vmatpush1.bf16.msra.mxu0 0
        %3406 = vmatprep.subr.bf16.mxu0 0
        %3407 = vmatpush1.bf16.msra.mxu0 0
        %3408 = vmatprep.subr.bf16.mxu0 0
        %3409 = vmatpush1.bf16.msra.mxu0 0
        %3410 = vmatprep.mubr.bf16.mxu0 0
        %3411 = vmatmul.mubr.bf16.gmra.mrb[0].mxu0 %v3335
        %v3412 = vpop.f32.mrb[0].mxu0
        %v3413 = vadd.f32 %v3331, %v3412
        %v3414 = vpop.f32.mrb[0].mxu0
        %v3415 = vadd.f32 %v3331, %v3414
        %v3416 = vpop.f32.mrb[0].mxu0
        %v3417 = vpop.f32.mrb[0].mxu0
        %3418 = vdwg.mxu0
        %3419 = vmatprep.subr.bf16.mxu0 %v3316
        %3420 = vmatpush1.bf16.msra.mxu0 %v3315
        %3421 = vmatprep.subr.bf16.mxu0 %v3324
        %3422 = vmatpush1.bf16.msra.mxu0 %v3323
        %3423 = vmatprep.subr.bf16.mxu0 0
        %3424 = vmatpush1.bf16.msra.mxu0 0
        %3425 = vmatprep.subr.bf16.mxu0 0
        %3426 = vmatpush1.bf16.msra.mxu0 0
        %3427 = vmatprep.subr.bf16.mxu0 0
        %3428 = vmatpush1.bf16.msra.mxu0 0
        %3429 = vmatprep.subr.bf16.mxu0 0
        %3430 = vmatpush1.bf16.msra.mxu0 0
        %3431 = vmatprep.subr.bf16.mxu0 0
        %3432 = vmatpush1.bf16.msra.mxu0 0
        %3433 = vmatprep.subr.bf16.mxu0 0
        %3434 = vmatpush1.bf16.msra.mxu0 0
        %3435 = vmatprep.subr.bf16.mxu0 0
        %3436 = vmatpush1.bf16.msra.mxu0 0
        %3437 = vmatprep.subr.bf16.mxu0 0
        %3438 = vmatpush1.bf16.msra.mxu0 0
        %3439 = vmatprep.subr.bf16.mxu0 0
        %3440 = vmatpush1.bf16.msra.mxu0 0
        %3441 = vmatprep.subr.bf16.mxu0 0
        %3442 = vmatpush1.bf16.msra.mxu0 0
        %3443 = vmatprep.subr.bf16.mxu0 0
        %3444 = vmatpush1.bf16.msra.mxu0 0
        %3445 = vmatprep.subr.bf16.mxu0 0
        %3446 = vmatpush1.bf16.msra.mxu0 0
        %3447 = vmatprep.subr.bf16.mxu0 0
        %3448 = vmatpush1.bf16.msra.mxu0 0
        %3449 = vmatprep.subr.bf16.mxu0 0
        %3450 = vmatpush1.bf16.msra.mxu0 0
        %3451 = vmatprep.mubr.bf16.mxu0 0
        %3452 = vmatmul.mubr.bf16.gmra.mrb[0].mxu0 %v3335
        %v3453 = vpop.f32.mrb[0].mxu0
        %v3454 = vadd.f32 %v3331, %v3453
        %v3455 = vpop.f32.mrb[0].mxu0
        %v3456 = vadd.f32 %v3331, %v3455
        %v3457 = vpop.f32.mrb[0].mxu0
        %v3458 = vpop.f32.mrb[0].mxu0
        %3459 = vdwg.mxu0
        %3460 = vmatprep.subr.bf16.mxu0 %v3318
        %3461 = vmatpush1.bf16.msra.mxu0 %v3317
        %3462 = vmatprep.subr.bf16.mxu0 %v3326
        %3463 = vmatpush1.bf16.msra.mxu0 %v3325
        %3464 = vmatprep.subr.bf16.mxu0 0
        %3465 = vmatpush1.bf16.msra.mxu0 0
        %3466 = vmatprep.subr.bf16.mxu0 0
        %3467 = vmatpush1.bf16.msra.mxu0 0
        %3468 = vmatprep.subr.bf16.mxu0 0
        %3469 = vmatpush1.bf16.msra.mxu0 0
        %3470 = vmatprep.subr.bf16.mxu0 0
        %3471 = vmatpush1.bf16.msra.mxu0 0
        %3472 = vmatprep.subr.bf16.mxu0 0
        %3473 = vmatpush1.bf16.msra.mxu0 0
        %3474 = vmatprep.subr.bf16.mxu0 0
        %3475 = vmatpush1.bf16.msra.mxu0 0
        %3476 = vmatprep.subr.bf16.mxu0 0
        %3477 = vmatpush1.bf16.msra.mxu0 0
        %3478 = vmatprep.subr.bf16.mxu0 0
        %3479 = vmatpush1.bf16.msra.mxu0 0
        %3480 = vmatprep.subr.bf16.mxu0 0
        %3481 = vmatpush1.bf16.msra.mxu0 0
        %3482 = vmatprep.subr.bf16.mxu0 0
        %3483 = vmatpush1.bf16.msra.mxu0 0
        %3484 = vmatprep.subr.bf16.mxu0 0
        %3485 = vmatpush1.bf16.msra.mxu0 0
        %3486 = vmatprep.subr.bf16.mxu0 0
        %3487 = vmatpush1.bf16.msra.mxu0 0
        %3488 = vmatprep.subr.bf16.mxu0 0
        %3489 = vmatpush1.bf16.msra.mxu0 0
        %3490 = vmatprep.subr.bf16.mxu0 0
        %3491 = vmatpush1.bf16.msra.mxu0 0
        %3492 = vmatprep.mubr.bf16.mxu0 0
        %3493 = vmatmul.mubr.bf16.gmra.mrb[0].mxu0 %v3335
        %v3494 = vpop.f32.mrb[0].mxu0
        %v3495 = vadd.f32 %v3331, %v3494
        %v3496 = vpop.f32.mrb[0].mxu0
        %v3497 = vadd.f32 %v3331, %v3496
        %v3498 = vpop.f32.mrb[0].mxu0
        %v3499 = vpop.f32.mrb[0].mxu0
        %3500 = vdwg.mxu0
        %v3501 = vadd.f32 %v3372, %v421
        %v3502 = vadd.f32 %v3374, %v422
        %v3503 = vadd.f32 %v3413, %v423
        %v3504 = vadd.f32 %v3415, %v424
        %v3505 = vadd.f32 %v3454, %v425
        %v3506 = vadd.f32 %v3456, %v426
        %v3507 = vadd.f32 %v3495, %v427
        %v3508 = vadd.f32 %v3497, %v428
        %3509 = vst [vmem:[%s417] sm:$0xff] %v3501
        %3510 = vst [vmem:[%s417 + $0x8] sm:$0xff] %v3502
        %3511 = vst [vmem:[%s417 + $0x10] sm:$0xff] %v3503
        %3512 = vst [vmem:[%s417 + $0x18] sm:$0xff] %v3504
        %3513 = vst [vmem:[%s417 + $0x20] sm:$0xff] %v3505
        %3514 = vst [vmem:[%s417 + $0x28] sm:$0xff] %v3506
        %3515 = vst [vmem:[%s417 + $0x30] sm:$0xff] %v3507
        %3516 = vst [vmem:[%s417 + $0x38] sm:$0xff] %v3508
        %s3517 = sand.u32 %s252, 1
        %s3518 = scalar_lea.sflag [#allocation4], %s3517
        %s3519 = sand.u32 %s252, 1
        %s3520 = smul.addr %s3519, 64
        %s3521 = scalar_lea.vmem [#allocation10], %s3520
        // Predicated region
        $region77: #{tpu_custom_call.1} parent=59 // pred_check
          %p3522 = pneg %p262
        $region78: #{tpu_custom_call.1} parent=59 // pred_check_branch
          %3524 = sbr.rel (%p3522) target = $region80
        $region79: #{tpu_custom_call.1} parent=59 // pred_region
          %s3525 = smul.u32 8, %s29
          %s3527 = ssub.s32 1024, 1024
          %3528 = vsyncadd %s3518, %s3527
          %s3529 = smul.addr %s3525, 128
          %s3530 = scalar_lea.hbm %s10, %s3529
          %s3532 = sshll.u32 %s3521, 4
          %s3533 = int_to_ptr.vmem [resolvable:$true] %s3532
          %3535 = dma.vmem_to_hbm [thread:$0]  %s3533, 1024, %s3530, %s3518
        $region80: #{tpu_custom_call.1} parent=59 // pred_fallthru
          _
      $region60: #{tpu_custom_call.1} parent=5 // pred_fallthru
        _
      %p3536 = scmp.le.s32.totalorder 2, %s24
      // Predicated region
      $region81: #{tpu_custom_call.1} parent=5 // pred_check
        %p3537 = pneg %p3536
      $region82: #{tpu_custom_call.1} parent=5 // pred_check_branch
        %3539 = sbr.rel (%p3537) target = $region84
      $region83: #{tpu_custom_call.1} parent=5 // pred_region
        %s3540 = ssub.s32 %s24, 2
        // Predicated region
        $region85: #{tpu_custom_call.1} parent=83 // pred_check
          %p3541 = pneg %p268
        $region86: #{tpu_custom_call.1} parent=83 // pred_check_branch
          %3543 = sbr.rel (%p3541) target = $region88
        $region87: #{tpu_custom_call.1} parent=83 // pred_region
          %s3544 = sand.u32 %s253, 1
          %s3545 = scalar_lea.sflag [#allocation4], %s3544
          %s3546 = sand.u32 %s253, 1
          %s3547 = smul.addr %s3546, 64
          %s3548 = scalar_lea.vmem [#allocation10], %s3547
          %3549 = dma.done %s3545, 1024
        $region88: #{tpu_custom_call.1} parent=83 // pred_fallthru
          _
      $region84: #{tpu_custom_call.1} parent=5 // pred_fallthru
        _
    $region6: #{tpu_custom_call.1} parent=1 // loop_footer
      %s28 = sadd.s32 1, %s24
    $region7: #{tpu_custom_call.1} parent=1 // loop_footer_branch
      %23 = sbr.rel target = $region3
    $region8: #{tpu_custom_call.1} parent=1 // loop_exit
      _
    %3550 = vsyncpa [#allocation3], 1
    %s3551 = scalar_lea.sflag [#allocation3], 1
    %3552 = vsyncpa %s3551, 1
    %3553 = vsyncpa [#allocation6], 1
    %3554 = vsyncpa [#allocation9], 1
    %3555 = vsyncpa [#allocation4], 1
    %s3556 = scalar_lea.sflag [#allocation4], 1
    %3557 = vsyncpa %s3556, 1

</llo_original>
